<compile_context>
chip_gen: v7x
topology: tpu7x:2x2x1
jax: 0.10.0
libtpu: 0.0.40
codegen_flags: <defaults>
</compile_context>

<pallas_src>
import math
import functools

import jax
import jax.numpy as jnp
from jax import lax
from jax.experimental import pallas as pl
from jax.experimental.pallas import tpu as pltpu

# ----------------------------------------------------------------------------
# Small synthetic BERT config (stands in for 'bert-base-uncased')
# ----------------------------------------------------------------------------
VOCAB_SIZE = 100
HIDDEN = 32
NUM_LAYERS = 2
NUM_HEADS = 4
HEAD_DIM = HIDDEN // NUM_HEADS
INTERMEDIATE = 64
MAX_POS = 16
HASH_SIZE = 128
LN_EPS = 1e-12


# ----------------------------------------------------------------------------
# Fused kernel
# ----------------------------------------------------------------------------
def _layernorm(x, gamma, beta):
    mu = jnp.mean(x, axis=-1, keepdims=True)
    var = jnp.mean(jnp.square(x - mu), axis=-1, keepdims=True)
    inv = lax.rsqrt(var + LN_EPS)
    return (x - mu) * inv * gamma + beta


def _bert_kernel(x_emb_ref, mask_ref, emb_ln_ref,
                 qw_ref, kw_ref, vw_ref, qb_ref, kb_ref, vb_ref,
                 ow_ref, ob_ref, ln1_ref,
                 f1w_ref, f1b_ref, f2w_ref, f2b_ref, ln2_ref,
                 pw_ref, pb_ref, hw_ref, hb_ref,
                 out_ref, h_ref, *, batch, seq):
    layer = pl.program_id(0)

    # --- grid step 0: embedding LayerNorm into the VMEM-resident hidden state
    @pl.when(layer == 0)
    def _init():
        h_ref[...] = _layernorm(x_emb_ref[...], emb_ln_ref[0], emb_ln_ref[1])

    x = h_ref[...]                                   # (B*S, HIDDEN) f32
    x_bf = x.astype(jnp.bfloat16)
    scale = 1.0 / math.sqrt(HEAD_DIM)

    # --- multi-head self-attention (heads/batches unrolled, all in VMEM/vregs)
    attn_rows = [None] * batch
    for h in range(NUM_HEADS):
        q_h = jnp.dot(x_bf, qw_ref[h], preferred_element_type=jnp.float32) + qb_ref[h]
        k_h = jnp.dot(x_bf, kw_ref[h], preferred_element_type=jnp.float32) + kb_ref[h]
        v_h = jnp.dot(x_bf, vw_ref[h], preferred_element_type=jnp.float32) + vb_ref[h]
        ow_h = ow_ref[h]                             # (HEAD_DIM, HIDDEN) bf16
        for b in range(batch):
            rows = slice(b * seq, (b + 1) * seq)
            q_b = q_h[rows, :] * scale               # (S, D)
            k_b = k_h[rows, :]
            v_b = v_h[rows, :]
            # scores = q @ k^T  (contract last dims of both operands)
            s = lax.dot_general(q_b, k_b, (((1,), (1,)), ((), ())),
                                preferred_element_type=jnp.float32)   # (S, S)
            s = s + mask_ref[b]                      # additive mask, (1,S) bcast
            s = s - jnp.max(s, axis=-1, keepdims=True)
            p = jnp.exp(s)
            p = p * pl.reciprocal(jnp.sum(p, axis=-1, keepdims=True), approx=True)
            c = jnp.dot(p, v_b, preferred_element_type=jnp.float32)   # (S, D)
            contrib = jnp.dot(c.astype(jnp.bfloat16), ow_h,
                              preferred_element_type=jnp.float32)     # (S, HIDDEN)
            attn_rows[b] = contrib if attn_rows[b] is None else attn_rows[b] + contrib

    attn_out = jnp.concatenate(attn_rows, axis=0) + ob_ref[...]       # (B*S, HIDDEN)
    x = _layernorm(x + attn_out, ln1_ref[0], ln1_ref[1])

    # --- feed-forward
    ff = jnp.dot(x.astype(jnp.bfloat16), f1w_ref[...],
                 preferred_element_type=jnp.float32) + f1b_ref[...]
    # TODO(synk): HF BERT uses exact erf-GELU; tanh approximation used here.
    ff = jax.nn.gelu(ff, approximate=True)
    ff = jnp.dot(ff.astype(jnp.bfloat16), f2w_ref[...],
                 preferred_element_type=jnp.float32) + f2b_ref[...]
    x = _layernorm(x + ff, ln2_ref[0], ln2_ref[1])

    h_ref[...] = x                                    # carry to the next layer

    # --- last grid step: fused pooler (tanh) + hash head (sigmoid).
    # Applied to every row; the wrapper keeps only the CLS row per sequence
    # (identical result, keeps the single HBM store lane-dense at 128 lanes).
    @pl.when(layer == pl.num_programs(0) - 1)
    def _finalize():
        pooled = jnp.tanh(jnp.dot(x.astype(jnp.bfloat16), pw_ref[...],
                                  preferred_element_type=jnp.float32) + pb_ref[...])
        logits = jnp.dot(pooled.astype(jnp.bfloat16), hw_ref[...],
                         preferred_element_type=jnp.float32) + hb_ref[...]
        out_ref[...] = jax.nn.sigmoid(logits)


# ----------------------------------------------------------------------------
# Parameter init (deterministic, synthetic — no checkpoint load)
# ----------------------------------------------------------------------------
def init_params(key):
    def nrm(k, shape):
        return (0.02 * jax.random.normal(k, shape)).astype(jnp.float32)

    keys = iter(jax.random.split(key, 256))
    p = {
        "word_emb": nrm(next(keys), (VOCAB_SIZE, HIDDEN)),
        "pos_emb": nrm(next(keys), (MAX_POS, HIDDEN)),
        "type_emb": nrm(next(keys), (2, HIDDEN)),
        "emb_ln_g": jnp.ones((HIDDEN,), jnp.float32),
        "emb_ln_b": jnp.zeros((HIDDEN,), jnp.float32),
        "layers": [],
        "pooler_w": nrm(next(keys), (HIDDEN, HIDDEN)),
        "pooler_b": jnp.zeros((HIDDEN,), jnp.float32),
        "hash_w": nrm(next(keys), (HIDDEN, HASH_SIZE)),
        "hash_b": jnp.zeros((HASH_SIZE,), jnp.float32),
    }
    for _ in range(NUM_LAYERS):
        p["layers"].append({
            "q_w": nrm(next(keys), (HIDDEN, HIDDEN)),
            "q_b": jnp.zeros((HIDDEN,), jnp.float32),
            "k_w": nrm(next(keys), (HIDDEN, HIDDEN)),
            "k_b": jnp.zeros((HIDDEN,), jnp.float32),
            "v_w": nrm(next(keys), (HIDDEN, HIDDEN)),
            "v_b": jnp.zeros((HIDDEN,), jnp.float32),
            "o_w": nrm(next(keys), (HIDDEN, HIDDEN)),
            "o_b": jnp.zeros((HIDDEN,), jnp.float32),
            "ln1_g": jnp.ones((HIDDEN,), jnp.float32),
            "ln1_b": jnp.zeros((HIDDEN,), jnp.float32),
            "ff1_w": nrm(next(keys), (HIDDEN, INTERMEDIATE)),
            "ff1_b": jnp.zeros((INTERMEDIATE,), jnp.float32),
            "ff2_w": nrm(next(keys), (INTERMEDIATE, HIDDEN)),
            "ff2_b": jnp.zeros((HIDDEN,), jnp.float32),
            "ln2_g": jnp.ones((HIDDEN,), jnp.float32),
            "ln2_b": jnp.zeros((HIDDEN,), jnp.float32),
        })
    return p


def _pack_layer_params(layers):
    """Stack per-layer weights on a leading 'layer' axis, pre-split per head."""
    bf16 = jnp.bfloat16

    def head_cols(w):   # (HIDDEN, NH*D) -> (NH, HIDDEN, D)   split output dim
        return w.reshape(HIDDEN, NUM_HEADS, HEAD_DIM).transpose(1, 0, 2)

    def head_rows(w):   # (NH*D, HIDDEN) -> (NH, D, HIDDEN)   split input dim
        return w.reshape(NUM_HEADS, HEAD_DIM, HIDDEN)

    def head_bias(b):   # (NH*D,) -> (NH, 1, D)
        return b.reshape(NUM_HEADS, 1, HEAD_DIM)

    def ln(g, b):       # -> (2, 1, HIDDEN)  (gamma; beta)
        return jnp.stack([g, b]).reshape(2, 1, HIDDEN)

    stack = lambda fn: jnp.stack([fn(l) for l in layers], axis=0)
    return dict(
        qw=stack(lambda l: head_cols(l["q_w"])).astype(bf16),
        kw=stack(lambda l: head_cols(l["k_w"])).astype(bf16),
        vw=stack(lambda l: head_cols(l["v_w"])).astype(bf16),
        qb=stack(lambda l: head_bias(l["q_b"])),
        kb=stack(lambda l: head_bias(l["k_b"])),
        vb=stack(lambda l: head_bias(l["v_b"])),
        ow=stack(lambda l: head_rows(l["o_w"])).astype(bf16),
        ob=stack(lambda l: l["o_b"].reshape(1, HIDDEN)),
        ln1=stack(lambda l: ln(l["ln1_g"], l["ln1_b"])),
        f1w=stack(lambda l: l["ff1_w"]).astype(bf16),
        f1b=stack(lambda l: l["ff1_b"].reshape(1, INTERMEDIATE)),
        f2w=stack(lambda l: l["ff2_w"]).astype(bf16),
        f2b=stack(lambda l: l["ff2_b"].reshape(1, HIDDEN)),
        ln2=stack(lambda l: ln(l["ln2_g"], l["ln2_b"])),
    )


# ----------------------------------------------------------------------------
# Forward pass (mirrors BERTSemanticHashing.forward)
# ----------------------------------------------------------------------------
def bert_semantic_hashing(params, input_ids, attention_mask):
    B, S = input_ids.shape
    BS = B * S

    # Embedding gather is glue (plain JAX); token_type_ids default to all-zeros,
    # matching BertModel when only input_ids / attention_mask are passed.
    emb = (params["word_emb"][input_ids]
           + params["pos_emb"][:S][None, :, :]
           + params["type_emb"][0][None, None, :])
    x_emb = emb.reshape(BS, HIDDEN).astype(jnp.float32)

    # BERT-style additive attention mask: (1 - mask) * -10000, broadcast in-kernel.
    add_mask = ((1.0 - attention_mask.astype(jnp.float32)) * -10000.0
                ).reshape(B, 1, S)

    emb_ln = jnp.stack([params["emb_ln_g"], params["emb_ln_b"]]).reshape(2, 1, HIDDEN)
    lp = _pack_layer_params(params["layers"])
    pooler_w = params["pooler_w"].astype(jnp.bfloat16)
    pooler_b = params["pooler_b"].reshape(1, HIDDEN)
    hash_w = params["hash_w"].astype(jnp.bfloat16)
    hash_b = params["hash_b"].reshape(1, HASH_SIZE)

    def full(shape):
        return pl.BlockSpec(shape, lambda l, _n=len(shape): (0,) * _n)

    def per_layer(*dims):
        nd = len(dims)
        return pl.BlockSpec((None,) + dims, lambda l, _n=nd: (l,) + (0,) * _n)

    in_specs = [
        full((BS, HIDDEN)),                         # x_emb
        full((B, 1, S)),                            # additive mask
        full((2, 1, HIDDEN)),                       # embedding LN (gamma; beta)
        per_layer(NUM_HEADS, HIDDEN, HEAD_DIM),     # qw
        per_layer(NUM_HEADS, HIDDEN, HEAD_DIM),     # kw
        per_layer(NUM_HEADS, HIDDEN, HEAD_DIM),     # vw
        per_layer(NUM_HEADS, 1, HEAD_DIM),          # qb
        per_layer(NUM_HEADS, 1, HEAD_DIM),          # kb
        per_layer(NUM_HEADS, 1, HEAD_DIM),          # vb
        per_layer(NUM_HEADS, HEAD_DIM, HIDDEN),     # ow
        per_layer(1, HIDDEN),                       # ob
        per_layer(2, 1, HIDDEN),                    # ln1
        per_layer(HIDDEN, INTERMEDIATE),            # ff1_w
        per_layer(1, INTERMEDIATE),                 # ff1_b
        per_layer(INTERMEDIATE, HIDDEN),            # ff2_w
        per_layer(1, HIDDEN),                       # ff2_b
        per_layer(2, 1, HIDDEN),                    # ln2
        full((HIDDEN, HIDDEN)),                     # pooler_w
        full((1, HIDDEN)),                          # pooler_b
        full((HIDDEN, HASH_SIZE)),                  # hash_w
        full((1, HASH_SIZE)),                       # hash_b
    ]

    hash_all = pl.pallas_call(
        functools.partial(_bert_kernel, batch=B, seq=S),
        out_shape=jax.ShapeDtypeStruct((BS, HASH_SIZE), jnp.float32),
        grid=(NUM_LAYERS,),
        in_specs=in_specs,
        out_specs=pl.BlockSpec((BS, HASH_SIZE), lambda l: (0, 0)),
        scratch_shapes=[pltpu.VMEM((BS, HIDDEN), jnp.float32)],
        compiler_params=pltpu.CompilerParams(
            dimension_semantics=("arbitrary",)),     # layer loop carries state
    )(x_emb, add_mask, emb_ln,
      lp["qw"], lp["kw"], lp["vw"], lp["qb"], lp["kb"], lp["vb"],
      lp["ow"], lp["ob"], lp["ln1"],
      lp["f1w"], lp["f1b"], lp["f2w"], lp["f2b"], lp["ln2"],
      pooler_w, pooler_b, hash_w, hash_b)

    # Pooler/hash were computed for every row; keep the CLS row per sequence.
    return hash_all.reshape(B, S, HASH_SIZE)[:, 0, :]


# ----------------------------------------------------------------------------
# Main
# ----------------------------------------------------------------------------
if __name__ == "__main__":
    B, S = 2, 8
    key = jax.random.PRNGKey(0)
    k_param, k_ids = jax.random.split(key)

    params = init_params(k_param)
    input_ids = jax.random.randint(k_ids, (B, S), 0, VOCAB_SIZE, dtype=jnp.int32)
    attention_mask = jnp.array(
        [[1, 1, 1, 1, 1, 1, 1, 1],
         [1, 1, 1, 1, 1, 0, 0, 0]], dtype=jnp.int32)

    hash_codes = bert_semantic_hashing(params, input_ids, attention_mask)
    hash_codes = jax.block_until_ready(hash_codes)

    assert hash_codes.shape == (B, HASH_SIZE)
    assert bool(jnp.all(jnp.isfinite(hash_codes)))
    assert bool(jnp.all((hash_codes >= 0.0) & (hash_codes <= 1.0)))
    print("KERNEL_OK")
</pallas_src>

<mosaic_0001>
module attributes {stable_mosaic.version = 11 : i64} {
  func.func @_bert_kernel(%arg0: i32, %arg1: memref<16x32xf32, #tpu.memory_space<vmem>>, %arg2: memref<2x1x8xf32, #tpu.memory_space<vmem>>, %arg3: memref<2x1x32xf32, #tpu.memory_space<vmem>>, %arg4: memref<1x4x32x8xbf16, #tpu.memory_space<vmem>>, %arg5: memref<1x4x32x8xbf16, #tpu.memory_space<vmem>>, %arg6: memref<1x4x32x8xbf16, #tpu.memory_space<vmem>>, %arg7: memref<1x4x1x8xf32, #tpu.memory_space<vmem>>, %arg8: memref<1x4x1x8xf32, #tpu.memory_space<vmem>>, %arg9: memref<1x4x1x8xf32, #tpu.memory_space<vmem>>, %arg10: memref<1x4x8x32xbf16, #tpu.memory_space<vmem>>, %arg11: memref<1x1x32xf32, #tpu.memory_space<vmem>>, %arg12: memref<1x2x1x32xf32, #tpu.memory_space<vmem>>, %arg13: memref<1x32x64xbf16, #tpu.memory_space<vmem>>, %arg14: memref<1x1x64xf32, #tpu.memory_space<vmem>>, %arg15: memref<1x64x32xbf16, #tpu.memory_space<vmem>>, %arg16: memref<1x1x32xf32, #tpu.memory_space<vmem>>, %arg17: memref<1x2x1x32xf32, #tpu.memory_space<vmem>>, %arg18: memref<32x32xbf16, #tpu.memory_space<vmem>>, %arg19: memref<1x32xf32, #tpu.memory_space<vmem>>, %arg20: memref<32x128xbf16, #tpu.memory_space<vmem>>, %arg21: memref<1x128xf32, #tpu.memory_space<vmem>>, %arg22: memref<16x128xf32, #tpu.memory_space<vmem>>, %arg23: memref<16x32xf32, #tpu.memory_space<vmem>>) attributes {dimension_semantics = [#tpu.dimension_semantics<arbitrary>], iteration_bounds = array<i64: 2>, scalar_prefetch = 0 : i64, scratch_operands = 1 : i64, tpu.core_type = #tpu.core_type<tc>, window_params = [{pipeline_mode = #tpu.pipeline_mode<synchronous>, transform_indices = @transform_0, window_bounds = array<i64: 16, 32>}, {pipeline_mode = #tpu.pipeline_mode<synchronous>, transform_indices = @transform_1, window_bounds = array<i64: 2, 1, 8>}, {pipeline_mode = #tpu.pipeline_mode<synchronous>, transform_indices = @transform_2, window_bounds = array<i64: 2, 1, 32>}, {transform_indices = @transform_3, window_bounds = array<i64: 1, 4, 32, 8>}, {transform_indices = @transform_4, window_bounds = array<i64: 1, 4, 32, 8>}, {transform_indices = @transform_5, window_bounds = array<i64: 1, 4, 32, 8>}, {transform_indices = @transform_6, window_bounds = array<i64: 1, 4, 1, 8>}, {transform_indices = @transform_7, window_bounds = array<i64: 1, 4, 1, 8>}, {transform_indices = @transform_8, window_bounds = array<i64: 1, 4, 1, 8>}, {transform_indices = @transform_9, window_bounds = array<i64: 1, 4, 8, 32>}, {transform_indices = @transform_10, window_bounds = array<i64: 1, 1, 32>}, {transform_indices = @transform_11, window_bounds = array<i64: 1, 2, 1, 32>}, {transform_indices = @transform_12, window_bounds = array<i64: 1, 32, 64>}, {transform_indices = @transform_13, window_bounds = array<i64: 1, 1, 64>}, {transform_indices = @transform_14, window_bounds = array<i64: 1, 64, 32>}, {transform_indices = @transform_15, window_bounds = array<i64: 1, 1, 32>}, {transform_indices = @transform_16, window_bounds = array<i64: 1, 2, 1, 32>}, {pipeline_mode = #tpu.pipeline_mode<synchronous>, transform_indices = @transform_17, window_bounds = array<i64: 32, 32>}, {pipeline_mode = #tpu.pipeline_mode<synchronous>, transform_indices = @transform_18, window_bounds = array<i64: 1, 32>}, {pipeline_mode = #tpu.pipeline_mode<synchronous>, transform_indices = @transform_19, window_bounds = array<i64: 32, 128>}, {pipeline_mode = #tpu.pipeline_mode<synchronous>, transform_indices = @transform_20, window_bounds = array<i64: 1, 128>}, {pipeline_mode = #tpu.pipeline_mode<synchronous>, transform_indices = @transform_21, window_bounds = array<i64: 16, 128>}]} {
    %c0_i32 = arith.constant 0 : i32
    %0 = arith.cmpi eq, %arg0, %c0_i32 : i32
    %1 = arith.extui %0 : i1 to i32
    %c0_i32_0 = arith.constant 0 : i32
    %2 = arith.cmpi ne, %1, %c0_i32_0 : i32
    scf.if %2 {
      %c0_244 = arith.constant 0 : index
      %c0_245 = arith.constant 0 : index
      %379 = vector.load %arg1[%c0_244, %c0_245] : memref<16x32xf32, #tpu.memory_space<vmem>>, vector<16x32xf32>
      %c0_246 = arith.constant 0 : index
      %c0_247 = arith.constant 0 : index
      %c0_248 = arith.constant 0 : index
      %380 = vector.load %arg3[%c0_246, %c0_247, %c0_248] : memref<2x1x32xf32, #tpu.memory_space<vmem>>, vector<1x1x32xf32>
      %381 = vector.shape_cast %380 : vector<1x1x32xf32> to vector<1x32xf32>
      %c1_249 = arith.constant 1 : index
      %c0_250 = arith.constant 0 : index
      %c0_251 = arith.constant 0 : index
      %382 = vector.load %arg3[%c1_249, %c0_250, %c0_251] : memref<2x1x32xf32, #tpu.memory_space<vmem>>, vector<1x1x32xf32>
      %383 = vector.shape_cast %382 : vector<1x1x32xf32> to vector<1x32xf32>
      %cst_252 = arith.constant dense<0.000000e+00> : vector<16xf32>
      %384 = vector.multi_reduction <add>, %379, %cst_252 [1] : vector<16x32xf32> to vector<16xf32>
      %385 = vector.shape_cast %384 : vector<16xf32> to vector<16x1xf32>
      %cst_253 = arith.constant 3.200000e+01 : f32
      %386 = vector.broadcast %cst_253 : f32 to vector<16x1xf32>
      %387 = arith.divf %385, %386 : vector<16x1xf32>
      %388 = vector.broadcast %387 : vector<16x1xf32> to vector<16x32xf32>
      %389 = arith.subf %379, %388 : vector<16x32xf32>
      %390 = arith.mulf %389, %389 : vector<16x32xf32>
      %cst_254 = arith.constant dense<0.000000e+00> : vector<16xf32>
      %391 = vector.multi_reduction <add>, %390, %cst_254 [1] : vector<16x32xf32> to vector<16xf32>
      %392 = vector.shape_cast %391 : vector<16xf32> to vector<16x1xf32>
      %cst_255 = arith.constant 3.200000e+01 : f32
      %393 = vector.broadcast %cst_255 : f32 to vector<16x1xf32>
      %394 = arith.divf %392, %393 : vector<16x1xf32>
      %cst_256 = arith.constant 9.99999996E-13 : f32
      %395 = vector.broadcast %cst_256 : f32 to vector<16x1xf32>
      %396 = arith.addf %394, %395 : vector<16x1xf32>
      %397 = math.rsqrt %396 : vector<16x1xf32>
      %398 = vector.broadcast %387 : vector<16x1xf32> to vector<16x32xf32>
      %399 = arith.subf %379, %398 : vector<16x32xf32>
      %400 = vector.broadcast %397 : vector<16x1xf32> to vector<16x32xf32>
      %401 = arith.mulf %399, %400 : vector<16x32xf32>
      %402 = vector.broadcast %381 : vector<1x32xf32> to vector<16x32xf32>
      %403 = arith.mulf %401, %402 : vector<16x32xf32>
      %404 = vector.broadcast %383 : vector<1x32xf32> to vector<16x32xf32>
      %405 = arith.addf %403, %404 : vector<16x32xf32>
      %c0_257 = arith.constant 0 : index
      %c0_258 = arith.constant 0 : index
      %406 = vector.load %arg23[%c0_257, %c0_258] : memref<16x32xf32, #tpu.memory_space<vmem>>, vector<16x32xf32>
      tpu.vector_store %arg23[%c0_257, %c0_258], %405 {strides = array<i32>} : memref<16x32xf32, #tpu.memory_space<vmem>>, vector<16x32xf32>,
    } else {
    }
    %c0 = arith.constant 0 : index
    %c0_1 = arith.constant 0 : index
    %3 = vector.load %arg23[%c0, %c0_1] : memref<16x32xf32, #tpu.memory_space<vmem>>, vector<16x32xf32>
    %4 = arith.truncf %3 : vector<16x32xf32> to vector<16x32xbf16>
    %c0_2 = arith.constant 0 : index
    %c0_3 = arith.constant 0 : index
    %c0_4 = arith.constant 0 : index
    %c0_5 = arith.constant 0 : index
    %5 = vector.load %arg4[%c0_2, %c0_3, %c0_4, %c0_5] : memref<1x4x32x8xbf16, #tpu.memory_space<vmem>>, vector<1x1x32x8xbf16>
    %6 = vector.shape_cast %5 : vector<1x1x32x8xbf16> to vector<32x8xbf16>
    %cst = arith.constant dense<0.000000e+00> : vector<16x8xf32>
    %7 = tpu.matmul %4, %6, %cst {dimension_numbers = #tpu.dot_dimension_numbers<[1], [0], [0], [1], [0, 0, 1, 1], [], []>} : vector<16x32xbf16>, vector<32x8xbf16>, vector<16x8xf32> -> vector<16x8xf32>
    %c0_6 = arith.constant 0 : index
    %c0_7 = arith.constant 0 : index
    %c0_8 = arith.constant 0 : index
    %c0_9 = arith.constant 0 : index
    %8 = vector.load %arg7[%c0_6, %c0_7, %c0_8, %c0_9] : memref<1x4x1x8xf32, #tpu.memory_space<vmem>>, vector<1x1x1x8xf32>
    %9 = vector.shape_cast %8 : vector<1x1x1x8xf32> to vector<1x8xf32>
    %10 = vector.broadcast %9 : vector<1x8xf32> to vector<16x8xf32>
    %11 = arith.addf %7, %10 : vector<16x8xf32>
    %c0_10 = arith.constant 0 : index
    %c0_11 = arith.constant 0 : index
    %c0_12 = arith.constant 0 : index
    %c0_13 = arith.constant 0 : index
    %12 = vector.load %arg5[%c0_10, %c0_11, %c0_12, %c0_13] : memref<1x4x32x8xbf16, #tpu.memory_space<vmem>>, vector<1x1x32x8xbf16>
    %13 = vector.shape_cast %12 : vector<1x1x32x8xbf16> to vector<32x8xbf16>
    %cst_14 = arith.constant dense<0.000000e+00> : vector<16x8xf32>
    %14 = tpu.matmul %4, %13, %cst_14 {dimension_numbers = #tpu.dot_dimension_numbers<[1], [0], [0], [1], [0, 0, 1, 1], [], []>} : vector<16x32xbf16>, vector<32x8xbf16>, vector<16x8xf32> -> vector<16x8xf32>
    %c0_15 = arith.constant 0 : index
    %c0_16 = arith.constant 0 : index
    %c0_17 = arith.constant 0 : index
    %c0_18 = arith.constant 0 : index
    %15 = vector.load %arg8[%c0_15, %c0_16, %c0_17, %c0_18] : memref<1x4x1x8xf32, #tpu.memory_space<vmem>>, vector<1x1x1x8xf32>
    %16 = vector.shape_cast %15 : vector<1x1x1x8xf32> to vector<1x8xf32>
    %17 = vector.broadcast %16 : vector<1x8xf32> to vector<16x8xf32>
    %18 = arith.addf %14, %17 : vector<16x8xf32>
    %c0_19 = arith.constant 0 : index
    %c0_20 = arith.constant 0 : index
    %c0_21 = arith.constant 0 : index
    %c0_22 = arith.constant 0 : index
    %19 = vector.load %arg6[%c0_19, %c0_20, %c0_21, %c0_22] : memref<1x4x32x8xbf16, #tpu.memory_space<vmem>>, vector<1x1x32x8xbf16>
    %20 = vector.shape_cast %19 : vector<1x1x32x8xbf16> to vector<32x8xbf16>
    %cst_23 = arith.constant dense<0.000000e+00> : vector<16x8xf32>
    %21 = tpu.matmul %4, %20, %cst_23 {dimension_numbers = #tpu.dot_dimension_numbers<[1], [0], [0], [1], [0, 0, 1, 1], [], []>} : vector<16x32xbf16>, vector<32x8xbf16>, vector<16x8xf32> -> vector<16x8xf32>
    %c0_24 = arith.constant 0 : index
    %c0_25 = arith.constant 0 : index
    %c0_26 = arith.constant 0 : index
    %c0_27 = arith.constant 0 : index
    %22 = vector.load %arg9[%c0_24, %c0_25, %c0_26, %c0_27] : memref<1x4x1x8xf32, #tpu.memory_space<vmem>>, vector<1x1x1x8xf32>
    %23 = vector.shape_cast %22 : vector<1x1x1x8xf32> to vector<1x8xf32>
    %24 = vector.broadcast %23 : vector<1x8xf32> to vector<16x8xf32>
    %25 = arith.addf %21, %24 : vector<16x8xf32>
    %c0_28 = arith.constant 0 : index
    %c0_29 = arith.constant 0 : index
    %c0_30 = arith.constant 0 : index
    %c0_31 = arith.constant 0 : index
    %26 = vector.load %arg10[%c0_28, %c0_29, %c0_30, %c0_31] : memref<1x4x8x32xbf16, #tpu.memory_space<vmem>>, vector<1x1x8x32xbf16>
    %27 = vector.shape_cast %26 : vector<1x1x8x32xbf16> to vector<8x32xbf16>
    %28 = vector.extract_strided_slice %11 {offsets = [0, 0], sizes = [8, 8], strides = [1, 1]} : vector<16x8xf32> to vector<8x8xf32>
    %cst_32 = arith.constant 0.353553385 : f32
    %29 = vector.broadcast %cst_32 : f32 to vector<8x8xf32>
    %30 = arith.mulf %28, %29 : vector<8x8xf32>
    %31 = vector.extract_strided_slice %18 {offsets = [0, 0], sizes = [8, 8], strides = [1, 1]} : vector<16x8xf32> to vector<8x8xf32>
    %32 = vector.extract_strided_slice %25 {offsets = [0, 0], sizes = [8, 8], strides = [1, 1]} : vector<16x8xf32> to vector<8x8xf32>
    %cst_33 = arith.constant dense<0.000000e+00> : vector<8x8xf32>
    %33 = tpu.matmul %30, %31, %cst_33 {dimension_numbers = #tpu.dot_dimension_numbers<[1], [1], [0], [0], [0, 0, 1, 0], [], []>} : vector<8x8xf32>, vector<8x8xf32>, vector<8x8xf32> -> vector<8x8xf32>
    %c0_34 = arith.constant 0 : index
    %c0_35 = arith.constant 0 : index
    %c0_36 = arith.constant 0 : index
    %34 = vector.load %arg2[%c0_34, %c0_35, %c0_36] : memref<2x1x8xf32, #tpu.memory_space<vmem>>, vector<1x1x8xf32>
    %35 = vector.shape_cast %34 : vector<1x1x8xf32> to vector<1x8xf32>
    %36 = vector.broadcast %35 : vector<1x8xf32> to vector<8x8xf32>
    %37 = arith.addf %33, %36 : vector<8x8xf32>
    %cst_37 = arith.constant dense<0xFF800000> : vector<8xf32>
    %38 = vector.multi_reduction <maximumf>, %37, %cst_37 [1] : vector<8x8xf32> to vector<8xf32>
    %39 = vector.shape_cast %38 : vector<8xf32> to vector<8x1xf32>
    %40 = vector.broadcast %39 : vector<8x1xf32> to vector<8x8xf32>
    %41 = arith.subf %37, %40 : vector<8x8xf32>
    %42 = math.exp %41 : vector<8x8xf32>
    %cst_38 = arith.constant dense<0.000000e+00> : vector<8xf32>
    %43 = vector.multi_reduction <add>, %42, %cst_38 [1] : vector<8x8xf32> to vector<8xf32>
    %44 = vector.shape_cast %43 : vector<8xf32> to vector<8x1xf32>
    %45 = tpu.reciprocal %44 {approx = true} : vector<8x1xf32> -> vector<8x1xf32>
    %46 = vector.broadcast %45 : vector<8x1xf32> to vector<8x8xf32>
    %47 = arith.mulf %42, %46 : vector<8x8xf32>
    %cst_39 = arith.constant dense<0.000000e+00> : vector<8x8xf32>
    %48 = tpu.matmul %47, %32, %cst_39 {dimension_numbers = #tpu.dot_dimension_numbers<[1], [0], [0], [1], [0, 0, 1, 1], [], []>} : vector<8x8xf32>, vector<8x8xf32>, vector<8x8xf32> -> vector<8x8xf32>
    %49 = arith.truncf %48 : vector<8x8xf32> to vector<8x8xbf16>
    %cst_40 = arith.constant dense<0.000000e+00> : vector<8x32xf32>
    %50 = tpu.matmul %49, %27, %cst_40 {dimension_numbers = #tpu.dot_dimension_numbers<[1], [0], [0], [1], [0, 0, 1, 1], [], []>} : vector<8x8xbf16>, vector<8x32xbf16>, vector<8x32xf32> -> vector<8x32xf32>
    %51 = vector.extract_strided_slice %11 {offsets = [8, 0], sizes = [8, 8], strides = [1, 1]} : vector<16x8xf32> to vector<8x8xf32>
    %cst_41 = arith.constant 0.353553385 : f32
    %52 = vector.broadcast %cst_41 : f32 to vector<8x8xf32>
    %53 = arith.mulf %51, %52 : vector<8x8xf32>
    %54 = vector.extract_strided_slice %18 {offsets = [8, 0], sizes = [8, 8], strides = [1, 1]} : vector<16x8xf32> to vector<8x8xf32>
    %55 = vector.extract_strided_slice %25 {offsets = [8, 0], sizes = [8, 8], strides = [1, 1]} : vector<16x8xf32> to vector<8x8xf32>
    %cst_42 = arith.constant dense<0.000000e+00> : vector<8x8xf32>
    %56 = tpu.matmul %53, %54, %cst_42 {dimension_numbers = #tpu.dot_dimension_numbers<[1], [1], [0], [0], [0, 0, 1, 0], [], []>} : vector<8x8xf32>, vector<8x8xf32>, vector<8x8xf32> -> vector<8x8xf32>
    %c1 = arith.constant 1 : index
    %c0_43 = arith.constant 0 : index
    %c0_44 = arith.constant 0 : index
    %57 = vector.load %arg2[%c1, %c0_43, %c0_44] : memref<2x1x8xf32, #tpu.memory_space<vmem>>, vector<1x1x8xf32>
    %58 = vector.shape_cast %57 : vector<1x1x8xf32> to vector<1x8xf32>
    %59 = vector.broadcast %58 : vector<1x8xf32> to vector<8x8xf32>
    %60 = arith.addf %56, %59 : vector<8x8xf32>
    %cst_45 = arith.constant dense<0xFF800000> : vector<8xf32>
    %61 = vector.multi_reduction <maximumf>, %60, %cst_45 [1] : vector<8x8xf32> to vector<8xf32>
    %62 = vector.shape_cast %61 : vector<8xf32> to vector<8x1xf32>
    %63 = vector.broadcast %62 : vector<8x1xf32> to vector<8x8xf32>
    %64 = arith.subf %60, %63 : vector<8x8xf32>
    %65 = math.exp %64 : vector<8x8xf32>
    %cst_46 = arith.constant dense<0.000000e+00> : vector<8xf32>
    %66 = vector.multi_reduction <add>, %65, %cst_46 [1] : vector<8x8xf32> to vector<8xf32>
    %67 = vector.shape_cast %66 : vector<8xf32> to vector<8x1xf32>
    %68 = tpu.reciprocal %67 {approx = true} : vector<8x1xf32> -> vector<8x1xf32>
    %69 = vector.broadcast %68 : vector<8x1xf32> to vector<8x8xf32>
    %70 = arith.mulf %65, %69 : vector<8x8xf32>
    %cst_47 = arith.constant dense<0.000000e+00> : vector<8x8xf32>
    %71 = tpu.matmul %70, %55, %cst_47 {dimension_numbers = #tpu.dot_dimension_numbers<[1], [0], [0], [1], [0, 0, 1, 1], [], []>} : vector<8x8xf32>, vector<8x8xf32>, vector<8x8xf32> -> vector<8x8xf32>
    %72 = arith.truncf %71 : vector<8x8xf32> to vector<8x8xbf16>
    %cst_48 = arith.constant dense<0.000000e+00> : vector<8x32xf32>
    %73 = tpu.matmul %72, %27, %cst_48 {dimension_numbers = #tpu.dot_dimension_numbers<[1], [0], [0], [1], [0, 0, 1, 1], [], []>} : vector<8x8xbf16>, vector<8x32xbf16>, vector<8x32xf32> -> vector<8x32xf32>
    %c0_49 = arith.constant 0 : index
    %c1_50 = arith.constant 1 : index
    %c0_51 = arith.constant 0 : index
    %c0_52 = arith.constant 0 : index
    %74 = vector.load %arg4[%c0_49, %c1_50, %c0_51, %c0_52] : memref<1x4x32x8xbf16, #tpu.memory_space<vmem>>, vector<1x1x32x8xbf16>
    %75 = vector.shape_cast %74 : vector<1x1x32x8xbf16> to vector<32x8xbf16>
    %cst_53 = arith.constant dense<0.000000e+00> : vector<16x8xf32>
    %76 = tpu.matmul %4, %75, %cst_53 {dimension_numbers = #tpu.dot_dimension_numbers<[1], [0], [0], [1], [0, 0, 1, 1], [], []>} : vector<16x32xbf16>, vector<32x8xbf16>, vector<16x8xf32> -> vector<16x8xf32>
    %c0_54 = arith.constant 0 : index
    %c1_55 = arith.constant 1 : index
    %c0_56 = arith.constant 0 : index
    %c0_57 = arith.constant 0 : index
    %77 = vector.load %arg7[%c0_54, %c1_55, %c0_56, %c0_57] : memref<1x4x1x8xf32, #tpu.memory_space<vmem>>, vector<1x1x1x8xf32>
    %78 = vector.shape_cast %77 : vector<1x1x1x8xf32> to vector<1x8xf32>
    %79 = vector.broadcast %78 : vector<1x8xf32> to vector<16x8xf32>
    %80 = arith.addf %76, %79 : vector<16x8xf32>
    %c0_58 = arith.constant 0 : index
    %c1_59 = arith.constant 1 : index
    %c0_60 = arith.constant 0 : index
    %c0_61 = arith.constant 0 : index
    %81 = vector.load %arg5[%c0_58, %c1_59, %c0_60, %c0_61] : memref<1x4x32x8xbf16, #tpu.memory_space<vmem>>, vector<1x1x32x8xbf16>
    %82 = vector.shape_cast %81 : vector<1x1x32x8xbf16> to vector<32x8xbf16>
    %cst_62 = arith.constant dense<0.000000e+00> : vector<16x8xf32>
    %83 = tpu.matmul %4, %82, %cst_62 {dimension_numbers = #tpu.dot_dimension_numbers<[1], [0], [0], [1], [0, 0, 1, 1], [], []>} : vector<16x32xbf16>, vector<32x8xbf16>, vector<16x8xf32> -> vector<16x8xf32>
    %c0_63 = arith.constant 0 : index
    %c1_64 = arith.constant 1 : index
    %c0_65 = arith.constant 0 : index
    %c0_66 = arith.constant 0 : index
    %84 = vector.load %arg8[%c0_63, %c1_64, %c0_65, %c0_66] : memref<1x4x1x8xf32, #tpu.memory_space<vmem>>, vector<1x1x1x8xf32>
    %85 = vector.shape_cast %84 : vector<1x1x1x8xf32> to vector<1x8xf32>
    %86 = vector.broadcast %85 : vector<1x8xf32> to vector<16x8xf32>
    %87 = arith.addf %83, %86 : vector<16x8xf32>
    %c0_67 = arith.constant 0 : index
    %c1_68 = arith.constant 1 : index
    %c0_69 = arith.constant 0 : index
    %c0_70 = arith.constant 0 : index
    %88 = vector.load %arg6[%c0_67, %c1_68, %c0_69, %c0_70] : memref<1x4x32x8xbf16, #tpu.memory_space<vmem>>, vector<1x1x32x8xbf16>
    %89 = vector.shape_cast %88 : vector<1x1x32x8xbf16> to vector<32x8xbf16>
    %cst_71 = arith.constant dense<0.000000e+00> : vector<16x8xf32>
    %90 = tpu.matmul %4, %89, %cst_71 {dimension_numbers = #tpu.dot_dimension_numbers<[1], [0], [0], [1], [0, 0, 1, 1], [], []>} : vector<16x32xbf16>, vector<32x8xbf16>, vector<16x8xf32> -> vector<16x8xf32>
    %c0_72 = arith.constant 0 : index
    %c1_73 = arith.constant 1 : index
    %c0_74 = arith.constant 0 : index
    %c0_75 = arith.constant 0 : index
    %91 = vector.load %arg9[%c0_72, %c1_73, %c0_74, %c0_75] : memref<1x4x1x8xf32, #tpu.memory_space<vmem>>, vector<1x1x1x8xf32>
    %92 = vector.shape_cast %91 : vector<1x1x1x8xf32> to vector<1x8xf32>
    %93 = vector.broadcast %92 : vector<1x8xf32> to vector<16x8xf32>
    %94 = arith.addf %90, %93 : vector<16x8xf32>
    %c0_76 = arith.constant 0 : index
    %c1_77 = arith.constant 1 : index
    %c0_78 = arith.constant 0 : index
    %c0_79 = arith.constant 0 : index
    %95 = vector.load %arg10[%c0_76, %c1_77, %c0_78, %c0_79] : memref<1x4x8x32xbf16, #tpu.memory_space<vmem>>, vector<1x1x8x32xbf16>
    %96 = vector.shape_cast %95 : vector<1x1x8x32xbf16> to vector<8x32xbf16>
    %97 = vector.extract_strided_slice %80 {offsets = [0, 0], sizes = [8, 8], strides = [1, 1]} : vector<16x8xf32> to vector<8x8xf32>
    %cst_80 = arith.constant 0.353553385 : f32
    %98 = vector.broadcast %cst_80 : f32 to vector<8x8xf32>
    %99 = arith.mulf %97, %98 : vector<8x8xf32>
    %100 = vector.extract_strided_slice %87 {offsets = [0, 0], sizes = [8, 8], strides = [1, 1]} : vector<16x8xf32> to vector<8x8xf32>
    %101 = vector.extract_strided_slice %94 {offsets = [0, 0], sizes = [8, 8], strides = [1, 1]} : vector<16x8xf32> to vector<8x8xf32>
    %cst_81 = arith.constant dense<0.000000e+00> : vector<8x8xf32>
    %102 = tpu.matmul %99, %100, %cst_81 {dimension_numbers = #tpu.dot_dimension_numbers<[1], [1], [0], [0], [0, 0, 1, 0], [], []>} : vector<8x8xf32>, vector<8x8xf32>, vector<8x8xf32> -> vector<8x8xf32>
    %c0_82 = arith.constant 0 : index
    %c0_83 = arith.constant 0 : index
    %c0_84 = arith.constant 0 : index
    %103 = vector.load %arg2[%c0_82, %c0_83, %c0_84] : memref<2x1x8xf32, #tpu.memory_space<vmem>>, vector<1x1x8xf32>
    %104 = vector.shape_cast %103 : vector<1x1x8xf32> to vector<1x8xf32>
    %105 = vector.broadcast %104 : vector<1x8xf32> to vector<8x8xf32>
    %106 = arith.addf %102, %105 : vector<8x8xf32>
    %cst_85 = arith.constant dense<0xFF800000> : vector<8xf32>
    %107 = vector.multi_reduction <maximumf>, %106, %cst_85 [1] : vector<8x8xf32> to vector<8xf32>
    %108 = vector.shape_cast %107 : vector<8xf32> to vector<8x1xf32>
    %109 = vector.broadcast %108 : vector<8x1xf32> to vector<8x8xf32>
    %110 = arith.subf %106, %109 : vector<8x8xf32>
    %111 = math.exp %110 : vector<8x8xf32>
    %cst_86 = arith.constant dense<0.000000e+00> : vector<8xf32>
    %112 = vector.multi_reduction <add>, %111, %cst_86 [1] : vector<8x8xf32> to vector<8xf32>
    %113 = vector.shape_cast %112 : vector<8xf32> to vector<8x1xf32>
    %114 = tpu.reciprocal %113 {approx = true} : vector<8x1xf32> -> vector<8x1xf32>
    %115 = vector.broadcast %114 : vector<8x1xf32> to vector<8x8xf32>
    %116 = arith.mulf %111, %115 : vector<8x8xf32>
    %cst_87 = arith.constant dense<0.000000e+00> : vector<8x8xf32>
    %117 = tpu.matmul %116, %101, %cst_87 {dimension_numbers = #tpu.dot_dimension_numbers<[1], [0], [0], [1], [0, 0, 1, 1], [], []>} : vector<8x8xf32>, vector<8x8xf32>, vector<8x8xf32> -> vector<8x8xf32>
    %118 = arith.truncf %117 : vector<8x8xf32> to vector<8x8xbf16>
    %cst_88 = arith.constant dense<0.000000e+00> : vector<8x32xf32>
    %119 = tpu.matmul %118, %96, %cst_88 {dimension_numbers = #tpu.dot_dimension_numbers<[1], [0], [0], [1], [0, 0, 1, 1], [], []>} : vector<8x8xbf16>, vector<8x32xbf16>, vector<8x32xf32> -> vector<8x32xf32>
    %120 = arith.addf %50, %119 : vector<8x32xf32>
    %121 = vector.extract_strided_slice %80 {offsets = [8, 0], sizes = [8, 8], strides = [1, 1]} : vector<16x8xf32> to vector<8x8xf32>
    %cst_89 = arith.constant 0.353553385 : f32
    %122 = vector.broadcast %cst_89 : f32 to vector<8x8xf32>
    %123 = arith.mulf %121, %122 : vector<8x8xf32>
    %124 = vector.extract_strided_slice %87 {offsets = [8, 0], sizes = [8, 8], strides = [1, 1]} : vector<16x8xf32> to vector<8x8xf32>
    %125 = vector.extract_strided_slice %94 {offsets = [8, 0], sizes = [8, 8], strides = [1, 1]} : vector<16x8xf32> to vector<8x8xf32>
    %cst_90 = arith.constant dense<0.000000e+00> : vector<8x8xf32>
    %126 = tpu.matmul %123, %124, %cst_90 {dimension_numbers = #tpu.dot_dimension_numbers<[1], [1], [0], [0], [0, 0, 1, 0], [], []>} : vector<8x8xf32>, vector<8x8xf32>, vector<8x8xf32> -> vector<8x8xf32>
    %c1_91 = arith.constant 1 : index
    %c0_92 = arith.constant 0 : index
    %c0_93 = arith.constant 0 : index
    %127 = vector.load %arg2[%c1_91, %c0_92, %c0_93] : memref<2x1x8xf32, #tpu.memory_space<vmem>>, vector<1x1x8xf32>
    %128 = vector.shape_cast %127 : vector<1x1x8xf32> to vector<1x8xf32>
    %129 = vector.broadcast %128 : vector<1x8xf32> to vector<8x8xf32>
    %130 = arith.addf %126, %129 : vector<8x8xf32>
    %cst_94 = arith.constant dense<0xFF800000> : vector<8xf32>
    %131 = vector.multi_reduction <maximumf>, %130, %cst_94 [1] : vector<8x8xf32> to vector<8xf32>
    %132 = vector.shape_cast %131 : vector<8xf32> to vector<8x1xf32>
    %133 = vector.broadcast %132 : vector<8x1xf32> to vector<8x8xf32>
    %134 = arith.subf %130, %133 : vector<8x8xf32>
    %135 = math.exp %134 : vector<8x8xf32>
    %cst_95 = arith.constant dense<0.000000e+00> : vector<8xf32>
    %136 = vector.multi_reduction <add>, %135, %cst_95 [1] : vector<8x8xf32> to vector<8xf32>
    %137 = vector.shape_cast %136 : vector<8xf32> to vector<8x1xf32>
    %138 = tpu.reciprocal %137 {approx = true} : vector<8x1xf32> -> vector<8x1xf32>
    %139 = vector.broadcast %138 : vector<8x1xf32> to vector<8x8xf32>
    %140 = arith.mulf %135, %139 : vector<8x8xf32>
    %cst_96 = arith.constant dense<0.000000e+00> : vector<8x8xf32>
    %141 = tpu.matmul %140, %125, %cst_96 {dimension_numbers = #tpu.dot_dimension_numbers<[1], [0], [0], [1], [0, 0, 1, 1], [], []>} : vector<8x8xf32>, vector<8x8xf32>, vector<8x8xf32> -> vector<8x8xf32>
    %142 = arith.truncf %141 : vector<8x8xf32> to vector<8x8xbf16>
    %cst_97 = arith.constant dense<0.000000e+00> : vector<8x32xf32>
    %143 = tpu.matmul %142, %96, %cst_97 {dimension_numbers = #tpu.dot_dimension_numbers<[1], [0], [0], [1], [0, 0, 1, 1], [], []>} : vector<8x8xbf16>, vector<8x32xbf16>, vector<8x32xf32> -> vector<8x32xf32>
    %144 = arith.addf %73, %143 : vector<8x32xf32>
    %c0_98 = arith.constant 0 : index
    %c2 = arith.constant 2 : index
    %c0_99 = arith.constant 0 : index
    %c0_100 = arith.constant 0 : index
    %145 = vector.load %arg4[%c0_98, %c2, %c0_99, %c0_100] : memref<1x4x32x8xbf16, #tpu.memory_space<vmem>>, vector<1x1x32x8xbf16>
    %146 = vector.shape_cast %145 : vector<1x1x32x8xbf16> to vector<32x8xbf16>
    %cst_101 = arith.constant dense<0.000000e+00> : vector<16x8xf32>
    %147 = tpu.matmul %4, %146, %cst_101 {dimension_numbers = #tpu.dot_dimension_numbers<[1], [0], [0], [1], [0, 0, 1, 1], [], []>} : vector<16x32xbf16>, vector<32x8xbf16>, vector<16x8xf32> -> vector<16x8xf32>
    %c0_102 = arith.constant 0 : index
    %c2_103 = arith.constant 2 : index
    %c0_104 = arith.constant 0 : index
    %c0_105 = arith.constant 0 : index
    %148 = vector.load %arg7[%c0_102, %c2_103, %c0_104, %c0_105] : memref<1x4x1x8xf32, #tpu.memory_space<vmem>>, vector<1x1x1x8xf32>
    %149 = vector.shape_cast %148 : vector<1x1x1x8xf32> to vector<1x8xf32>
    %150 = vector.broadcast %149 : vector<1x8xf32> to vector<16x8xf32>
    %151 = arith.addf %147, %150 : vector<16x8xf32>
    %c0_106 = arith.constant 0 : index
    %c2_107 = arith.constant 2 : index
    %c0_108 = arith.constant 0 : index
    %c0_109 = arith.constant 0 : index
    %152 = vector.load %arg5[%c0_106, %c2_107, %c0_108, %c0_109] : memref<1x4x32x8xbf16, #tpu.memory_space<vmem>>, vector<1x1x32x8xbf16>
    %153 = vector.shape_cast %152 : vector<1x1x32x8xbf16> to vector<32x8xbf16>
    %cst_110 = arith.constant dense<0.000000e+00> : vector<16x8xf32>
    %154 = tpu.matmul %4, %153, %cst_110 {dimension_numbers = #tpu.dot_dimension_numbers<[1], [0], [0], [1], [0, 0, 1, 1], [], []>} : vector<16x32xbf16>, vector<32x8xbf16>, vector<16x8xf32> -> vector<16x8xf32>
    %c0_111 = arith.constant 0 : index
    %c2_112 = arith.constant 2 : index
    %c0_113 = arith.constant 0 : index
    %c0_114 = arith.constant 0 : index
    %155 = vector.load %arg8[%c0_111, %c2_112, %c0_113, %c0_114] : memref<1x4x1x8xf32, #tpu.memory_space<vmem>>, vector<1x1x1x8xf32>
    %156 = vector.shape_cast %155 : vector<1x1x1x8xf32> to vector<1x8xf32>
    %157 = vector.broadcast %156 : vector<1x8xf32> to vector<16x8xf32>
    %158 = arith.addf %154, %157 : vector<16x8xf32>
    %c0_115 = arith.constant 0 : index
    %c2_116 = arith.constant 2 : index
    %c0_117 = arith.constant 0 : index
    %c0_118 = arith.constant 0 : index
    %159 = vector.load %arg6[%c0_115, %c2_116, %c0_117, %c0_118] : memref<1x4x32x8xbf16, #tpu.memory_space<vmem>>, vector<1x1x32x8xbf16>
    %160 = vector.shape_cast %159 : vector<1x1x32x8xbf16> to vector<32x8xbf16>
    %cst_119 = arith.constant dense<0.000000e+00> : vector<16x8xf32>
    %161 = tpu.matmul %4, %160, %cst_119 {dimension_numbers = #tpu.dot_dimension_numbers<[1], [0], [0], [1], [0, 0, 1, 1], [], []>} : vector<16x32xbf16>, vector<32x8xbf16>, vector<16x8xf32> -> vector<16x8xf32>
    %c0_120 = arith.constant 0 : index
    %c2_121 = arith.constant 2 : index
    %c0_122 = arith.constant 0 : index
    %c0_123 = arith.constant 0 : index
    %162 = vector.load %arg9[%c0_120, %c2_121, %c0_122, %c0_123] : memref<1x4x1x8xf32, #tpu.memory_space<vmem>>, vector<1x1x1x8xf32>
    %163 = vector.shape_cast %162 : vector<1x1x1x8xf32> to vector<1x8xf32>
    %164 = vector.broadcast %163 : vector<1x8xf32> to vector<16x8xf32>
    %165 = arith.addf %161, %164 : vector<16x8xf32>
    %c0_124 = arith.constant 0 : index
    %c2_125 = arith.constant 2 : index
    %c0_126 = arith.constant 0 : index
    %c0_127 = arith.constant 0 : index
    %166 = vector.load %arg10[%c0_124, %c2_125, %c0_126, %c0_127] : memref<1x4x8x32xbf16, #tpu.memory_space<vmem>>, vector<1x1x8x32xbf16>
    %167 = vector.shape_cast %166 : vector<1x1x8x32xbf16> to vector<8x32xbf16>
    %168 = vector.extract_strided_slice %151 {offsets = [0, 0], sizes = [8, 8], strides = [1, 1]} : vector<16x8xf32> to vector<8x8xf32>
    %cst_128 = arith.constant 0.353553385 : f32
    %169 = vector.broadcast %cst_128 : f32 to vector<8x8xf32>
    %170 = arith.mulf %168, %169 : vector<8x8xf32>
    %171 = vector.extract_strided_slice %158 {offsets = [0, 0], sizes = [8, 8], strides = [1, 1]} : vector<16x8xf32> to vector<8x8xf32>
    %172 = vector.extract_strided_slice %165 {offsets = [0, 0], sizes = [8, 8], strides = [1, 1]} : vector<16x8xf32> to vector<8x8xf32>
    %cst_129 = arith.constant dense<0.000000e+00> : vector<8x8xf32>
    %173 = tpu.matmul %170, %171, %cst_129 {dimension_numbers = #tpu.dot_dimension_numbers<[1], [1], [0], [0], [0, 0, 1, 0], [], []>} : vector<8x8xf32>, vector<8x8xf32>, vector<8x8xf32> -> vector<8x8xf32>
    %c0_130 = arith.constant 0 : index
    %c0_131 = arith.constant 0 : index
    %c0_132 = arith.constant 0 : index
    %174 = vector.load %arg2[%c0_130, %c0_131, %c0_132] : memref<2x1x8xf32, #tpu.memory_space<vmem>>, vector<1x1x8xf32>
    %175 = vector.shape_cast %174 : vector<1x1x8xf32> to vector<1x8xf32>
    %176 = vector.broadcast %175 : vector<1x8xf32> to vector<8x8xf32>
    %177 = arith.addf %173, %176 : vector<8x8xf32>
    %cst_133 = arith.constant dense<0xFF800000> : vector<8xf32>
    %178 = vector.multi_reduction <maximumf>, %177, %cst_133 [1] : vector<8x8xf32> to vector<8xf32>
    %179 = vector.shape_cast %178 : vector<8xf32> to vector<8x1xf32>
    %180 = vector.broadcast %179 : vector<8x1xf32> to vector<8x8xf32>
    %181 = arith.subf %177, %180 : vector<8x8xf32>
    %182 = math.exp %181 : vector<8x8xf32>
    %cst_134 = arith.constant dense<0.000000e+00> : vector<8xf32>
    %183 = vector.multi_reduction <add>, %182, %cst_134 [1] : vector<8x8xf32> to vector<8xf32>
    %184 = vector.shape_cast %183 : vector<8xf32> to vector<8x1xf32>
    %185 = tpu.reciprocal %184 {approx = true} : vector<8x1xf32> -> vector<8x1xf32>
    %186 = vector.broadcast %185 : vector<8x1xf32> to vector<8x8xf32>
    %187 = arith.mulf %182, %186 : vector<8x8xf32>
    %cst_135 = arith.constant dense<0.000000e+00> : vector<8x8xf32>
    %188 = tpu.matmul %187, %172, %cst_135 {dimension_numbers = #tpu.dot_dimension_numbers<[1], [0], [0], [1], [0, 0, 1, 1], [], []>} : vector<8x8xf32>, vector<8x8xf32>, vector<8x8xf32> -> vector<8x8xf32>
    %189 = arith.truncf %188 : vector<8x8xf32> to vector<8x8xbf16>
    %cst_136 = arith.constant dense<0.000000e+00> : vector<8x32xf32>
    %190 = tpu.matmul %189, %167, %cst_136 {dimension_numbers = #tpu.dot_dimension_numbers<[1], [0], [0], [1], [0, 0, 1, 1], [], []>} : vector<8x8xbf16>, vector<8x32xbf16>, vector<8x32xf32> -> vector<8x32xf32>
    %191 = arith.addf %120, %190 : vector<8x32xf32>
    %192 = vector.extract_strided_slice %151 {offsets = [8, 0], sizes = [8, 8], strides = [1, 1]} : vector<16x8xf32> to vector<8x8xf32>
    %cst_137 = arith.constant 0.353553385 : f32
    %193 = vector.broadcast %cst_137 : f32 to vector<8x8xf32>
    %194 = arith.mulf %192, %193 : vector<8x8xf32>
    %195 = vector.extract_strided_slice %158 {offsets = [8, 0], sizes = [8, 8], strides = [1, 1]} : vector<16x8xf32> to vector<8x8xf32>
    %196 = vector.extract_strided_slice %165 {offsets = [8, 0], sizes = [8, 8], strides = [1, 1]} : vector<16x8xf32> to vector<8x8xf32>
    %cst_138 = arith.constant dense<0.000000e+00> : vector<8x8xf32>
    %197 = tpu.matmul %194, %195, %cst_138 {dimension_numbers = #tpu.dot_dimension_numbers<[1], [1], [0], [0], [0, 0, 1, 0], [], []>} : vector<8x8xf32>, vector<8x8xf32>, vector<8x8xf32> -> vector<8x8xf32>
    %c1_139 = arith.constant 1 : index
    %c0_140 = arith.constant 0 : index
    %c0_141 = arith.constant 0 : index
    %198 = vector.load %arg2[%c1_139, %c0_140, %c0_141] : memref<2x1x8xf32, #tpu.memory_space<vmem>>, vector<1x1x8xf32>
    %199 = vector.shape_cast %198 : vector<1x1x8xf32> to vector<1x8xf32>
    %200 = vector.broadcast %199 : vector<1x8xf32> to vector<8x8xf32>
    %201 = arith.addf %197, %200 : vector<8x8xf32>
    %cst_142 = arith.constant dense<0xFF800000> : vector<8xf32>
    %202 = vector.multi_reduction <maximumf>, %201, %cst_142 [1] : vector<8x8xf32> to vector<8xf32>
    %203 = vector.shape_cast %202 : vector<8xf32> to vector<8x1xf32>
    %204 = vector.broadcast %203 : vector<8x1xf32> to vector<8x8xf32>
    %205 = arith.subf %201, %204 : vector<8x8xf32>
    %206 = math.exp %205 : vector<8x8xf32>
    %cst_143 = arith.constant dense<0.000000e+00> : vector<8xf32>
    %207 = vector.multi_reduction <add>, %206, %cst_143 [1] : vector<8x8xf32> to vector<8xf32>
    %208 = vector.shape_cast %207 : vector<8xf32> to vector<8x1xf32>
    %209 = tpu.reciprocal %208 {approx = true} : vector<8x1xf32> -> vector<8x1xf32>
    %210 = vector.broadcast %209 : vector<8x1xf32> to vector<8x8xf32>
    %211 = arith.mulf %206, %210 : vector<8x8xf32>
    %cst_144 = arith.constant dense<0.000000e+00> : vector<8x8xf32>
    %212 = tpu.matmul %211, %196, %cst_144 {dimension_numbers = #tpu.dot_dimension_numbers<[1], [0], [0], [1], [0, 0, 1, 1], [], []>} : vector<8x8xf32>, vector<8x8xf32>, vector<8x8xf32> -> vector<8x8xf32>
    %213 = arith.truncf %212 : vector<8x8xf32> to vector<8x8xbf16>
    %cst_145 = arith.constant dense<0.000000e+00> : vector<8x32xf32>
    %214 = tpu.matmul %213, %167, %cst_145 {dimension_numbers = #tpu.dot_dimension_numbers<[1], [0], [0], [1], [0, 0, 1, 1], [], []>} : vector<8x8xbf16>, vector<8x32xbf16>, vector<8x32xf32> -> vector<8x32xf32>
    %215 = arith.addf %144, %214 : vector<8x32xf32>
    %c0_146 = arith.constant 0 : index
    %c3 = arith.constant 3 : index
    %c0_147 = arith.constant 0 : index
    %c0_148 = arith.constant 0 : index
    %216 = vector.load %arg4[%c0_146, %c3, %c0_147, %c0_148] : memref<1x4x32x8xbf16, #tpu.memory_space<vmem>>, vector<1x1x32x8xbf16>
    %217 = vector.shape_cast %216 : vector<1x1x32x8xbf16> to vector<32x8xbf16>
    %cst_149 = arith.constant dense<0.000000e+00> : vector<16x8xf32>
    %218 = tpu.matmul %4, %217, %cst_149 {dimension_numbers = #tpu.dot_dimension_numbers<[1], [0], [0], [1], [0, 0, 1, 1], [], []>} : vector<16x32xbf16>, vector<32x8xbf16>, vector<16x8xf32> -> vector<16x8xf32>
    %c0_150 = arith.constant 0 : index
    %c3_151 = arith.constant 3 : index
    %c0_152 = arith.constant 0 : index
    %c0_153 = arith.constant 0 : index
    %219 = vector.load %arg7[%c0_150, %c3_151, %c0_152, %c0_153] : memref<1x4x1x8xf32, #tpu.memory_space<vmem>>, vector<1x1x1x8xf32>
    %220 = vector.shape_cast %219 : vector<1x1x1x8xf32> to vector<1x8xf32>
    %221 = vector.broadcast %220 : vector<1x8xf32> to vector<16x8xf32>
    %222 = arith.addf %218, %221 : vector<16x8xf32>
    %c0_154 = arith.constant 0 : index
    %c3_155 = arith.constant 3 : index
    %c0_156 = arith.constant 0 : index
    %c0_157 = arith.constant 0 : index
    %223 = vector.load %arg5[%c0_154, %c3_155, %c0_156, %c0_157] : memref<1x4x32x8xbf16, #tpu.memory_space<vmem>>, vector<1x1x32x8xbf16>
    %224 = vector.shape_cast %223 : vector<1x1x32x8xbf16> to vector<32x8xbf16>
    %cst_158 = arith.constant dense<0.000000e+00> : vector<16x8xf32>
    %225 = tpu.matmul %4, %224, %cst_158 {dimension_numbers = #tpu.dot_dimension_numbers<[1], [0], [0], [1], [0, 0, 1, 1], [], []>} : vector<16x32xbf16>, vector<32x8xbf16>, vector<16x8xf32> -> vector<16x8xf32>
    %c0_159 = arith.constant 0 : index
    %c3_160 = arith.constant 3 : index
    %c0_161 = arith.constant 0 : index
    %c0_162 = arith.constant 0 : index
    %226 = vector.load %arg8[%c0_159, %c3_160, %c0_161, %c0_162] : memref<1x4x1x8xf32, #tpu.memory_space<vmem>>, vector<1x1x1x8xf32>
    %227 = vector.shape_cast %226 : vector<1x1x1x8xf32> to vector<1x8xf32>
    %228 = vector.broadcast %227 : vector<1x8xf32> to vector<16x8xf32>
    %229 = arith.addf %225, %228 : vector<16x8xf32>
    %c0_163 = arith.constant 0 : index
    %c3_164 = arith.constant 3 : index
    %c0_165 = arith.constant 0 : index
    %c0_166 = arith.constant 0 : index
    %230 = vector.load %arg6[%c0_163, %c3_164, %c0_165, %c0_166] : memref<1x4x32x8xbf16, #tpu.memory_space<vmem>>, vector<1x1x32x8xbf16>
    %231 = vector.shape_cast %230 : vector<1x1x32x8xbf16> to vector<32x8xbf16>
    %cst_167 = arith.constant dense<0.000000e+00> : vector<16x8xf32>
    %232 = tpu.matmul %4, %231, %cst_167 {dimension_numbers = #tpu.dot_dimension_numbers<[1], [0], [0], [1], [0, 0, 1, 1], [], []>} : vector<16x32xbf16>, vector<32x8xbf16>, vector<16x8xf32> -> vector<16x8xf32>
    %c0_168 = arith.constant 0 : index
    %c3_169 = arith.constant 3 : index
    %c0_170 = arith.constant 0 : index
    %c0_171 = arith.constant 0 : index
    %233 = vector.load %arg9[%c0_168, %c3_169, %c0_170, %c0_171] : memref<1x4x1x8xf32, #tpu.memory_space<vmem>>, vector<1x1x1x8xf32>
    %234 = vector.shape_cast %233 : vector<1x1x1x8xf32> to vector<1x8xf32>
    %235 = vector.broadcast %234 : vector<1x8xf32> to vector<16x8xf32>
    %236 = arith.addf %232, %235 : vector<16x8xf32>
    %c0_172 = arith.constant 0 : index
    %c3_173 = arith.constant 3 : index
    %c0_174 = arith.constant 0 : index
    %c0_175 = arith.constant 0 : index
    %237 = vector.load %arg10[%c0_172, %c3_173, %c0_174, %c0_175] : memref<1x4x8x32xbf16, #tpu.memory_space<vmem>>, vector<1x1x8x32xbf16>
    %238 = vector.shape_cast %237 : vector<1x1x8x32xbf16> to vector<8x32xbf16>
    %239 = vector.extract_strided_slice %222 {offsets = [0, 0], sizes = [8, 8], strides = [1, 1]} : vector<16x8xf32> to vector<8x8xf32>
    %cst_176 = arith.constant 0.353553385 : f32
    %240 = vector.broadcast %cst_176 : f32 to vector<8x8xf32>
    %241 = arith.mulf %239, %240 : vector<8x8xf32>
    %242 = vector.extract_strided_slice %229 {offsets = [0, 0], sizes = [8, 8], strides = [1, 1]} : vector<16x8xf32> to vector<8x8xf32>
    %243 = vector.extract_strided_slice %236 {offsets = [0, 0], sizes = [8, 8], strides = [1, 1]} : vector<16x8xf32> to vector<8x8xf32>
    %cst_177 = arith.constant dense<0.000000e+00> : vector<8x8xf32>
    %244 = tpu.matmul %241, %242, %cst_177 {dimension_numbers = #tpu.dot_dimension_numbers<[1], [1], [0], [0], [0, 0, 1, 0], [], []>} : vector<8x8xf32>, vector<8x8xf32>, vector<8x8xf32> -> vector<8x8xf32>
    %c0_178 = arith.constant 0 : index
    %c0_179 = arith.constant 0 : index
    %c0_180 = arith.constant 0 : index
    %245 = vector.load %arg2[%c0_178, %c0_179, %c0_180] : memref<2x1x8xf32, #tpu.memory_space<vmem>>, vector<1x1x8xf32>
    %246 = vector.shape_cast %245 : vector<1x1x8xf32> to vector<1x8xf32>
    %247 = vector.broadcast %246 : vector<1x8xf32> to vector<8x8xf32>
    %248 = arith.addf %244, %247 : vector<8x8xf32>
    %cst_181 = arith.constant dense<0xFF800000> : vector<8xf32>
    %249 = vector.multi_reduction <maximumf>, %248, %cst_181 [1] : vector<8x8xf32> to vector<8xf32>
    %250 = vector.shape_cast %249 : vector<8xf32> to vector<8x1xf32>
    %251 = vector.broadcast %250 : vector<8x1xf32> to vector<8x8xf32>
    %252 = arith.subf %248, %251 : vector<8x8xf32>
    %253 = math.exp %252 : vector<8x8xf32>
    %cst_182 = arith.constant dense<0.000000e+00> : vector<8xf32>
    %254 = vector.multi_reduction <add>, %253, %cst_182 [1] : vector<8x8xf32> to vector<8xf32>
    %255 = vector.shape_cast %254 : vector<8xf32> to vector<8x1xf32>
    %256 = tpu.reciprocal %255 {approx = true} : vector<8x1xf32> -> vector<8x1xf32>
    %257 = vector.broadcast %256 : vector<8x1xf32> to vector<8x8xf32>
    %258 = arith.mulf %253, %257 : vector<8x8xf32>
    %cst_183 = arith.constant dense<0.000000e+00> : vector<8x8xf32>
    %259 = tpu.matmul %258, %243, %cst_183 {dimension_numbers = #tpu.dot_dimension_numbers<[1], [0], [0], [1], [0, 0, 1, 1], [], []>} : vector<8x8xf32>, vector<8x8xf32>, vector<8x8xf32> -> vector<8x8xf32>
    %260 = arith.truncf %259 : vector<8x8xf32> to vector<8x8xbf16>
    %cst_184 = arith.constant dense<0.000000e+00> : vector<8x32xf32>
    %261 = tpu.matmul %260, %238, %cst_184 {dimension_numbers = #tpu.dot_dimension_numbers<[1], [0], [0], [1], [0, 0, 1, 1], [], []>} : vector<8x8xbf16>, vector<8x32xbf16>, vector<8x32xf32> -> vector<8x32xf32>
    %262 = arith.addf %191, %261 : vector<8x32xf32>
    %263 = vector.extract_strided_slice %222 {offsets = [8, 0], sizes = [8, 8], strides = [1, 1]} : vector<16x8xf32> to vector<8x8xf32>
    %cst_185 = arith.constant 0.353553385 : f32
    %264 = vector.broadcast %cst_185 : f32 to vector<8x8xf32>
    %265 = arith.mulf %263, %264 : vector<8x8xf32>
    %266 = vector.extract_strided_slice %229 {offsets = [8, 0], sizes = [8, 8], strides = [1, 1]} : vector<16x8xf32> to vector<8x8xf32>
    %267 = vector.extract_strided_slice %236 {offsets = [8, 0], sizes = [8, 8], strides = [1, 1]} : vector<16x8xf32> to vector<8x8xf32>
    %cst_186 = arith.constant dense<0.000000e+00> : vector<8x8xf32>
    %268 = tpu.matmul %265, %266, %cst_186 {dimension_numbers = #tpu.dot_dimension_numbers<[1], [1], [0], [0], [0, 0, 1, 0], [], []>} : vector<8x8xf32>, vector<8x8xf32>, vector<8x8xf32> -> vector<8x8xf32>
    %c1_187 = arith.constant 1 : index
    %c0_188 = arith.constant 0 : index
    %c0_189 = arith.constant 0 : index
    %269 = vector.load %arg2[%c1_187, %c0_188, %c0_189] : memref<2x1x8xf32, #tpu.memory_space<vmem>>, vector<1x1x8xf32>
    %270 = vector.shape_cast %269 : vector<1x1x8xf32> to vector<1x8xf32>
    %271 = vector.broadcast %270 : vector<1x8xf32> to vector<8x8xf32>
    %272 = arith.addf %268, %271 : vector<8x8xf32>
    %cst_190 = arith.constant dense<0xFF800000> : vector<8xf32>
    %273 = vector.multi_reduction <maximumf>, %272, %cst_190 [1] : vector<8x8xf32> to vector<8xf32>
    %274 = vector.shape_cast %273 : vector<8xf32> to vector<8x1xf32>
    %275 = vector.broadcast %274 : vector<8x1xf32> to vector<8x8xf32>
    %276 = arith.subf %272, %275 : vector<8x8xf32>
    %277 = math.exp %276 : vector<8x8xf32>
    %cst_191 = arith.constant dense<0.000000e+00> : vector<8xf32>
    %278 = vector.multi_reduction <add>, %277, %cst_191 [1] : vector<8x8xf32> to vector<8xf32>
    %279 = vector.shape_cast %278 : vector<8xf32> to vector<8x1xf32>
    %280 = tpu.reciprocal %279 {approx = true} : vector<8x1xf32> -> vector<8x1xf32>
    %281 = vector.broadcast %280 : vector<8x1xf32> to vector<8x8xf32>
    %282 = arith.mulf %277, %281 : vector<8x8xf32>
    %cst_192 = arith.constant dense<0.000000e+00> : vector<8x8xf32>
    %283 = tpu.matmul %282, %267, %cst_192 {dimension_numbers = #tpu.dot_dimension_numbers<[1], [0], [0], [1], [0, 0, 1, 1], [], []>} : vector<8x8xf32>, vector<8x8xf32>, vector<8x8xf32> -> vector<8x8xf32>
    %284 = arith.truncf %283 : vector<8x8xf32> to vector<8x8xbf16>
    %cst_193 = arith.constant dense<0.000000e+00> : vector<8x32xf32>
    %285 = tpu.matmul %284, %238, %cst_193 {dimension_numbers = #tpu.dot_dimension_numbers<[1], [0], [0], [1], [0, 0, 1, 1], [], []>} : vector<8x8xbf16>, vector<8x32xbf16>, vector<8x32xf32> -> vector<8x32xf32>
    %286 = arith.addf %215, %285 : vector<8x32xf32>
    %287 = tpu.concatenate %262, %286 in 0 : vector<8x32xf32>, vector<8x32xf32> -> vector<16x32xf32>
    %c0_194 = arith.constant 0 : index
    %c0_195 = arith.constant 0 : index
    %c0_196 = arith.constant 0 : index
    %288 = vector.load %arg11[%c0_194, %c0_195, %c0_196] : memref<1x1x32xf32, #tpu.memory_space<vmem>>, vector<1x1x32xf32>
    %289 = vector.shape_cast %288 : vector<1x1x32xf32> to vector<1x32xf32>
    %290 = vector.broadcast %289 : vector<1x32xf32> to vector<16x32xf32>
    %291 = arith.addf %287, %290 : vector<16x32xf32>
    %292 = arith.addf %3, %291 : vector<16x32xf32>
    %c0_197 = arith.constant 0 : index
    %c0_198 = arith.constant 0 : index
    %c0_199 = arith.constant 0 : index
    %c0_200 = arith.constant 0 : index
    %293 = vector.load %arg12[%c0_197, %c0_198, %c0_199, %c0_200] : memref<1x2x1x32xf32, #tpu.memory_space<vmem>>, vector<1x1x1x32xf32>
    %294 = vector.shape_cast %293 : vector<1x1x1x32xf32> to vector<1x32xf32>
    %c0_201 = arith.constant 0 : index
    %c1_202 = arith.constant 1 : index
    %c0_203 = arith.constant 0 : index
    %c0_204 = arith.constant 0 : index
    %295 = vector.load %arg12[%c0_201, %c1_202, %c0_203, %c0_204] : memref<1x2x1x32xf32, #tpu.memory_space<vmem>>, vector<1x1x1x32xf32>
    %296 = vector.shape_cast %295 : vector<1x1x1x32xf32> to vector<1x32xf32>
    %cst_205 = arith.constant dense<0.000000e+00> : vector<16xf32>
    %297 = vector.multi_reduction <add>, %292, %cst_205 [1] : vector<16x32xf32> to vector<16xf32>
    %298 = vector.shape_cast %297 : vector<16xf32> to vector<16x1xf32>
    %cst_206 = arith.constant 3.200000e+01 : f32
    %299 = vector.broadcast %cst_206 : f32 to vector<16x1xf32>
    %300 = arith.divf %298, %299 : vector<16x1xf32>
    %301 = vector.broadcast %300 : vector<16x1xf32> to vector<16x32xf32>
    %302 = arith.subf %292, %301 : vector<16x32xf32>
    %303 = arith.mulf %302, %302 : vector<16x32xf32>
    %cst_207 = arith.constant dense<0.000000e+00> : vector<16xf32>
    %304 = vector.multi_reduction <add>, %303, %cst_207 [1] : vector<16x32xf32> to vector<16xf32>
    %305 = vector.shape_cast %304 : vector<16xf32> to vector<16x1xf32>
    %cst_208 = arith.constant 3.200000e+01 : f32
    %306 = vector.broadcast %cst_208 : f32 to vector<16x1xf32>
    %307 = arith.divf %305, %306 : vector<16x1xf32>
    %cst_209 = arith.constant 9.99999996E-13 : f32
    %308 = vector.broadcast %cst_209 : f32 to vector<16x1xf32>
    %309 = arith.addf %307, %308 : vector<16x1xf32>
    %310 = math.rsqrt %309 : vector<16x1xf32>
    %311 = vector.broadcast %300 : vector<16x1xf32> to vector<16x32xf32>
    %312 = arith.subf %292, %311 : vector<16x32xf32>
    %313 = vector.broadcast %310 : vector<16x1xf32> to vector<16x32xf32>
    %314 = arith.mulf %312, %313 : vector<16x32xf32>
    %315 = vector.broadcast %294 : vector<1x32xf32> to vector<16x32xf32>
    %316 = arith.mulf %314, %315 : vector<16x32xf32>
    %317 = vector.broadcast %296 : vector<1x32xf32> to vector<16x32xf32>
    %318 = arith.addf %316, %317 : vector<16x32xf32>
    %319 = arith.truncf %318 : vector<16x32xf32> to vector<16x32xbf16>
    %c0_210 = arith.constant 0 : index
    %c0_211 = arith.constant 0 : index
    %c0_212 = arith.constant 0 : index
    %320 = vector.load %arg13[%c0_210, %c0_211, %c0_212] : memref<1x32x64xbf16, #tpu.memory_space<vmem>>, vector<1x32x64xbf16>
    %321 = vector.shape_cast %320 : vector<1x32x64xbf16> to vector<32x64xbf16>
    %cst_213 = arith.constant dense<0.000000e+00> : vector<16x64xf32>
    %322 = tpu.matmul %319, %321, %cst_213 {dimension_numbers = #tpu.dot_dimension_numbers<[1], [0], [0], [1], [0, 0, 1, 1], [], []>} : vector<16x32xbf16>, vector<32x64xbf16>, vector<16x64xf32> -> vector<16x64xf32>
    %c0_214 = arith.constant 0 : index
    %c0_215 = arith.constant 0 : index
    %c0_216 = arith.constant 0 : index
    %323 = vector.load %arg14[%c0_214, %c0_215, %c0_216] : memref<1x1x64xf32, #tpu.memory_space<vmem>>, vector<1x1x64xf32>
    %324 = vector.shape_cast %323 : vector<1x1x64xf32> to vector<1x64xf32>
    %325 = vector.broadcast %324 : vector<1x64xf32> to vector<16x64xf32>
    %326 = arith.addf %322, %325 : vector<16x64xf32>
    %327 = arith.mulf %326, %326 : vector<16x64xf32>
    %328 = arith.mulf %326, %327 : vector<16x64xf32>
    %cst_217 = arith.constant 4.471500e-02 : f32
    %329 = vector.broadcast %cst_217 : f32 to vector<16x64xf32>
    %330 = arith.mulf %329, %328 : vector<16x64xf32>
    %331 = arith.addf %326, %330 : vector<16x64xf32>
    %cst_218 = arith.constant 0.797884583 : f32
    %332 = vector.broadcast %cst_218 : f32 to vector<16x64xf32>
    %333 = arith.mulf %332, %331 : vector<16x64xf32>
    %334 = math.tanh %333 : vector<16x64xf32>
    %cst_219 = arith.constant 1.000000e+00 : f32
    %335 = vector.broadcast %cst_219 : f32 to vector<16x64xf32>
    %336 = arith.addf %335, %334 : vector<16x64xf32>
    %cst_220 = arith.constant 5.000000e-01 : f32
    %337 = vector.broadcast %cst_220 : f32 to vector<16x64xf32>
    %338 = arith.mulf %337, %336 : vector<16x64xf32>
    %339 = arith.mulf %326, %338 : vector<16x64xf32>
    %340 = arith.truncf %339 : vector<16x64xf32> to vector<16x64xbf16>
    %c0_221 = arith.constant 0 : index
    %c0_222 = arith.constant 0 : index
    %c0_223 = arith.constant 0 : index
    %341 = vector.load %arg15[%c0_221, %c0_222, %c0_223] : memref<1x64x32xbf16, #tpu.memory_space<vmem>>, vector<1x64x32xbf16>
    %342 = vector.shape_cast %341 : vector<1x64x32xbf16> to vector<64x32xbf16>
    %cst_224 = arith.constant dense<0.000000e+00> : vector<16x32xf32>
    %343 = tpu.matmul %340, %342, %cst_224 {dimension_numbers = #tpu.dot_dimension_numbers<[1], [0], [0], [1], [0, 0, 1, 1], [], []>} : vector<16x64xbf16>, vector<64x32xbf16>, vector<16x32xf32> -> vector<16x32xf32>
    %c0_225 = arith.constant 0 : index
    %c0_226 = arith.constant 0 : index
    %c0_227 = arith.constant 0 : index
    %344 = vector.load %arg16[%c0_225, %c0_226, %c0_227] : memref<1x1x32xf32, #tpu.memory_space<vmem>>, vector<1x1x32xf32>
    %345 = vector.shape_cast %344 : vector<1x1x32xf32> to vector<1x32xf32>
    %346 = vector.broadcast %345 : vector<1x32xf32> to vector<16x32xf32>
    %347 = arith.addf %343, %346 : vector<16x32xf32>
    %348 = arith.addf %318, %347 : vector<16x32xf32>
    %c0_228 = arith.constant 0 : index
    %c0_229 = arith.constant 0 : index
    %c0_230 = arith.constant 0 : index
    %c0_231 = arith.constant 0 : index
    %349 = vector.load %arg17[%c0_228, %c0_229, %c0_230, %c0_231] : memref<1x2x1x32xf32, #tpu.memory_space<vmem>>, vector<1x1x1x32xf32>
    %350 = vector.shape_cast %349 : vector<1x1x1x32xf32> to vector<1x32xf32>
    %c0_232 = arith.constant 0 : index
    %c1_233 = arith.constant 1 : index
    %c0_234 = arith.constant 0 : index
    %c0_235 = arith.constant 0 : index
    %351 = vector.load %arg17[%c0_232, %c1_233, %c0_234, %c0_235] : memref<1x2x1x32xf32, #tpu.memory_space<vmem>>, vector<1x1x1x32xf32>
    %352 = vector.shape_cast %351 : vector<1x1x1x32xf32> to vector<1x32xf32>
    %cst_236 = arith.constant dense<0.000000e+00> : vector<16xf32>
    %353 = vector.multi_reduction <add>, %348, %cst_236 [1] : vector<16x32xf32> to vector<16xf32>
    %354 = vector.shape_cast %353 : vector<16xf32> to vector<16x1xf32>
    %cst_237 = arith.constant 3.200000e+01 : f32
    %355 = vector.broadcast %cst_237 : f32 to vector<16x1xf32>
    %356 = arith.divf %354, %355 : vector<16x1xf32>
    %357 = vector.broadcast %356 : vector<16x1xf32> to vector<16x32xf32>
    %358 = arith.subf %348, %357 : vector<16x32xf32>
    %359 = arith.mulf %358, %358 : vector<16x32xf32>
    %cst_238 = arith.constant dense<0.000000e+00> : vector<16xf32>
    %360 = vector.multi_reduction <add>, %359, %cst_238 [1] : vector<16x32xf32> to vector<16xf32>
    %361 = vector.shape_cast %360 : vector<16xf32> to vector<16x1xf32>
    %cst_239 = arith.constant 3.200000e+01 : f32
    %362 = vector.broadcast %cst_239 : f32 to vector<16x1xf32>
    %363 = arith.divf %361, %362 : vector<16x1xf32>
    %cst_240 = arith.constant 9.99999996E-13 : f32
    %364 = vector.broadcast %cst_240 : f32 to vector<16x1xf32>
    %365 = arith.addf %363, %364 : vector<16x1xf32>
    %366 = math.rsqrt %365 : vector<16x1xf32>
    %367 = vector.broadcast %356 : vector<16x1xf32> to vector<16x32xf32>
    %368 = arith.subf %348, %367 : vector<16x32xf32>
    %369 = vector.broadcast %366 : vector<16x1xf32> to vector<16x32xf32>
    %370 = arith.mulf %368, %369 : vector<16x32xf32>
    %371 = vector.broadcast %350 : vector<1x32xf32> to vector<16x32xf32>
    %372 = arith.mulf %370, %371 : vector<16x32xf32>
    %373 = vector.broadcast %352 : vector<1x32xf32> to vector<16x32xf32>
    %374 = arith.addf %372, %373 : vector<16x32xf32>
    %c0_241 = arith.constant 0 : index
    %c0_242 = arith.constant 0 : index
    %375 = vector.load %arg23[%c0_241, %c0_242] : memref<16x32xf32, #tpu.memory_space<vmem>>, vector<16x32xf32>
    tpu.vector_store %arg23[%c0_241, %c0_242], %374 {strides = array<i32>} : memref<16x32xf32, #tpu.memory_space<vmem>>, vector<16x32xf32>,
    %c1_i32 = arith.constant 1 : i32
    %376 = arith.cmpi eq, %arg0, %c1_i32 : i32
    %377 = arith.extui %376 : i1 to i32
    %c0_i32_243 = arith.constant 0 : i32
    %378 = arith.cmpi ne, %377, %c0_i32_243 : i32
    scf.if %378 {
      %379 = arith.truncf %374 : vector<16x32xf32> to vector<16x32xbf16>
      %c0_244 = arith.constant 0 : index
      %c0_245 = arith.constant 0 : index
      %380 = vector.load %arg18[%c0_244, %c0_245] : memref<32x32xbf16, #tpu.memory_space<vmem>>, vector<32x32xbf16>
      %cst_246 = arith.constant dense<0.000000e+00> : vector<16x32xf32>
      %381 = tpu.matmul %379, %380, %cst_246 {dimension_numbers = #tpu.dot_dimension_numbers<[1], [0], [0], [1], [0, 0, 1, 1], [], []>} : vector<16x32xbf16>, vector<32x32xbf16>, vector<16x32xf32> -> vector<16x32xf32>
      %c0_247 = arith.constant 0 : index
      %c0_248 = arith.constant 0 : index
      %382 = vector.load %arg19[%c0_247, %c0_248] : memref<1x32xf32, #tpu.memory_space<vmem>>, vector<1x32xf32>
      %383 = vector.broadcast %382 : vector<1x32xf32> to vector<16x32xf32>
      %384 = arith.addf %381, %383 : vector<16x32xf32>
      %385 = math.tanh %384 : vector<16x32xf32>
      %386 = arith.truncf %385 : vector<16x32xf32> to vector<16x32xbf16>
      %c0_249 = arith.constant 0 : index
      %c0_250 = arith.constant 0 : index
      %387 = vector.load %arg20[%c0_249, %c0_250] : memref<32x128xbf16, #tpu.memory_space<vmem>>, vector<32x128xbf16>
      %cst_251 = arith.constant dense<0.000000e+00> : vector<16x128xf32>
      %388 = tpu.matmul %386, %387, %cst_251 {dimension_numbers = #tpu.dot_dimension_numbers<[1], [0], [0], [1], [0, 0, 1, 1], [], []>} : vector<16x32xbf16>, vector<32x128xbf16>, vector<16x128xf32> -> vector<16x128xf32>
      %c0_252 = arith.constant 0 : index
      %c0_253 = arith.constant 0 : index
      %389 = vector.load %arg21[%c0_252, %c0_253] : memref<1x128xf32, #tpu.memory_space<vmem>>, vector<1x128xf32>
      %390 = vector.broadcast %389 : vector<1x128xf32> to vector<16x128xf32>
      %391 = arith.addf %388, %390 : vector<16x128xf32>
      %392 = arith.negf %391 : vector<16x128xf32>
      %393 = math.exp %392 : vector<16x128xf32>
      %cst_254 = arith.constant 1.000000e+00 : f32
      %394 = vector.broadcast %cst_254 : f32 to vector<16x128xf32>
      %395 = arith.addf %394, %393 : vector<16x128xf32>
      %396 = arith.divf %394, %395 : vector<16x128xf32>
      %c0_255 = arith.constant 0 : index
      %c0_256 = arith.constant 0 : index
      %397 = vector.load %arg22[%c0_255, %c0_256] : memref<16x128xf32, #tpu.memory_space<vmem>>, vector<16x128xf32>
      tpu.vector_store %arg22[%c0_255, %c0_256], %396 {strides = array<i32>} : memref<16x128xf32, #tpu.memory_space<vmem>>, vector<16x128xf32>,
    } else {
    }
    return
  }
  func.func @transform_0(%arg0: i32) -> (i32, i32) {
    %c0_i32 = arith.constant 0 : i32
    %c0_i32_0 = arith.constant 0 : i32
    %c0_i32_1 = arith.constant 0 : i32
    return %c0_i32, %c0_i32_0 : i32, i32
  }
  func.func @transform_1(%arg0: i32) -> (i32, i32, i32) {
    %c0_i32 = arith.constant 0 : i32
    %c0_i32_0 = arith.constant 0 : i32
    %c0_i32_1 = arith.constant 0 : i32
    %c0_i32_2 = arith.constant 0 : i32
    return %c0_i32, %c0_i32_0, %c0_i32_1 : i32, i32, i32
  }
  func.func @transform_2(%arg0: i32) -> (i32, i32, i32) {
    %c0_i32 = arith.constant 0 : i32
    %c0_i32_0 = arith.constant 0 : i32
    %c0_i32_1 = arith.constant 0 : i32
    %c0_i32_2 = arith.constant 0 : i32
    return %c0_i32, %c0_i32_0, %c0_i32_1 : i32, i32, i32
  }
  func.func @transform_3(%arg0: i32) -> (i32, i32, i32, i32) {
    %c0_i32 = arith.constant 0 : i32
    %c0_i32_0 = arith.constant 0 : i32
    %c0_i32_1 = arith.constant 0 : i32
    %c0_i32_2 = arith.constant 0 : i32
    return %arg0, %c0_i32, %c0_i32_0, %c0_i32_1 : i32, i32, i32, i32
  }
  func.func @transform_4(%arg0: i32) -> (i32, i32, i32, i32) {
    %c0_i32 = arith.constant 0 : i32
    %c0_i32_0 = arith.constant 0 : i32
    %c0_i32_1 = arith.constant 0 : i32
    %c0_i32_2 = arith.constant 0 : i32
    return %arg0, %c0_i32, %c0_i32_0, %c0_i32_1 : i32, i32, i32, i32
  }
  func.func @transform_5(%arg0: i32) -> (i32, i32, i32, i32) {
    %c0_i32 = arith.constant 0 : i32
    %c0_i32_0 = arith.constant 0 : i32
    %c0_i32_1 = arith.constant 0 : i32
    %c0_i32_2 = arith.constant 0 : i32
    return %arg0, %c0_i32, %c0_i32_0, %c0_i32_1 : i32, i32, i32, i32
  }
  func.func @transform_6(%arg0: i32) -> (i32, i32, i32, i32) {
    %c0_i32 = arith.constant 0 : i32
    %c0_i32_0 = arith.constant 0 : i32
    %c0_i32_1 = arith.constant 0 : i32
    %c0_i32_2 = arith.constant 0 : i32
    return %arg0, %c0_i32, %c0_i32_0, %c0_i32_1 : i32, i32, i32, i32
  }
  func.func @transform_7(%arg0: i32) -> (i32, i32, i32, i32) {
    %c0_i32 = arith.constant 0 : i32
    %c0_i32_0 = arith.constant 0 : i32
    %c0_i32_1 = arith.constant 0 : i32
    %c0_i32_2 = arith.constant 0 : i32
    return %arg0, %c0_i32, %c0_i32_0, %c0_i32_1 : i32, i32, i32, i32
  }
  func.func @transform_8(%arg0: i32) -> (i32, i32, i32, i32) {
    %c0_i32 = arith.constant 0 : i32
    %c0_i32_0 = arith.constant 0 : i32
    %c0_i32_1 = arith.constant 0 : i32
    %c0_i32_2 = arith.constant 0 : i32
    return %arg0, %c0_i32, %c0_i32_0, %c0_i32_1 : i32, i32, i32, i32
  }
  func.func @transform_9(%arg0: i32) -> (i32, i32, i32, i32) {
    %c0_i32 = arith.constant 0 : i32
    %c0_i32_0 = arith.constant 0 : i32
    %c0_i32_1 = arith.constant 0 : i32
    %c0_i32_2 = arith.constant 0 : i32
    return %arg0, %c0_i32, %c0_i32_0, %c0_i32_1 : i32, i32, i32, i32
  }
  func.func @transform_10(%arg0: i32) -> (i32, i32, i32) {
    %c0_i32 = arith.constant 0 : i32
    %c0_i32_0 = arith.constant 0 : i32
    %c0_i32_1 = arith.constant 0 : i32
    return %arg0, %c0_i32, %c0_i32_0 : i32, i32, i32
  }
  func.func @transform_11(%arg0: i32) -> (i32, i32, i32, i32) {
    %c0_i32 = arith.constant 0 : i32
    %c0_i32_0 = arith.constant 0 : i32
    %c0_i32_1 = arith.constant 0 : i32
    %c0_i32_2 = arith.constant 0 : i32
    return %arg0, %c0_i32, %c0_i32_0, %c0_i32_1 : i32, i32, i32, i32
  }
  func.func @transform_12(%arg0: i32) -> (i32, i32, i32) {
    %c0_i32 = arith.constant 0 : i32
    %c0_i32_0 = arith.constant 0 : i32
    %c0_i32_1 = arith.constant 0 : i32
    return %arg0, %c0_i32, %c0_i32_0 : i32, i32, i32
  }
  func.func @transform_13(%arg0: i32) -> (i32, i32, i32) {
    %c0_i32 = arith.constant 0 : i32
    %c0_i32_0 = arith.constant 0 : i32
    %c0_i32_1 = arith.constant 0 : i32
    return %arg0, %c0_i32, %c0_i32_0 : i32, i32, i32
  }
  func.func @transform_14(%arg0: i32) -> (i32, i32, i32) {
    %c0_i32 = arith.constant 0 : i32
    %c0_i32_0 = arith.constant 0 : i32
    %c0_i32_1 = arith.constant 0 : i32
    return %arg0, %c0_i32, %c0_i32_0 : i32, i32, i32
  }
  func.func @transform_15(%arg0: i32) -> (i32, i32, i32) {
    %c0_i32 = arith.constant 0 : i32
    %c0_i32_0 = arith.constant 0 : i32
    %c0_i32_1 = arith.constant 0 : i32
    return %arg0, %c0_i32, %c0_i32_0 : i32, i32, i32
  }
  func.func @transform_16(%arg0: i32) -> (i32, i32, i32, i32) {
    %c0_i32 = arith.constant 0 : i32
    %c0_i32_0 = arith.constant 0 : i32
    %c0_i32_1 = arith.constant 0 : i32
    %c0_i32_2 = arith.constant 0 : i32
    return %arg0, %c0_i32, %c0_i32_0, %c0_i32_1 : i32, i32, i32, i32
  }
  func.func @transform_17(%arg0: i32) -> (i32, i32) {
    %c0_i32 = arith.constant 0 : i32
    %c0_i32_0 = arith.constant 0 : i32
    %c0_i32_1 = arith.constant 0 : i32
    return %c0_i32, %c0_i32_0 : i32, i32
  }
  func.func @transform_18(%arg0: i32) -> (i32, i32) {
    %c0_i32 = arith.constant 0 : i32
    %c0_i32_0 = arith.constant 0 : i32
    %c0_i32_1 = arith.constant 0 : i32
    return %c0_i32, %c0_i32_0 : i32, i32
  }
  func.func @transform_19(%arg0: i32) -> (i32, i32) {
    %c0_i32 = arith.constant 0 : i32
    %c0_i32_0 = arith.constant 0 : i32
    %c0_i32_1 = arith.constant 0 : i32
    return %c0_i32, %c0_i32_0 : i32, i32
  }
  func.func @transform_20(%arg0: i32) -> (i32, i32) {
    %c0_i32 = arith.constant 0 : i32
    %c0_i32_0 = arith.constant 0 : i32
    %c0_i32_1 = arith.constant 0 : i32
    return %c0_i32, %c0_i32_0 : i32, i32
  }
  func.func @transform_21(%arg0: i32) -> (i32, i32) {
    %c0_i32 = arith.constant 0 : i32
    %c0_i32_0 = arith.constant 0 : i32
    %c0_i32_1 = arith.constant 0 : i32
    return %c0_i32, %c0_i32_0 : i32, i32
  }
}

</mosaic_0001>

<llo_original>
// kernel: tpu_custom_call.1
$region0: #{tpu_custom_call.1}
  #allocation0 [shape = 'u32[]', space=smem, size = 0x4, offset = 0x4, fixed_abs, tag = 'smem constant byte address 0x4 - core index']
  #allocation1 [shape = 'u32[144,128]{1,0:T(1,128)}', space=vmem, size = 0x12000, scoped, tag = 'internal scratch']
  #allocation2 [shape = 'f32[16,32]{1,0:T(8,128)}', space=vmem, size = 0x2000, scoped, tag = 'scratch operand']
  %s0 = inlined_call_operand.vmem [shape: f32[16,32], index: 0, kind: input, shape index: {}]
  %s1 = inlined_call_operand.vmem [shape: f32[2,1,8], index: 1, kind: input, shape index: {}]
  %s2 = inlined_call_operand.vmem [shape: f32[2,1,32], index: 2, kind: input, shape index: {}]
  %s3 = inlined_call_operand.vmem [shape: bf16[2,4,32,8], index: 3, kind: input, shape index: {}]
  %s4 = inlined_call_operand.vmem [shape: bf16[2,4,32,8], index: 4, kind: input, shape index: {}]
  %s5 = inlined_call_operand.vmem [shape: bf16[2,4,32,8], index: 5, kind: input, shape index: {}]
  %s6 = inlined_call_operand.vmem [shape: f32[2,4,1,8], index: 6, kind: input, shape index: {}]
  %s7 = inlined_call_operand.vmem [shape: f32[2,4,1,8], index: 7, kind: input, shape index: {}]
  %s8 = inlined_call_operand.vmem [shape: f32[2,4,1,8], index: 8, kind: input, shape index: {}]
  %s9 = inlined_call_operand.vmem [shape: bf16[2,4,8,32], index: 9, kind: input, shape index: {}]
  %s10 = inlined_call_operand.vmem [shape: f32[2,1,32], index: 10, kind: input, shape index: {}]
  %s11 = inlined_call_operand.vmem [shape: f32[2,2,1,32], index: 11, kind: input, shape index: {}]
  %s12 = inlined_call_operand.vmem [shape: bf16[2,32,64], index: 12, kind: input, shape index: {}]
  %s13 = inlined_call_operand.vmem [shape: f32[2,1,64], index: 13, kind: input, shape index: {}]
  %s14 = inlined_call_operand.vmem [shape: bf16[2,64,32], index: 14, kind: input, shape index: {}]
  %s15 = inlined_call_operand.vmem [shape: f32[2,1,32], index: 15, kind: input, shape index: {}]
  %s16 = inlined_call_operand.vmem [shape: f32[2,2,1,32], index: 16, kind: input, shape index: {}]
  %s17 = inlined_call_operand.vmem [shape: bf16[32,32], index: 17, kind: input, shape index: {}]
  %s18 = inlined_call_operand.vmem [shape: f32[1,32], index: 18, kind: input, shape index: {}]
  %s19 = inlined_call_operand.vmem [shape: bf16[32,128], index: 19, kind: input, shape index: {}]
  %s20 = inlined_call_operand.vmem [shape: f32[1,128], index: 20, kind: input, shape index: {}]
  %s21 = inlined_call_operand.hbm [shape: f32[16,128], index: 21, kind: output, shape index: {}]
  %s22 = sld [smem:[#allocation0]]
  $region125: #{tpu_custom_call.1} parent=0
    _
  %s24 = ssub.s32 1, %s22
  %s25 = scalar_select 0, %s24, %s22
  $region1: #{tpu_custom_call.1} parent=0
    #allocation3 [shape = 'u8[8192]{0}', space=vmem, size = 0x2000, scoped, tag = 'output window, operand 0, single buffered']
    #allocation4 [shape = 's32[2]{0}', space=sflag, size = 0x8, scoped, tag = 'scoped memory for tpu_custom_call.1']
    %26 = vsyncpa [#allocation4], 0
    loop: start=0, step=1, limit=4
    $region2: #{tpu_custom_call.1} parent=1 // loop_pre_header
      _
    $region3: #{tpu_custom_call.1} parent=1 // loop_header
      %s28 = sphi 0, %s32
      %p29 = scmp.ge.s32.totalorder %s28, 4
      %s36 = sphi 0, %s36
      %s38 = sphi 0, %s36
      %s39 = sphi 0, %s38
      %s53 = sphi 0, %s39
      %s57 = sphi 0, %s57
      %s59 = sphi 0, %s57
      %s60 = sphi 0, %s59
      %s74 = sphi 0, %s60
      %s78 = sphi 0, %s78
      %s80 = sphi 0, %s78
      %s81 = sphi 0, %s80
      %s95 = sphi 0, %s81
      %s101 = sphi 0, %s103
      %s104 = sphi 0, %s101
      %s105 = sphi 0, %s104
      %s121 = sphi 0, %s105
      %s127 = sphi 0, %s129
      %s130 = sphi 0, %s127
      %s131 = sphi 0, %s130
      %s147 = sphi 0, %s131
      %s153 = sphi 0, %s155
      %s156 = sphi 0, %s153
      %s157 = sphi 0, %s156
      %s173 = sphi 0, %s157
      %s179 = sphi 0, %s181
      %s182 = sphi 0, %s179
      %s183 = sphi 0, %s182
      %s199 = sphi 0, %s183
      %s205 = sphi 0, %s207
      %s208 = sphi 0, %s205
      %s209 = sphi 0, %s208
      %s225 = sphi 0, %s209
      %s231 = sphi 0, %s233
      %s234 = sphi 0, %s231
      %s235 = sphi 0, %s234
      %s251 = sphi 0, %s235
      %s257 = sphi 0, %s259
      %s260 = sphi 0, %s257
      %s261 = sphi 0, %s260
      %s277 = sphi 0, %s261
      %s283 = sphi 0, %s285
      %s286 = sphi 0, %s283
      %s287 = sphi 0, %s286
      %s303 = sphi 0, %s287
      %s309 = sphi 0, %s311
      %s312 = sphi 0, %s309
      %s313 = sphi 0, %s312
      %s329 = sphi 0, %s313
      %s335 = sphi 0, %s337
      %s338 = sphi 0, %s335
      %s339 = sphi 0, %s338
      %s355 = sphi 0, %s339
      %s361 = sphi 0, %s363
      %s364 = sphi 0, %s361
      %s365 = sphi 0, %s364
      %s381 = sphi 0, %s365
      %s387 = sphi 0, %s389
      %s390 = sphi 0, %s387
      %s391 = sphi 0, %s390
      %s407 = sphi 0, %s391
      %s413 = sphi 0, %s415
      %s416 = sphi 0, %s413
      %s417 = sphi 0, %s416
      %s433 = sphi 0, %s417
      %s439 = sphi 0, %s441
      %s442 = sphi 0, %s439
      %s443 = sphi 0, %s442
      %s459 = sphi 0, %s443
      %s463 = sphi 0, %s463
      %s465 = sphi 0, %s463
      %s466 = sphi 0, %s465
      %s480 = sphi 0, %s466
      %s484 = sphi 0, %s484
      %s486 = sphi 0, %s484
      %s487 = sphi 0, %s486
      %s501 = sphi 0, %s487
      %s505 = sphi 0, %s505
      %s507 = sphi 0, %s505
      %s508 = sphi 0, %s507
      %s522 = sphi 0, %s508
      %s526 = sphi 0, %s526
      %s528 = sphi 0, %s526
      %s529 = sphi 0, %s528
      %s543 = sphi 0, %s529
      %s547 = sphi 0, %s547
      %s549 = sphi 0, %s547
      %s550 = sphi 0, %s549
      %s564 = sphi 0, %s550
    $region4: #{tpu_custom_call.1} parent=1 // loop_header_branch
      %31 = sbr.rel (%p29) target = $region8
    $region5: #{tpu_custom_call.1} parent=1 // loop_body
      %s33 = ssub.s32 %s28, 1
      %s34 = ssub.s32 %s28, 2
      %s35 = sadd.s32 %s28, 1
      %s37 = sadd.s32 %s36, 1
      %p40 = scmp.eq.s32.totalorder %s28, 1
      %p41 = scmp.ne.s32.totalorder %s36, %s38
      %p42 = scmp.eq.s32.totalorder %s28, 0
      %p43 = por %p41, %p42
      %p44 = scmp.ne.s32.totalorder %s36, %s38
      %p45 = scmp.eq.s32.totalorder %s33, 1
      %p46 = por %p44, %p45
      %p47 = scmp.ne.s32.totalorder %s38, %s39
      %p48 = scmp.eq.s32.totalorder %s33, 0
      %p49 = por %p47, %p48
      %p50 = scmp.ne.s32.totalorder %s38, %s39
      %p51 = scmp.eq.s32.totalorder %s34, 1
      %p52 = por %p50, %p51
      %p54 = scmp.ne.s32.totalorder %s39, %s53
      %p55 = scmp.eq.s32.totalorder %s34, 0
      %p56 = por %p54, %p55
      %s58 = sadd.s32 %s57, 1
      %p61 = scmp.eq.s32.totalorder %s28, 1
      %p62 = scmp.ne.s32.totalorder %s57, %s59
      %p63 = scmp.eq.s32.totalorder %s28, 0
      %p64 = por %p62, %p63
      %p65 = scmp.ne.s32.totalorder %s57, %s59
      %p66 = scmp.eq.s32.totalorder %s33, 1
      %p67 = por %p65, %p66
      %p68 = scmp.ne.s32.totalorder %s59, %s60
      %p69 = scmp.eq.s32.totalorder %s33, 0
      %p70 = por %p68, %p69
      %p71 = scmp.ne.s32.totalorder %s59, %s60
      %p72 = scmp.eq.s32.totalorder %s34, 1
      %p73 = por %p71, %p72
      %p75 = scmp.ne.s32.totalorder %s60, %s74
      %p76 = scmp.eq.s32.totalorder %s34, 0
      %p77 = por %p75, %p76
      %s79 = sadd.s32 %s78, 1
      %p82 = scmp.eq.s32.totalorder %s28, 1
      %p83 = scmp.ne.s32.totalorder %s78, %s80
      %p84 = scmp.eq.s32.totalorder %s28, 0
      %p85 = por %p83, %p84
      %p86 = scmp.ne.s32.totalorder %s78, %s80
      %p87 = scmp.eq.s32.totalorder %s33, 1
      %p88 = por %p86, %p87
      %p89 = scmp.ne.s32.totalorder %s80, %s81
      %p90 = scmp.eq.s32.totalorder %s33, 0
      %p91 = por %p89, %p90
      %p92 = scmp.ne.s32.totalorder %s80, %s81
      %p93 = scmp.eq.s32.totalorder %s34, 1
      %p94 = por %p92, %p93
      %p96 = scmp.ne.s32.totalorder %s81, %s95
      %p97 = scmp.eq.s32.totalorder %s34, 0
      %p98 = por %p96, %p97
      %s99 = ssub.s32 %s28, %s35
      %p100 = scmp.eq.s32.totalorder %s99, 0
      %s102 = sadd.s32 %s101, 1
      %s103 = scalar_select %p100, %s101, %s102
      %p106 = pneg %p100
      %p107 = scmp.eq.s32.totalorder %s28, 1
      %p108 = por %p106, %p107
      %p109 = scmp.ne.s32.totalorder %s101, %s104
      %p110 = scmp.eq.s32.totalorder %s28, 0
      %p111 = por %p109, %p110
      %p112 = scmp.ne.s32.totalorder %s101, %s104
      %p113 = scmp.eq.s32.totalorder %s33, 1
      %p114 = por %p112, %p113
      %p115 = scmp.ne.s32.totalorder %s104, %s105
      %p116 = scmp.eq.s32.totalorder %s33, 0
      %p117 = por %p115, %p116
      %p118 = scmp.ne.s32.totalorder %s104, %s105
      %p119 = scmp.eq.s32.totalorder %s34, 1
      %p120 = por %p118, %p119
      %p122 = scmp.ne.s32.totalorder %s105, %s121
      %p123 = scmp.eq.s32.totalorder %s34, 0
      %p124 = por %p122, %p123
      %s125 = ssub.s32 %s28, %s35
      %p126 = scmp.eq.s32.totalorder %s125, 0
      %s128 = sadd.s32 %s127, 1
      %s129 = scalar_select %p126, %s127, %s128
      %p132 = pneg %p126
      %p133 = scmp.eq.s32.totalorder %s28, 1
      %p134 = por %p132, %p133
      %p135 = scmp.ne.s32.totalorder %s127, %s130
      %p136 = scmp.eq.s32.totalorder %s28, 0
      %p137 = por %p135, %p136
      %p138 = scmp.ne.s32.totalorder %s127, %s130
      %p139 = scmp.eq.s32.totalorder %s33, 1
      %p140 = por %p138, %p139
      %p141 = scmp.ne.s32.totalorder %s130, %s131
      %p142 = scmp.eq.s32.totalorder %s33, 0
      %p143 = por %p141, %p142
      %p144 = scmp.ne.s32.totalorder %s130, %s131
      %p145 = scmp.eq.s32.totalorder %s34, 1
      %p146 = por %p144, %p145
      %p148 = scmp.ne.s32.totalorder %s131, %s147
      %p149 = scmp.eq.s32.totalorder %s34, 0
      %p150 = por %p148, %p149
      %s151 = ssub.s32 %s28, %s35
      %p152 = scmp.eq.s32.totalorder %s151, 0
      %s154 = sadd.s32 %s153, 1
      %s155 = scalar_select %p152, %s153, %s154
      %p158 = pneg %p152
      %p159 = scmp.eq.s32.totalorder %s28, 1
      %p160 = por %p158, %p159
      %p161 = scmp.ne.s32.totalorder %s153, %s156
      %p162 = scmp.eq.s32.totalorder %s28, 0
      %p163 = por %p161, %p162
      %p164 = scmp.ne.s32.totalorder %s153, %s156
      %p165 = scmp.eq.s32.totalorder %s33, 1
      %p166 = por %p164, %p165
      %p167 = scmp.ne.s32.totalorder %s156, %s157
      %p168 = scmp.eq.s32.totalorder %s33, 0
      %p169 = por %p167, %p168
      %p170 = scmp.ne.s32.totalorder %s156, %s157
      %p171 = scmp.eq.s32.totalorder %s34, 1
      %p172 = por %p170, %p171
      %p174 = scmp.ne.s32.totalorder %s157, %s173
      %p175 = scmp.eq.s32.totalorder %s34, 0
      %p176 = por %p174, %p175
      %s177 = ssub.s32 %s28, %s35
      %p178 = scmp.eq.s32.totalorder %s177, 0
      %s180 = sadd.s32 %s179, 1
      %s181 = scalar_select %p178, %s179, %s180
      %p184 = pneg %p178
      %p185 = scmp.eq.s32.totalorder %s28, 1
      %p186 = por %p184, %p185
      %p187 = scmp.ne.s32.totalorder %s179, %s182
      %p188 = scmp.eq.s32.totalorder %s28, 0
      %p189 = por %p187, %p188
      %p190 = scmp.ne.s32.totalorder %s179, %s182
      %p191 = scmp.eq.s32.totalorder %s33, 1
      %p192 = por %p190, %p191
      %p193 = scmp.ne.s32.totalorder %s182, %s183
      %p194 = scmp.eq.s32.totalorder %s33, 0
      %p195 = por %p193, %p194
      %p196 = scmp.ne.s32.totalorder %s182, %s183
      %p197 = scmp.eq.s32.totalorder %s34, 1
      %p198 = por %p196, %p197
      %p200 = scmp.ne.s32.totalorder %s183, %s199
      %p201 = scmp.eq.s32.totalorder %s34, 0
      %p202 = por %p200, %p201
      %s203 = ssub.s32 %s28, %s35
      %p204 = scmp.eq.s32.totalorder %s203, 0
      %s206 = sadd.s32 %s205, 1
      %s207 = scalar_select %p204, %s205, %s206
      %p210 = pneg %p204
      %p211 = scmp.eq.s32.totalorder %s28, 1
      %p212 = por %p210, %p211
      %p213 = scmp.ne.s32.totalorder %s205, %s208
      %p214 = scmp.eq.s32.totalorder %s28, 0
      %p215 = por %p213, %p214
      %p216 = scmp.ne.s32.totalorder %s205, %s208
      %p217 = scmp.eq.s32.totalorder %s33, 1
      %p218 = por %p216, %p217
      %p219 = scmp.ne.s32.totalorder %s208, %s209
      %p220 = scmp.eq.s32.totalorder %s33, 0
      %p221 = por %p219, %p220
      %p222 = scmp.ne.s32.totalorder %s208, %s209
      %p223 = scmp.eq.s32.totalorder %s34, 1
      %p224 = por %p222, %p223
      %p226 = scmp.ne.s32.totalorder %s209, %s225
      %p227 = scmp.eq.s32.totalorder %s34, 0
      %p228 = por %p226, %p227
      %s229 = ssub.s32 %s28, %s35
      %p230 = scmp.eq.s32.totalorder %s229, 0
      %s232 = sadd.s32 %s231, 1
      %s233 = scalar_select %p230, %s231, %s232
      %p236 = pneg %p230
      %p237 = scmp.eq.s32.totalorder %s28, 1
      %p238 = por %p236, %p237
      %p239 = scmp.ne.s32.totalorder %s231, %s234
      %p240 = scmp.eq.s32.totalorder %s28, 0
      %p241 = por %p239, %p240
      %p242 = scmp.ne.s32.totalorder %s231, %s234
      %p243 = scmp.eq.s32.totalorder %s33, 1
      %p244 = por %p242, %p243
      %p245 = scmp.ne.s32.totalorder %s234, %s235
      %p246 = scmp.eq.s32.totalorder %s33, 0
      %p247 = por %p245, %p246
      %p248 = scmp.ne.s32.totalorder %s234, %s235
      %p249 = scmp.eq.s32.totalorder %s34, 1
      %p250 = por %p248, %p249
      %p252 = scmp.ne.s32.totalorder %s235, %s251
      %p253 = scmp.eq.s32.totalorder %s34, 0
      %p254 = por %p252, %p253
      %s255 = ssub.s32 %s28, %s35
      %p256 = scmp.eq.s32.totalorder %s255, 0
      %s258 = sadd.s32 %s257, 1
      %s259 = scalar_select %p256, %s257, %s258
      %p262 = pneg %p256
      %p263 = scmp.eq.s32.totalorder %s28, 1
      %p264 = por %p262, %p263
      %p265 = scmp.ne.s32.totalorder %s257, %s260
      %p266 = scmp.eq.s32.totalorder %s28, 0
      %p267 = por %p265, %p266
      %p268 = scmp.ne.s32.totalorder %s257, %s260
      %p269 = scmp.eq.s32.totalorder %s33, 1
      %p270 = por %p268, %p269
      %p271 = scmp.ne.s32.totalorder %s260, %s261
      %p272 = scmp.eq.s32.totalorder %s33, 0
      %p273 = por %p271, %p272
      %p274 = scmp.ne.s32.totalorder %s260, %s261
      %p275 = scmp.eq.s32.totalorder %s34, 1
      %p276 = por %p274, %p275
      %p278 = scmp.ne.s32.totalorder %s261, %s277
      %p279 = scmp.eq.s32.totalorder %s34, 0
      %p280 = por %p278, %p279
      %s281 = ssub.s32 %s28, %s35
      %p282 = scmp.eq.s32.totalorder %s281, 0
      %s284 = sadd.s32 %s283, 1
      %s285 = scalar_select %p282, %s283, %s284
      %p288 = pneg %p282
      %p289 = scmp.eq.s32.totalorder %s28, 1
      %p290 = por %p288, %p289
      %p291 = scmp.ne.s32.totalorder %s283, %s286
      %p292 = scmp.eq.s32.totalorder %s28, 0
      %p293 = por %p291, %p292
      %p294 = scmp.ne.s32.totalorder %s283, %s286
      %p295 = scmp.eq.s32.totalorder %s33, 1
      %p296 = por %p294, %p295
      %p297 = scmp.ne.s32.totalorder %s286, %s287
      %p298 = scmp.eq.s32.totalorder %s33, 0
      %p299 = por %p297, %p298
      %p300 = scmp.ne.s32.totalorder %s286, %s287
      %p301 = scmp.eq.s32.totalorder %s34, 1
      %p302 = por %p300, %p301
      %p304 = scmp.ne.s32.totalorder %s287, %s303
      %p305 = scmp.eq.s32.totalorder %s34, 0
      %p306 = por %p304, %p305
      %s307 = ssub.s32 %s28, %s35
      %p308 = scmp.eq.s32.totalorder %s307, 0
      %s310 = sadd.s32 %s309, 1
      %s311 = scalar_select %p308, %s309, %s310
      %p314 = pneg %p308
      %p315 = scmp.eq.s32.totalorder %s28, 1
      %p316 = por %p314, %p315
      %p317 = scmp.ne.s32.totalorder %s309, %s312
      %p318 = scmp.eq.s32.totalorder %s28, 0
      %p319 = por %p317, %p318
      %p320 = scmp.ne.s32.totalorder %s309, %s312
      %p321 = scmp.eq.s32.totalorder %s33, 1
      %p322 = por %p320, %p321
      %p323 = scmp.ne.s32.totalorder %s312, %s313
      %p324 = scmp.eq.s32.totalorder %s33, 0
      %p325 = por %p323, %p324
      %p326 = scmp.ne.s32.totalorder %s312, %s313
      %p327 = scmp.eq.s32.totalorder %s34, 1
      %p328 = por %p326, %p327
      %p330 = scmp.ne.s32.totalorder %s313, %s329
      %p331 = scmp.eq.s32.totalorder %s34, 0
      %p332 = por %p330, %p331
      %s333 = ssub.s32 %s28, %s35
      %p334 = scmp.eq.s32.totalorder %s333, 0
      %s336 = sadd.s32 %s335, 1
      %s337 = scalar_select %p334, %s335, %s336
      %p340 = pneg %p334
      %p341 = scmp.eq.s32.totalorder %s28, 1
      %p342 = por %p340, %p341
      %p343 = scmp.ne.s32.totalorder %s335, %s338
      %p344 = scmp.eq.s32.totalorder %s28, 0
      %p345 = por %p343, %p344
      %p346 = scmp.ne.s32.totalorder %s335, %s338
      %p347 = scmp.eq.s32.totalorder %s33, 1
      %p348 = por %p346, %p347
      %p349 = scmp.ne.s32.totalorder %s338, %s339
      %p350 = scmp.eq.s32.totalorder %s33, 0
      %p351 = por %p349, %p350
      %p352 = scmp.ne.s32.totalorder %s338, %s339
      %p353 = scmp.eq.s32.totalorder %s34, 1
      %p354 = por %p352, %p353
      %p356 = scmp.ne.s32.totalorder %s339, %s355
      %p357 = scmp.eq.s32.totalorder %s34, 0
      %p358 = por %p356, %p357
      %s359 = ssub.s32 %s28, %s35
      %p360 = scmp.eq.s32.totalorder %s359, 0
      %s362 = sadd.s32 %s361, 1
      %s363 = scalar_select %p360, %s361, %s362
      %p366 = pneg %p360
      %p367 = scmp.eq.s32.totalorder %s28, 1
      %p368 = por %p366, %p367
      %p369 = scmp.ne.s32.totalorder %s361, %s364
      %p370 = scmp.eq.s32.totalorder %s28, 0
      %p371 = por %p369, %p370
      %p372 = scmp.ne.s32.totalorder %s361, %s364
      %p373 = scmp.eq.s32.totalorder %s33, 1
      %p374 = por %p372, %p373
      %p375 = scmp.ne.s32.totalorder %s364, %s365
      %p376 = scmp.eq.s32.totalorder %s33, 0
      %p377 = por %p375, %p376
      %p378 = scmp.ne.s32.totalorder %s364, %s365
      %p379 = scmp.eq.s32.totalorder %s34, 1
      %p380 = por %p378, %p379
      %p382 = scmp.ne.s32.totalorder %s365, %s381
      %p383 = scmp.eq.s32.totalorder %s34, 0
      %p384 = por %p382, %p383
      %s385 = ssub.s32 %s28, %s35
      %p386 = scmp.eq.s32.totalorder %s385, 0
      %s388 = sadd.s32 %s387, 1
      %s389 = scalar_select %p386, %s387, %s388
      %p392 = pneg %p386
      %p393 = scmp.eq.s32.totalorder %s28, 1
      %p394 = por %p392, %p393
      %p395 = scmp.ne.s32.totalorder %s387, %s390
      %p396 = scmp.eq.s32.totalorder %s28, 0
      %p397 = por %p395, %p396
      %p398 = scmp.ne.s32.totalorder %s387, %s390
      %p399 = scmp.eq.s32.totalorder %s33, 1
      %p400 = por %p398, %p399
      %p401 = scmp.ne.s32.totalorder %s390, %s391
      %p402 = scmp.eq.s32.totalorder %s33, 0
      %p403 = por %p401, %p402
      %p404 = scmp.ne.s32.totalorder %s390, %s391
      %p405 = scmp.eq.s32.totalorder %s34, 1
      %p406 = por %p404, %p405
      %p408 = scmp.ne.s32.totalorder %s391, %s407
      %p409 = scmp.eq.s32.totalorder %s34, 0
      %p410 = por %p408, %p409
      %s411 = ssub.s32 %s28, %s35
      %p412 = scmp.eq.s32.totalorder %s411, 0
      %s414 = sadd.s32 %s413, 1
      %s415 = scalar_select %p412, %s413, %s414
      %p418 = pneg %p412
      %p419 = scmp.eq.s32.totalorder %s28, 1
      %p420 = por %p418, %p419
      %p421 = scmp.ne.s32.totalorder %s413, %s416
      %p422 = scmp.eq.s32.totalorder %s28, 0
      %p423 = por %p421, %p422
      %p424 = scmp.ne.s32.totalorder %s413, %s416
      %p425 = scmp.eq.s32.totalorder %s33, 1
      %p426 = por %p424, %p425
      %p427 = scmp.ne.s32.totalorder %s416, %s417
      %p428 = scmp.eq.s32.totalorder %s33, 0
      %p429 = por %p427, %p428
      %p430 = scmp.ne.s32.totalorder %s416, %s417
      %p431 = scmp.eq.s32.totalorder %s34, 1
      %p432 = por %p430, %p431
      %p434 = scmp.ne.s32.totalorder %s417, %s433
      %p435 = scmp.eq.s32.totalorder %s34, 0
      %p436 = por %p434, %p435
      %s437 = ssub.s32 %s28, %s35
      %p438 = scmp.eq.s32.totalorder %s437, 0
      %s440 = sadd.s32 %s439, 1
      %s441 = scalar_select %p438, %s439, %s440
      %p444 = pneg %p438
      %p445 = scmp.eq.s32.totalorder %s28, 1
      %p446 = por %p444, %p445
      %p447 = scmp.ne.s32.totalorder %s439, %s442
      %p448 = scmp.eq.s32.totalorder %s28, 0
      %p449 = por %p447, %p448
      %p450 = scmp.ne.s32.totalorder %s439, %s442
      %p451 = scmp.eq.s32.totalorder %s33, 1
      %p452 = por %p450, %p451
      %p453 = scmp.ne.s32.totalorder %s442, %s443
      %p454 = scmp.eq.s32.totalorder %s33, 0
      %p455 = por %p453, %p454
      %p456 = scmp.ne.s32.totalorder %s442, %s443
      %p457 = scmp.eq.s32.totalorder %s34, 1
      %p458 = por %p456, %p457
      %p460 = scmp.ne.s32.totalorder %s443, %s459
      %p461 = scmp.eq.s32.totalorder %s34, 0
      %p462 = por %p460, %p461
      %s464 = sadd.s32 %s463, 1
      %p467 = scmp.eq.s32.totalorder %s28, 1
      %p468 = scmp.ne.s32.totalorder %s463, %s465
      %p469 = scmp.eq.s32.totalorder %s28, 0
      %p470 = por %p468, %p469
      %p471 = scmp.ne.s32.totalorder %s463, %s465
      %p472 = scmp.eq.s32.totalorder %s33, 1
      %p473 = por %p471, %p472
      %p474 = scmp.ne.s32.totalorder %s465, %s466
      %p475 = scmp.eq.s32.totalorder %s33, 0
      %p476 = por %p474, %p475
      %p477 = scmp.ne.s32.totalorder %s465, %s466
      %p478 = scmp.eq.s32.totalorder %s34, 1
      %p479 = por %p477, %p478
      %p481 = scmp.ne.s32.totalorder %s466, %s480
      %p482 = scmp.eq.s32.totalorder %s34, 0
      %p483 = por %p481, %p482
      %s485 = sadd.s32 %s484, 1
      %p488 = scmp.eq.s32.totalorder %s28, 1
      %p489 = scmp.ne.s32.totalorder %s484, %s486
      %p490 = scmp.eq.s32.totalorder %s28, 0
      %p491 = por %p489, %p490
      %p492 = scmp.ne.s32.totalorder %s484, %s486
      %p493 = scmp.eq.s32.totalorder %s33, 1
      %p494 = por %p492, %p493
      %p495 = scmp.ne.s32.totalorder %s486, %s487
      %p496 = scmp.eq.s32.totalorder %s33, 0
      %p497 = por %p495, %p496
      %p498 = scmp.ne.s32.totalorder %s486, %s487
      %p499 = scmp.eq.s32.totalorder %s34, 1
      %p500 = por %p498, %p499
      %p502 = scmp.ne.s32.totalorder %s487, %s501
      %p503 = scmp.eq.s32.totalorder %s34, 0
      %p504 = por %p502, %p503
      %s506 = sadd.s32 %s505, 1
      %p509 = scmp.eq.s32.totalorder %s28, 1
      %p510 = scmp.ne.s32.totalorder %s505, %s507
      %p511 = scmp.eq.s32.totalorder %s28, 0
      %p512 = por %p510, %p511
      %p513 = scmp.ne.s32.totalorder %s505, %s507
      %p514 = scmp.eq.s32.totalorder %s33, 1
      %p515 = por %p513, %p514
      %p516 = scmp.ne.s32.totalorder %s507, %s508
      %p517 = scmp.eq.s32.totalorder %s33, 0
      %p518 = por %p516, %p517
      %p519 = scmp.ne.s32.totalorder %s507, %s508
      %p520 = scmp.eq.s32.totalorder %s34, 1
      %p521 = por %p519, %p520
      %p523 = scmp.ne.s32.totalorder %s508, %s522
      %p524 = scmp.eq.s32.totalorder %s34, 0
      %p525 = por %p523, %p524
      %s527 = sadd.s32 %s526, 1
      %p530 = scmp.eq.s32.totalorder %s28, 1
      %p531 = scmp.ne.s32.totalorder %s526, %s528
      %p532 = scmp.eq.s32.totalorder %s28, 0
      %p533 = por %p531, %p532
      %p534 = scmp.ne.s32.totalorder %s526, %s528
      %p535 = scmp.eq.s32.totalorder %s33, 1
      %p536 = por %p534, %p535
      %p537 = scmp.ne.s32.totalorder %s528, %s529
      %p538 = scmp.eq.s32.totalorder %s33, 0
      %p539 = por %p537, %p538
      %p540 = scmp.ne.s32.totalorder %s528, %s529
      %p541 = scmp.eq.s32.totalorder %s34, 1
      %p542 = por %p540, %p541
      %p544 = scmp.ne.s32.totalorder %s529, %s543
      %p545 = scmp.eq.s32.totalorder %s34, 0
      %p546 = por %p544, %p545
      %s548 = sadd.s32 %s547, 1
      %p551 = scmp.eq.s32.totalorder %s28, 1
      %p552 = scmp.ne.s32.totalorder %s547, %s549
      %p553 = scmp.eq.s32.totalorder %s28, 0
      %p554 = por %p552, %p553
      %p555 = scmp.ne.s32.totalorder %s547, %s549
      %p556 = scmp.eq.s32.totalorder %s33, 1
      %p557 = por %p555, %p556
      %p558 = scmp.ne.s32.totalorder %s549, %s550
      %p559 = scmp.eq.s32.totalorder %s33, 0
      %p560 = por %p558, %p559
      %p561 = scmp.ne.s32.totalorder %s549, %s550
      %p562 = scmp.eq.s32.totalorder %s34, 1
      %p563 = por %p561, %p562
      %p565 = scmp.ne.s32.totalorder %s550, %s564
      %p566 = scmp.eq.s32.totalorder %s34, 0
      %p567 = por %p565, %p566
      %p568 = scmp.le.s32.totalorder 1, %s28
      %p569 = scmp.lt.s32.totalorder %s28, 3
      %p570 = pnand %p568, %p569
      %p571 = pneg %p570
      // Predicated region
      $region9: #{tpu_custom_call.1} parent=5 // pred_check
        _
      $region10: #{tpu_custom_call.1} parent=5 // pred_check_branch
        %573 = sbr.rel (%p570) target = $region12
      $region11: #{tpu_custom_call.1} parent=5 // pred_region
        %s574 = ssub.s32 %s28, 1
        // Predicated region
        $region13: #{tpu_custom_call.1} parent=11 // pred_check
          %p575 = pneg %p49
        $region14: #{tpu_custom_call.1} parent=11 // pred_check_branch
          %577 = sbr.rel (%p575) target = $region16
        $region15: #{tpu_custom_call.1} parent=11 // pred_region
          _
        $region16: #{tpu_custom_call.1} parent=11 // pred_fallthru
          _
        // Predicated region
        $region17: #{tpu_custom_call.1} parent=11 // pred_check
          %p578 = pneg %p70
        $region18: #{tpu_custom_call.1} parent=11 // pred_check_branch
          %580 = sbr.rel (%p578) target = $region20
        $region19: #{tpu_custom_call.1} parent=11 // pred_region
          _
        $region20: #{tpu_custom_call.1} parent=11 // pred_fallthru
          _
        // Predicated region
        $region21: #{tpu_custom_call.1} parent=11 // pred_check
          %p581 = pneg %p91
        $region22: #{tpu_custom_call.1} parent=11 // pred_check_branch
          %583 = sbr.rel (%p581) target = $region24
        $region23: #{tpu_custom_call.1} parent=11 // pred_region
          _
        $region24: #{tpu_custom_call.1} parent=11 // pred_fallthru
          _
        // Predicated region
        $region25: #{tpu_custom_call.1} parent=11 // pred_check
          %p584 = pneg %p476
        $region26: #{tpu_custom_call.1} parent=11 // pred_check_branch
          %586 = sbr.rel (%p584) target = $region28
        $region27: #{tpu_custom_call.1} parent=11 // pred_region
          _
        $region28: #{tpu_custom_call.1} parent=11 // pred_fallthru
          _
        // Predicated region
        $region29: #{tpu_custom_call.1} parent=11 // pred_check
          %p587 = pneg %p497
        $region30: #{tpu_custom_call.1} parent=11 // pred_check_branch
          %589 = sbr.rel (%p587) target = $region32
        $region31: #{tpu_custom_call.1} parent=11 // pred_region
          _
        $region32: #{tpu_custom_call.1} parent=11 // pred_fallthru
          _
        // Predicated region
        $region33: #{tpu_custom_call.1} parent=11 // pred_check
          %p590 = pneg %p518
        $region34: #{tpu_custom_call.1} parent=11 // pred_check_branch
          %592 = sbr.rel (%p590) target = $region36
        $region35: #{tpu_custom_call.1} parent=11 // pred_region
          _
        $region36: #{tpu_custom_call.1} parent=11 // pred_fallthru
          _
        // Predicated region
        $region37: #{tpu_custom_call.1} parent=11 // pred_check
          %p593 = pneg %p539
        $region38: #{tpu_custom_call.1} parent=11 // pred_check_branch
          %595 = sbr.rel (%p593) target = $region40
        $region39: #{tpu_custom_call.1} parent=11 // pred_region
          _
        $region40: #{tpu_custom_call.1} parent=11 // pred_fallthru
          _
      $region12: #{tpu_custom_call.1} parent=5 // pred_fallthru
        _
      %p596 = scmp.lt.s32.totalorder %s28, 2
      // Predicated region
      $region41: #{tpu_custom_call.1} parent=5 // pred_check
        %p597 = pneg %p596
      $region42: #{tpu_custom_call.1} parent=5 // pred_check_branch
        %599 = sbr.rel (%p597) target = $region44
      $region43: #{tpu_custom_call.1} parent=5 // pred_region
        // Predicated region
        $region45: #{tpu_custom_call.1} parent=43 // pred_check
          %p600 = pneg %p111
        $region46: #{tpu_custom_call.1} parent=43 // pred_check_branch
          %602 = sbr.rel (%p600) target = $region48
        $region47: #{tpu_custom_call.1} parent=43 // pred_region
          %p603 = scmp.lt.s32.totalorder %s28, 1
          %s604 = scalar_select %p603, %s28, 1
          %s605 = smul.addr %s604, 16
          %s606 = smul.addr %s605, 4
          %s607 = scalar_lea.vmem %s3, %s606
        $region48: #{tpu_custom_call.1} parent=43 // pred_fallthru
          _
        // Predicated region
        $region49: #{tpu_custom_call.1} parent=43 // pred_check
          %p608 = pneg %p137
        $region50: #{tpu_custom_call.1} parent=43 // pred_check_branch
          %610 = sbr.rel (%p608) target = $region52
        $region51: #{tpu_custom_call.1} parent=43 // pred_region
          %p611 = scmp.lt.s32.totalorder %s28, 1
          %s612 = scalar_select %p611, %s28, 1
          %s613 = smul.addr %s612, 16
          %s614 = smul.addr %s613, 4
          %s615 = scalar_lea.vmem %s4, %s614
        $region52: #{tpu_custom_call.1} parent=43 // pred_fallthru
          _
        // Predicated region
        $region53: #{tpu_custom_call.1} parent=43 // pred_check
          %p616 = pneg %p163
        $region54: #{tpu_custom_call.1} parent=43 // pred_check_branch
          %618 = sbr.rel (%p616) target = $region56
        $region55: #{tpu_custom_call.1} parent=43 // pred_region
          %p619 = scmp.lt.s32.totalorder %s28, 1
          %s620 = scalar_select %p619, %s28, 1
          %s621 = smul.addr %s620, 16
          %s622 = smul.addr %s621, 4
          %s623 = scalar_lea.vmem %s5, %s622
        $region56: #{tpu_custom_call.1} parent=43 // pred_fallthru
          _
        // Predicated region
        $region57: #{tpu_custom_call.1} parent=43 // pred_check
          %p624 = pneg %p189
        $region58: #{tpu_custom_call.1} parent=43 // pred_check_branch
          %626 = sbr.rel (%p624) target = $region60
        $region59: #{tpu_custom_call.1} parent=43 // pred_region
          %p627 = scmp.lt.s32.totalorder %s28, 1
          %s628 = scalar_select %p627, %s28, 1
          %s629 = smul.addr %s628, 4
          %s630 = scalar_lea.vmem %s6, %s629
        $region60: #{tpu_custom_call.1} parent=43 // pred_fallthru
          _
        // Predicated region
        $region61: #{tpu_custom_call.1} parent=43 // pred_check
          %p631 = pneg %p215
        $region62: #{tpu_custom_call.1} parent=43 // pred_check_branch
          %633 = sbr.rel (%p631) target = $region64
        $region63: #{tpu_custom_call.1} parent=43 // pred_region
          %p634 = scmp.lt.s32.totalorder %s28, 1
          %s635 = scalar_select %p634, %s28, 1
          %s636 = smul.addr %s635, 4
          %s637 = scalar_lea.vmem %s7, %s636
        $region64: #{tpu_custom_call.1} parent=43 // pred_fallthru
          _
        // Predicated region
        $region65: #{tpu_custom_call.1} parent=43 // pred_check
          %p638 = pneg %p241
        $region66: #{tpu_custom_call.1} parent=43 // pred_check_branch
          %640 = sbr.rel (%p638) target = $region68
        $region67: #{tpu_custom_call.1} parent=43 // pred_region
          %p641 = scmp.lt.s32.totalorder %s28, 1
          %s642 = scalar_select %p641, %s28, 1
          %s643 = smul.addr %s642, 4
          %s644 = scalar_lea.vmem %s8, %s643
        $region68: #{tpu_custom_call.1} parent=43 // pred_fallthru
          _
        // Predicated region
        $region69: #{tpu_custom_call.1} parent=43 // pred_check
          %p645 = pneg %p267
        $region70: #{tpu_custom_call.1} parent=43 // pred_check_branch
          %647 = sbr.rel (%p645) target = $region72
        $region71: #{tpu_custom_call.1} parent=43 // pred_region
          %p648 = scmp.lt.s32.totalorder %s28, 1
          %s649 = scalar_select %p648, %s28, 1
          %s650 = smul.addr %s649, 4
          %s651 = smul.addr %s650, 4
          %s652 = scalar_lea.vmem %s9, %s651
        $region72: #{tpu_custom_call.1} parent=43 // pred_fallthru
          _
        // Predicated region
        $region73: #{tpu_custom_call.1} parent=43 // pred_check
          %p653 = pneg %p293
        $region74: #{tpu_custom_call.1} parent=43 // pred_check_branch
          %655 = sbr.rel (%p653) target = $region76
        $region75: #{tpu_custom_call.1} parent=43 // pred_region
          %p656 = scmp.lt.s32.totalorder %s28, 1
          %s657 = scalar_select %p656, %s28, 1
          %s658 = scalar_lea.vmem %s10, %s657
        $region76: #{tpu_custom_call.1} parent=43 // pred_fallthru
          _
        // Predicated region
        $region77: #{tpu_custom_call.1} parent=43 // pred_check
          %p659 = pneg %p319
        $region78: #{tpu_custom_call.1} parent=43 // pred_check_branch
          %661 = sbr.rel (%p659) target = $region80
        $region79: #{tpu_custom_call.1} parent=43 // pred_region
          %p662 = scmp.lt.s32.totalorder %s28, 1
          %s663 = scalar_select %p662, %s28, 1
          %s664 = smul.addr %s663, 2
          %s665 = scalar_lea.vmem %s11, %s664
        $region80: #{tpu_custom_call.1} parent=43 // pred_fallthru
          _
        // Predicated region
        $region81: #{tpu_custom_call.1} parent=43 // pred_check
          %p666 = pneg %p345
        $region82: #{tpu_custom_call.1} parent=43 // pred_check_branch
          %668 = sbr.rel (%p666) target = $region84
        $region83: #{tpu_custom_call.1} parent=43 // pred_region
          %p669 = scmp.lt.s32.totalorder %s28, 1
          %s670 = scalar_select %p669, %s28, 1
          %s671 = smul.addr %s670, 4
          %s672 = smul.addr %s671, 4
          %s673 = scalar_lea.vmem %s12, %s672
        $region84: #{tpu_custom_call.1} parent=43 // pred_fallthru
          _
        // Predicated region
        $region85: #{tpu_custom_call.1} parent=43 // pred_check
          %p674 = pneg %p371
        $region86: #{tpu_custom_call.1} parent=43 // pred_check_branch
          %676 = sbr.rel (%p674) target = $region88
        $region87: #{tpu_custom_call.1} parent=43 // pred_region
          %p677 = scmp.lt.s32.totalorder %s28, 1
          %s678 = scalar_select %p677, %s28, 1
          %s679 = scalar_lea.vmem %s13, %s678
        $region88: #{tpu_custom_call.1} parent=43 // pred_fallthru
          _
        // Predicated region
        $region89: #{tpu_custom_call.1} parent=43 // pred_check
          %p680 = pneg %p397
        $region90: #{tpu_custom_call.1} parent=43 // pred_check_branch
          %682 = sbr.rel (%p680) target = $region92
        $region91: #{tpu_custom_call.1} parent=43 // pred_region
          %p683 = scmp.lt.s32.totalorder %s28, 1
          %s684 = scalar_select %p683, %s28, 1
          %s685 = smul.addr %s684, 8
          %s686 = smul.addr %s685, 4
          %s687 = scalar_lea.vmem %s14, %s686
        $region92: #{tpu_custom_call.1} parent=43 // pred_fallthru
          _
        // Predicated region
        $region93: #{tpu_custom_call.1} parent=43 // pred_check
          %p688 = pneg %p423
        $region94: #{tpu_custom_call.1} parent=43 // pred_check_branch
          %690 = sbr.rel (%p688) target = $region96
        $region95: #{tpu_custom_call.1} parent=43 // pred_region
          %p691 = scmp.lt.s32.totalorder %s28, 1
          %s692 = scalar_select %p691, %s28, 1
          %s693 = scalar_lea.vmem %s15, %s692
        $region96: #{tpu_custom_call.1} parent=43 // pred_fallthru
          _
        // Predicated region
        $region97: #{tpu_custom_call.1} parent=43 // pred_check
          %p694 = pneg %p449
        $region98: #{tpu_custom_call.1} parent=43 // pred_check_branch
          %696 = sbr.rel (%p694) target = $region100
        $region99: #{tpu_custom_call.1} parent=43 // pred_region
          %p697 = scmp.lt.s32.totalorder %s28, 1
          %s698 = scalar_select %p697, %s28, 1
          %s699 = smul.addr %s698, 2
          %s700 = scalar_lea.vmem %s16, %s699
        $region100: #{tpu_custom_call.1} parent=43 // pred_fallthru
          _
      $region44: #{tpu_custom_call.1} parent=5 // pred_fallthru
        _
      %p701 = scmp.le.s32.totalorder 1, %s28
      %p702 = scmp.lt.s32.totalorder %s28, 3
      %p703 = pnand %p701, %p702
      %p704 = pneg %p703
      // Predicated region
      $region101: #{tpu_custom_call.1} parent=5 // pred_check
        _
      $region102: #{tpu_custom_call.1} parent=5 // pred_check_branch
        %706 = sbr.rel (%p703) target = $region104
      $region103: #{tpu_custom_call.1} parent=5 // pred_region
        %s707 = ssub.s32 %s28, 1
        %p708 = pneg %p49
        %p709 = pneg %p46
        %p710 = pneg %p70
        %p711 = pneg %p67
        %p712 = pneg %p91
        %p713 = pneg %p88
        %p714 = scmp.lt.s32.totalorder %s33, 1
        %s715 = scalar_select %p714, %s33, 1
        %s716 = smul.addr %s715, 16
        %s717 = smul.addr %s716, 4
        %s718 = scalar_lea.vmem %s3, %s717
        %p719 = pneg %p117
        %p720 = pneg %p114
        %p721 = scmp.lt.s32.totalorder %s33, 1
        %s722 = scalar_select %p721, %s33, 1
        %s723 = smul.addr %s722, 16
        %s724 = smul.addr %s723, 4
        %s725 = scalar_lea.vmem %s4, %s724
        %p726 = pneg %p143
        %p727 = pneg %p140
        %p728 = scmp.lt.s32.totalorder %s33, 1
        %s729 = scalar_select %p728, %s33, 1
        %s730 = smul.addr %s729, 16
        %s731 = smul.addr %s730, 4
        %s732 = scalar_lea.vmem %s5, %s731
        %p733 = pneg %p169
        %p734 = pneg %p166
        %p735 = scmp.lt.s32.totalorder %s33, 1
        %s736 = scalar_select %p735, %s33, 1
        %s737 = smul.addr %s736, 4
        %s738 = scalar_lea.vmem %s6, %s737
        %p739 = pneg %p195
        %p740 = pneg %p192
        %p741 = scmp.lt.s32.totalorder %s33, 1
        %s742 = scalar_select %p741, %s33, 1
        %s743 = smul.addr %s742, 4
        %s744 = scalar_lea.vmem %s7, %s743
        %p745 = pneg %p221
        %p746 = pneg %p218
        %p747 = scmp.lt.s32.totalorder %s33, 1
        %s748 = scalar_select %p747, %s33, 1
        %s749 = smul.addr %s748, 4
        %s750 = scalar_lea.vmem %s8, %s749
        %p751 = pneg %p247
        %p752 = pneg %p244
        %p753 = scmp.lt.s32.totalorder %s33, 1
        %s754 = scalar_select %p753, %s33, 1
        %s755 = smul.addr %s754, 4
        %s756 = smul.addr %s755, 4
        %s757 = scalar_lea.vmem %s9, %s756
        %p758 = pneg %p273
        %p759 = pneg %p270
        %p760 = scmp.lt.s32.totalorder %s33, 1
        %s761 = scalar_select %p760, %s33, 1
        %s762 = scalar_lea.vmem %s10, %s761
        %p763 = pneg %p299
        %p764 = pneg %p296
        %p765 = scmp.lt.s32.totalorder %s33, 1
        %s766 = scalar_select %p765, %s33, 1
        %s767 = smul.addr %s766, 2
        %s768 = scalar_lea.vmem %s11, %s767
        %p769 = pneg %p325
        %p770 = pneg %p322
        %p771 = scmp.lt.s32.totalorder %s33, 1
        %s772 = scalar_select %p771, %s33, 1
        %s773 = smul.addr %s772, 4
        %s774 = smul.addr %s773, 4
        %s775 = scalar_lea.vmem %s12, %s774
        %p776 = pneg %p351
        %p777 = pneg %p348
        %p778 = scmp.lt.s32.totalorder %s33, 1
        %s779 = scalar_select %p778, %s33, 1
        %s780 = scalar_lea.vmem %s13, %s779
        %p781 = pneg %p377
        %p782 = pneg %p374
        %p783 = scmp.lt.s32.totalorder %s33, 1
        %s784 = scalar_select %p783, %s33, 1
        %s785 = smul.addr %s784, 8
        %s786 = smul.addr %s785, 4
        %s787 = scalar_lea.vmem %s14, %s786
        %p788 = pneg %p403
        %p789 = pneg %p400
        %p790 = scmp.lt.s32.totalorder %s33, 1
        %s791 = scalar_select %p790, %s33, 1
        %s792 = scalar_lea.vmem %s15, %s791
        %p793 = pneg %p429
        %p794 = pneg %p426
        %p795 = scmp.lt.s32.totalorder %s33, 1
        %s796 = scalar_select %p795, %s33, 1
        %s797 = smul.addr %s796, 2
        %s798 = scalar_lea.vmem %s16, %s797
        %p799 = pneg %p455
        %p800 = pneg %p452
        %p801 = pneg %p476
        %p802 = pneg %p473
        %p803 = pneg %p497
        %p804 = pneg %p494
        %p805 = pneg %p518
        %p806 = pneg %p515
        %p807 = pneg %p539
        %p808 = pneg %p536
        %p809 = pneg %p560
        %p810 = pneg %p557
        %p811 = scmp.lt.s32.totalorder %s33, 1
        %s812 = scalar_select %p811, %s33, 1
        %s813 = smul.addr %s812, 16
        %s814 = smul.addr %s813, 4
        %s815 = scalar_lea.vmem %s3, %s814
        %p816 = scmp.lt.s32.totalorder %s33, 1
        %s817 = scalar_select %p816, %s33, 1
        %s818 = smul.addr %s817, 16
        %s819 = smul.addr %s818, 4
        %s820 = scalar_lea.vmem %s4, %s819
        %p821 = scmp.lt.s32.totalorder %s33, 1
        %s822 = scalar_select %p821, %s33, 1
        %s823 = smul.addr %s822, 16
        %s824 = smul.addr %s823, 4
        %s825 = scalar_lea.vmem %s5, %s824
        %p826 = scmp.lt.s32.totalorder %s33, 1
        %s827 = scalar_select %p826, %s33, 1
        %s828 = smul.addr %s827, 4
        %s829 = scalar_lea.vmem %s6, %s828
        %p830 = scmp.lt.s32.totalorder %s33, 1
        %s831 = scalar_select %p830, %s33, 1
        %s832 = smul.addr %s831, 4
        %s833 = scalar_lea.vmem %s7, %s832
        %p834 = scmp.lt.s32.totalorder %s33, 1
        %s835 = scalar_select %p834, %s33, 1
        %s836 = smul.addr %s835, 4
        %s837 = scalar_lea.vmem %s8, %s836
        %p838 = scmp.lt.s32.totalorder %s33, 1
        %s839 = scalar_select %p838, %s33, 1
        %s840 = smul.addr %s839, 4
        %s841 = smul.addr %s840, 4
        %s842 = scalar_lea.vmem %s9, %s841
        %p843 = scmp.lt.s32.totalorder %s33, 1
        %s844 = scalar_select %p843, %s33, 1
        %s845 = scalar_lea.vmem %s10, %s844
        %p846 = scmp.lt.s32.totalorder %s33, 1
        %s847 = scalar_select %p846, %s33, 1
        %s848 = smul.addr %s847, 2
        %s849 = scalar_lea.vmem %s11, %s848
        %p850 = scmp.lt.s32.totalorder %s33, 1
        %s851 = scalar_select %p850, %s33, 1
        %s852 = smul.addr %s851, 4
        %s853 = smul.addr %s852, 4
        %s854 = scalar_lea.vmem %s12, %s853
        %p855 = scmp.lt.s32.totalorder %s33, 1
        %s856 = scalar_select %p855, %s33, 1
        %s857 = scalar_lea.vmem %s13, %s856
        %p858 = scmp.lt.s32.totalorder %s33, 1
        %s859 = scalar_select %p858, %s33, 1
        %s860 = smul.addr %s859, 8
        %s861 = smul.addr %s860, 4
        %s862 = scalar_lea.vmem %s14, %s861
        %p863 = scmp.lt.s32.totalorder %s33, 1
        %s864 = scalar_select %p863, %s33, 1
        %s865 = scalar_lea.vmem %s15, %s864
        %p866 = scmp.lt.s32.totalorder %s33, 1
        %s867 = scalar_select %p866, %s33, 1
        %s868 = smul.addr %s867, 2
        %s869 = scalar_lea.vmem %s16, %s868
        %p871 = scmp.eq.s32.totalorder %s33, 0
        // Predicated region
        $region105: #{tpu_custom_call.1} parent=103 // pred_check
          %p872 = pneg %p871
        $region106: #{tpu_custom_call.1} parent=103 // pred_check_branch
          %874 = sbr.rel (%p872) target = $region108
        $region107: #{tpu_custom_call.1} parent=103 // pred_region
          %v875 = vld [vmem:[%s0] sm:$0xff]
          %v876 = vld [vmem:[%s0 + $0x8] sm:$0xff]
          %v877 = vld [vmem:[%s2] sm:$0x1]
          %s878 = scalar_lea.vmem %s2, 1
          %v879 = vld [vmem:[%s878] sm:$0x1]
          %vm880 = vcmask 261120
          %v881 = vsel %vm880, %v875, 0.0
          %882 = vadd.xlane.f32.xlu0 %v881
          %v883 = vpop.xlane.xlu0 %882
          %v884 = vsel %vm880, %v876, 0.0
          %885 = vadd.xlane.f32.xlu0 %v884
          %v886 = vpop.xlane.xlu0 %885
          %v887 = vrcp.pop 32.0
          %v888 = vmul.f32 %v883, %v887
          %v889 = vmul.f32 %v886, %v887
          %v890 = vsub.f32 %v875, %v888
          %v891 = vsub.f32 %v876, %v889
          %v892 = vmul.f32 %v890, %v890
          %v893 = vmul.f32 %v891, %v891
          %v894 = vsel %vm880, %v892, 0.0
          %895 = vadd.xlane.f32.xlu0 %v894
          %v896 = vpop.xlane.xlu0 %895
          %v897 = vsel %vm880, %v893, 0.0
          %898 = vadd.xlane.f32.xlu0 %v897
          %v899 = vpop.xlane.xlu0 %898
          %v900 = vmul.f32 %v896, %v887
          %v901 = vmul.f32 %v899, %v887
          %v902 = vadd.f32 %v900, 1e-12
          %v903 = vadd.f32 %v901, 1e-12
          %v904 = vrsqrt.pop %v902
          %v905 = vrsqrt.pop %v903
          %v906 = vmul.f32 %v890, %v904
          %v907 = vmul.f32 %v891, %v905
          %v909 = vlaneseq
          %v910 = vshrl.u32 %v909, 7
          %v911 = vsub.s32 0, %v910
          %v912 = vrot.slane %v877, %v911
          %v914 = vmul.f32 %v906, %v912
          %v915 = vmul.f32 %v907, %v912
          %v917 = vlaneseq
          %v918 = vshrl.u32 %v917, 7
          %v919 = vsub.s32 0, %v918
          %v920 = vrot.slane %v879, %v919
          %v922 = vadd.f32 %v914, %v920
          %v923 = vadd.f32 %v915, %v920
          %924 = vst.msk [vmem:[#allocation2] sm:$0xff] %vm880, %v922
          %925 = vst.msk [vmem:[#allocation2 + $0x8] sm:$0xff] %vm880, %v923
        $region108: #{tpu_custom_call.1} parent=103 // pred_fallthru
          _
        %v926 = vld [vmem:[#allocation2] sm:$0xff]
        %v927 = vld [vmem:[#allocation2 + $0x8] sm:$0xff]
        %v928 = vpack.c.bf16 %v927, %v926
        %v929 = vld [vmem:[%s815] sm:$0xf]
        %v930 = vld [vmem:[%s815 + $0x4] sm:$0xf]
        %v931 = vld [vmem:[%s815 + $0x8] sm:$0xf]
        %v932 = vld [vmem:[%s815 + $0xc] sm:$0xf]
        %v933 = vld [vmem:[%s829] sm:$0x1]
        %v935 = vlaneseq
        %v936 = vshrl.u32 %v935, 7
        %v937 = vsub.s32 0, %v936
        %v938 = vrot.slane %v933, %v937
        %v944 = vunpack.c.l.b16 %v929
        %v945 = vunpack.c.l.b16 %v930
        %v946 = vunpack.c.l.b16 %v931
        %v947 = vunpack.c.l.b16 %v932
        %v948 = vpack.c.b16 %v945, %v944
        %v949 = vpack.c.b16 %v947, %v946
        %vm952 = vcmask 261120
        %v954 = vsel %vm952, %v928, 0
        %956 = vmatprep.subr.bf16.mxu0 0
        %957 = vmatpush1.bf16.msra.mxu0 %v948
        %958 = vmatprep.subr.bf16.mxu0 0
        %959 = vmatpush1.bf16.msra.mxu0 %v949
        %960 = vmatprep.subr.bf16.mxu0 0
        %961 = vmatpush1.bf16.msra.mxu0 0
        %962 = vmatprep.subr.bf16.mxu0 0
        %963 = vmatpush1.bf16.msra.mxu0 0
        %964 = vmatprep.subr.bf16.mxu0 0
        %965 = vmatpush1.bf16.msra.mxu0 0
        %966 = vmatprep.subr.bf16.mxu0 0
        %967 = vmatpush1.bf16.msra.mxu0 0
        %968 = vmatprep.subr.bf16.mxu0 0
        %969 = vmatpush1.bf16.msra.mxu0 0
        %970 = vmatprep.subr.bf16.mxu0 0
        %971 = vmatpush1.bf16.msra.mxu0 0
        %972 = vmatprep.subr.bf16.mxu0 0
        %973 = vmatpush1.bf16.msra.mxu0 0
        %974 = vmatprep.subr.bf16.mxu0 0
        %975 = vmatpush1.bf16.msra.mxu0 0
        %976 = vmatprep.subr.bf16.mxu0 0
        %977 = vmatpush1.bf16.msra.mxu0 0
        %978 = vmatprep.subr.bf16.mxu0 0
        %979 = vmatpush1.bf16.msra.mxu0 0
        %980 = vmatprep.subr.bf16.mxu0 0
        %981 = vmatpush1.bf16.msra.mxu0 0
        %982 = vmatprep.subr.bf16.mxu0 0
        %983 = vmatpush1.bf16.msra.mxu0 0
        %984 = vmatprep.subr.bf16.mxu0 0
        %985 = vmatpush1.bf16.msra.mxu0 0
        %986 = vmatprep.subr.bf16.mxu0 0
        %987 = vmatpush1.bf16.msra.mxu0 0
        %988 = vmatprep.mubr.bf16.mxu0 0
        %989 = vmatmul.mubr.bf16.gmra.mrb[0].mxu0 %v954
        %v990 = vpop.f32.mrb[0].mxu0
        %v991 = vadd.f32 %v938, %v990
        %v992 = vpop.f32.mrb[0].mxu0
        %v993 = vpop.f32.mrb[0].mxu0
        %v994 = vadd.f32 %v938, %v993
        %v995 = vpop.f32.mrb[0].mxu0
        %996 = vdwg.mxu0
        %v997 = vld [vmem:[%s820] sm:$0xf]
        %v998 = vld [vmem:[%s820 + $0x4] sm:$0xf]
        %v999 = vld [vmem:[%s820 + $0x8] sm:$0xf]
        %v1000 = vld [vmem:[%s820 + $0xc] sm:$0xf]
        %v1001 = vld [vmem:[%s833] sm:$0x1]
        %v1003 = vlaneseq
        %v1004 = vshrl.u32 %v1003, 7
        %v1005 = vsub.s32 0, %v1004
        %v1006 = vrot.slane %v1001, %v1005
        %v1012 = vunpack.c.l.b16 %v997
        %v1013 = vunpack.c.l.b16 %v998
        %v1014 = vunpack.c.l.b16 %v999
        %v1015 = vunpack.c.l.b16 %v1000
        %v1016 = vpack.c.b16 %v1013, %v1012
        %v1017 = vpack.c.b16 %v1015, %v1014
        %1020 = vmatprep.subr.bf16.mxu0 0
        %1021 = vmatpush1.bf16.msra.mxu0 %v1016
        %1022 = vmatprep.subr.bf16.mxu0 0
        %1023 = vmatpush1.bf16.msra.mxu0 %v1017
        %1024 = vmatprep.subr.bf16.mxu0 0
        %1025 = vmatpush1.bf16.msra.mxu0 0
        %1026 = vmatprep.subr.bf16.mxu0 0
        %1027 = vmatpush1.bf16.msra.mxu0 0
        %1028 = vmatprep.subr.bf16.mxu0 0
        %1029 = vmatpush1.bf16.msra.mxu0 0
        %1030 = vmatprep.subr.bf16.mxu0 0
        %1031 = vmatpush1.bf16.msra.mxu0 0
        %1032 = vmatprep.subr.bf16.mxu0 0
        %1033 = vmatpush1.bf16.msra.mxu0 0
        %1034 = vmatprep.subr.bf16.mxu0 0
        %1035 = vmatpush1.bf16.msra.mxu0 0
        %1036 = vmatprep.subr.bf16.mxu0 0
        %1037 = vmatpush1.bf16.msra.mxu0 0
        %1038 = vmatprep.subr.bf16.mxu0 0
        %1039 = vmatpush1.bf16.msra.mxu0 0
        %1040 = vmatprep.subr.bf16.mxu0 0
        %1041 = vmatpush1.bf16.msra.mxu0 0
        %1042 = vmatprep.subr.bf16.mxu0 0
        %1043 = vmatpush1.bf16.msra.mxu0 0
        %1044 = vmatprep.subr.bf16.mxu0 0
        %1045 = vmatpush1.bf16.msra.mxu0 0
        %1046 = vmatprep.subr.bf16.mxu0 0
        %1047 = vmatpush1.bf16.msra.mxu0 0
        %1048 = vmatprep.subr.bf16.mxu0 0
        %1049 = vmatpush1.bf16.msra.mxu0 0
        %1050 = vmatprep.subr.bf16.mxu0 0
        %1051 = vmatpush1.bf16.msra.mxu0 0
        %1052 = vmatprep.mubr.bf16.mxu0 0
        %1053 = vmatmul.mubr.bf16.gmra.mrb[0].mxu0 %v954
        %v1054 = vpop.f32.mrb[0].mxu0
        %v1055 = vadd.f32 %v1006, %v1054
        %v1056 = vpop.f32.mrb[0].mxu0
        %v1057 = vpop.f32.mrb[0].mxu0
        %v1058 = vadd.f32 %v1006, %v1057
        %v1059 = vpop.f32.mrb[0].mxu0
        %1060 = vdwg.mxu0
        %v1061 = vld [vmem:[%s825] sm:$0xf]
        %v1062 = vld [vmem:[%s825 + $0x4] sm:$0xf]
        %v1063 = vld [vmem:[%s825 + $0x8] sm:$0xf]
        %v1064 = vld [vmem:[%s825 + $0xc] sm:$0xf]
        %v1065 = vld [vmem:[%s837] sm:$0x1]
        %v1067 = vlaneseq
        %v1068 = vshrl.u32 %v1067, 7
        %v1069 = vsub.s32 0, %v1068
        %v1070 = vrot.slane %v1065, %v1069
        %v1076 = vunpack.c.l.b16 %v1061
        %v1077 = vunpack.c.l.b16 %v1062
        %v1078 = vunpack.c.l.b16 %v1063
        %v1079 = vunpack.c.l.b16 %v1064
        %v1080 = vpack.c.b16 %v1077, %v1076
        %v1081 = vpack.c.b16 %v1079, %v1078
        %1084 = vmatprep.subr.bf16.mxu0 0
        %1085 = vmatpush1.bf16.msra.mxu0 %v1080
        %1086 = vmatprep.subr.bf16.mxu0 0
        %1087 = vmatpush1.bf16.msra.mxu0 %v1081
        %1088 = vmatprep.subr.bf16.mxu0 0
        %1089 = vmatpush1.bf16.msra.mxu0 0
        %1090 = vmatprep.subr.bf16.mxu0 0
        %1091 = vmatpush1.bf16.msra.mxu0 0
        %1092 = vmatprep.subr.bf16.mxu0 0
        %1093 = vmatpush1.bf16.msra.mxu0 0
        %1094 = vmatprep.subr.bf16.mxu0 0
        %1095 = vmatpush1.bf16.msra.mxu0 0
        %1096 = vmatprep.subr.bf16.mxu0 0
        %1097 = vmatpush1.bf16.msra.mxu0 0
        %1098 = vmatprep.subr.bf16.mxu0 0
        %1099 = vmatpush1.bf16.msra.mxu0 0
        %1100 = vmatprep.subr.bf16.mxu0 0
        %1101 = vmatpush1.bf16.msra.mxu0 0
        %1102 = vmatprep.subr.bf16.mxu0 0
        %1103 = vmatpush1.bf16.msra.mxu0 0
        %1104 = vmatprep.subr.bf16.mxu0 0
        %1105 = vmatpush1.bf16.msra.mxu0 0
        %1106 = vmatprep.subr.bf16.mxu0 0
        %1107 = vmatpush1.bf16.msra.mxu0 0
        %1108 = vmatprep.subr.bf16.mxu0 0
        %1109 = vmatpush1.bf16.msra.mxu0 0
        %1110 = vmatprep.subr.bf16.mxu0 0
        %1111 = vmatpush1.bf16.msra.mxu0 0
        %1112 = vmatprep.subr.bf16.mxu0 0
        %1113 = vmatpush1.bf16.msra.mxu0 0
        %1114 = vmatprep.subr.bf16.mxu0 0
        %1115 = vmatpush1.bf16.msra.mxu0 0
        %1116 = vmatprep.mubr.bf16.mxu0 0
        %1117 = vmatmul.mubr.bf16.gmra.mrb[0].mxu0 %v954
        %v1118 = vpop.f32.mrb[0].mxu0
        %v1119 = vadd.f32 %v1070, %v1118
        %v1120 = vpop.f32.mrb[0].mxu0
        %v1121 = vpop.f32.mrb[0].mxu0
        %v1122 = vadd.f32 %v1070, %v1121
        %v1123 = vpop.f32.mrb[0].mxu0
        %1124 = vdwg.mxu0
        %v1125 = vld [vmem:[%s842] sm:$0xf]
        %v1126 = vmul.f32 %v991, 0.35355338
        %v1127 = vld [vmem:[%s1] sm:$0x1]
        %v1129 = vlaneseq
        %v1130 = vshrl.u32 %v1129, 7
        %v1131 = vsub.s32 0, %v1130
        %v1132 = vrot.slane %v1127, %v1131
        %vm1134 = vcmask 64512
        %v1136 = vsel %vm1134, %v1126, 0
        %v1139 = vsel %vm1134, %v1055, 0
        %1141 = vmatprep.subr.mxu0 0.0
        %1142 = vmatpush1.xpose.msra.mxu0 %v1139
        %1143 = vmatprep.subr.mxu0 0.0
        %1144 = vmatpush1.xpose.msra.mxu0 0.0
        %1145 = vmatprep.subr.mxu0 0.0
        %1146 = vmatpush1.xpose.msra.mxu0 0.0
        %1147 = vmatprep.subr.mxu0 0.0
        %1148 = vmatpush1.xpose.msra.mxu0 0.0
        %1149 = vmatprep.subr.mxu0 0.0
        %1150 = vmatpush1.xpose.msra.mxu0 0.0
        %1151 = vmatprep.subr.mxu0 0.0
        %1152 = vmatpush1.xpose.msra.mxu0 0.0
        %1153 = vmatprep.subr.mxu0 0.0
        %1154 = vmatpush1.xpose.msra.mxu0 0.0
        %1155 = vmatprep.subr.mxu0 0.0
        %1156 = vmatpush1.xpose.msra.mxu0 0.0
        %1157 = vmatprep.subr.mxu0 0.0
        %1158 = vmatpush1.xpose.msra.mxu0 0.0
        %1159 = vmatprep.subr.mxu0 0.0
        %1160 = vmatpush1.xpose.msra.mxu0 0.0
        %1161 = vmatprep.subr.mxu0 0.0
        %1162 = vmatpush1.xpose.msra.mxu0 0.0
        %1163 = vmatprep.subr.mxu0 0.0
        %1164 = vmatpush1.xpose.msra.mxu0 0.0
        %1165 = vmatprep.subr.mxu0 0.0
        %1166 = vmatpush1.xpose.msra.mxu0 0.0
        %1167 = vmatprep.subr.mxu0 0.0
        %1168 = vmatpush1.xpose.msra.mxu0 0.0
        %1169 = vmatprep.subr.mxu0 0.0
        %1170 = vmatpush1.xpose.msra.mxu0 0.0
        %1171 = vmatprep.subr.mxu0 0.0
        %1172 = vmatpush1.xpose.msra.mxu0 0.0
        %1173 = vmatprep.subr.mxu0 0.0
        %1174 = vmatpush1.xpose.msra.mxu0 0.0
        %1175 = vmatprep.subr.mxu0 0.0
        %1176 = vmatpush1.xpose.msra.mxu0 0.0
        %1177 = vmatprep.subr.mxu0 0.0
        %1178 = vmatpush1.xpose.msra.mxu0 0.0
        %1179 = vmatprep.subr.mxu0 0.0
        %1180 = vmatpush1.xpose.msra.mxu0 0.0
        %1181 = vmatprep.subr.mxu0 0.0
        %1182 = vmatpush1.xpose.msra.mxu0 0.0
        %1183 = vmatprep.subr.mxu0 0.0
        %1184 = vmatpush1.xpose.msra.mxu0 0.0
        %1185 = vmatprep.subr.mxu0 0.0
        %1186 = vmatpush1.xpose.msra.mxu0 0.0
        %1187 = vmatprep.subr.mxu0 0.0
        %1188 = vmatpush1.xpose.msra.mxu0 0.0
        %1189 = vmatprep.subr.mxu0 0.0
        %1190 = vmatpush1.xpose.msra.mxu0 0.0
        %1191 = vmatprep.subr.mxu0 0.0
        %1192 = vmatpush1.xpose.msra.mxu0 0.0
        %1193 = vmatprep.subr.mxu0 0.0
        %1194 = vmatpush1.xpose.msra.mxu0 0.0
        %1195 = vmatprep.subr.mxu0 0.0
        %1196 = vmatpush1.xpose.msra.mxu0 0.0
        %1197 = vmatprep.subr.mxu0 0.0
        %1198 = vmatpush1.xpose.msra.mxu0 0.0
        %1199 = vmatprep.subr.mxu0 0.0
        %1200 = vmatpush1.xpose.msra.mxu0 0.0
        %1201 = vmatprep.subr.mxu0 0.0
        %1202 = vmatpush1.xpose.msra.mxu0 0.0
        %1203 = vmatprep.subr.mxu0 0.0
        %1204 = vmatpush1.xpose.msra.mxu0 0.0
        %1205 = vmatprep.mubr.f32.mxu0 0.0
        %1206 = vmatmul.mubr.f32.gmra.mrb[0].mxu0 %v1136
        %v1207 = vpop.f32.mrb[0].mxu0
        %v1208 = vadd.f32 %v1132, %v1207
        %v1209 = vpop.f32.mrb[0].mxu0
        %1210 = vdwg.mxu0
        %v1211 = vsel %vm1134, %v1208, -inf
        %1212 = vmax.xlane.f32.xlu0 %v1211
        %v1213 = vpop.xlane.xlu0 %1212
        %v1214 = vsub.f32 %v1208, %v1213
        %v1215 = vmul.f32 %v1214, 1.442695
        %v1216 = vpow.pop %v1215
        %v1217 = vsel %vm1134, %v1216, 0.0
        %1218 = vadd.xlane.f32.xlu0 %v1217
        %v1219 = vpop.xlane.xlu0 %1218
        %v1220 = vrcp.pop %v1219
        %v1221 = vmul.f32 %v1216, %v1220
        %v1223 = vsel %vm1134, %v1221, 0
        %1225 = vmatprep.subr.mxu0 0.0
        %1226 = vmatpush1.msra.mxu0 %v1119
        %1227 = vmatprep.subr.mxu0 0.0
        %1228 = vmatpush1.msra.mxu0 0.0
        %1229 = vmatprep.subr.mxu0 0.0
        %1230 = vmatpush1.msra.mxu0 0.0
        %1231 = vmatprep.subr.mxu0 0.0
        %1232 = vmatpush1.msra.mxu0 0.0
        %1233 = vmatprep.subr.mxu0 0.0
        %1234 = vmatpush1.msra.mxu0 0.0
        %1235 = vmatprep.subr.mxu0 0.0
        %1236 = vmatpush1.msra.mxu0 0.0
        %1237 = vmatprep.subr.mxu0 0.0
        %1238 = vmatpush1.msra.mxu0 0.0
        %1239 = vmatprep.subr.mxu0 0.0
        %1240 = vmatpush1.msra.mxu0 0.0
        %1241 = vmatprep.subr.mxu0 0.0
        %1242 = vmatpush1.msra.mxu0 0.0
        %1243 = vmatprep.subr.mxu0 0.0
        %1244 = vmatpush1.msra.mxu0 0.0
        %1245 = vmatprep.subr.mxu0 0.0
        %1246 = vmatpush1.msra.mxu0 0.0
        %1247 = vmatprep.subr.mxu0 0.0
        %1248 = vmatpush1.msra.mxu0 0.0
        %1249 = vmatprep.subr.mxu0 0.0
        %1250 = vmatpush1.msra.mxu0 0.0
        %1251 = vmatprep.subr.mxu0 0.0
        %1252 = vmatpush1.msra.mxu0 0.0
        %1253 = vmatprep.subr.mxu0 0.0
        %1254 = vmatpush1.msra.mxu0 0.0
        %1255 = vmatprep.subr.mxu0 0.0
        %1256 = vmatpush1.msra.mxu0 0.0
        %1257 = vmatprep.subr.mxu0 0.0
        %1258 = vmatpush1.msra.mxu0 0.0
        %1259 = vmatprep.subr.mxu0 0.0
        %1260 = vmatpush1.msra.mxu0 0.0
        %1261 = vmatprep.subr.mxu0 0.0
        %1262 = vmatpush1.msra.mxu0 0.0
        %1263 = vmatprep.subr.mxu0 0.0
        %1264 = vmatpush1.msra.mxu0 0.0
        %1265 = vmatprep.subr.mxu0 0.0
        %1266 = vmatpush1.msra.mxu0 0.0
        %1267 = vmatprep.subr.mxu0 0.0
        %1268 = vmatpush1.msra.mxu0 0.0
        %1269 = vmatprep.subr.mxu0 0.0
        %1270 = vmatpush1.msra.mxu0 0.0
        %1271 = vmatprep.subr.mxu0 0.0
        %1272 = vmatpush1.msra.mxu0 0.0
        %1273 = vmatprep.subr.mxu0 0.0
        %1274 = vmatpush1.msra.mxu0 0.0
        %1275 = vmatprep.subr.mxu0 0.0
        %1276 = vmatpush1.msra.mxu0 0.0
        %1277 = vmatprep.subr.mxu0 0.0
        %1278 = vmatpush1.msra.mxu0 0.0
        %1279 = vmatprep.subr.mxu0 0.0
        %1280 = vmatpush1.msra.mxu0 0.0
        %1281 = vmatprep.subr.mxu0 0.0
        %1282 = vmatpush1.msra.mxu0 0.0
        %1283 = vmatprep.subr.mxu0 0.0
        %1284 = vmatpush1.msra.mxu0 0.0
        %1285 = vmatprep.subr.mxu0 0.0
        %1286 = vmatpush1.msra.mxu0 0.0
        %1287 = vmatprep.subr.mxu0 0.0
        %1288 = vmatpush1.msra.mxu0 0.0
        %1289 = vmatprep.mubr.f32.mxu0 0.0
        %1290 = vmatmul.mubr.f32.gmra.mrb[0].mxu0 %v1223
        %v1291 = vpop.f32.mrb[0].mxu0
        %v1292 = vadd.f32 0.0, %v1291
        %v1293 = vpop.f32.mrb[0].mxu0
        %1294 = vdwg.mxu0
        %v1295 = vpack.c.bf16 %v1292, %v1292
        %v1296 = vmul.f32 %v994, 0.35355338
        %s1297 = scalar_lea.vmem %s1, 1
        %v1298 = vld [vmem:[%s1297] sm:$0x1]
        %v1300 = vlaneseq
        %v1301 = vshrl.u32 %v1300, 7
        %v1302 = vsub.s32 0, %v1301
        %v1303 = vrot.slane %v1298, %v1302
        %v1306 = vsel %vm1134, %v1296, 0
        %v1309 = vsel %vm1134, %v1058, 0
        %1311 = vmatprep.subr.mxu0 0.0
        %1312 = vmatpush1.xpose.msra.mxu0 %v1309
        %1313 = vmatprep.subr.mxu0 0.0
        %1314 = vmatpush1.xpose.msra.mxu0 0.0
        %1315 = vmatprep.subr.mxu0 0.0
        %1316 = vmatpush1.xpose.msra.mxu0 0.0
        %1317 = vmatprep.subr.mxu0 0.0
        %1318 = vmatpush1.xpose.msra.mxu0 0.0
        %1319 = vmatprep.subr.mxu0 0.0
        %1320 = vmatpush1.xpose.msra.mxu0 0.0
        %1321 = vmatprep.subr.mxu0 0.0
        %1322 = vmatpush1.xpose.msra.mxu0 0.0
        %1323 = vmatprep.subr.mxu0 0.0
        %1324 = vmatpush1.xpose.msra.mxu0 0.0
        %1325 = vmatprep.subr.mxu0 0.0
        %1326 = vmatpush1.xpose.msra.mxu0 0.0
        %1327 = vmatprep.subr.mxu0 0.0
        %1328 = vmatpush1.xpose.msra.mxu0 0.0
        %1329 = vmatprep.subr.mxu0 0.0
        %1330 = vmatpush1.xpose.msra.mxu0 0.0
        %1331 = vmatprep.subr.mxu0 0.0
        %1332 = vmatpush1.xpose.msra.mxu0 0.0
        %1333 = vmatprep.subr.mxu0 0.0
        %1334 = vmatpush1.xpose.msra.mxu0 0.0
        %1335 = vmatprep.subr.mxu0 0.0
        %1336 = vmatpush1.xpose.msra.mxu0 0.0
        %1337 = vmatprep.subr.mxu0 0.0
        %1338 = vmatpush1.xpose.msra.mxu0 0.0
        %1339 = vmatprep.subr.mxu0 0.0
        %1340 = vmatpush1.xpose.msra.mxu0 0.0
        %1341 = vmatprep.subr.mxu0 0.0
        %1342 = vmatpush1.xpose.msra.mxu0 0.0
        %1343 = vmatprep.subr.mxu0 0.0
        %1344 = vmatpush1.xpose.msra.mxu0 0.0
        %1345 = vmatprep.subr.mxu0 0.0
        %1346 = vmatpush1.xpose.msra.mxu0 0.0
        %1347 = vmatprep.subr.mxu0 0.0
        %1348 = vmatpush1.xpose.msra.mxu0 0.0
        %1349 = vmatprep.subr.mxu0 0.0
        %1350 = vmatpush1.xpose.msra.mxu0 0.0
        %1351 = vmatprep.subr.mxu0 0.0
        %1352 = vmatpush1.xpose.msra.mxu0 0.0
        %1353 = vmatprep.subr.mxu0 0.0
        %1354 = vmatpush1.xpose.msra.mxu0 0.0
        %1355 = vmatprep.subr.mxu0 0.0
        %1356 = vmatpush1.xpose.msra.mxu0 0.0
        %1357 = vmatprep.subr.mxu0 0.0
        %1358 = vmatpush1.xpose.msra.mxu0 0.0
        %1359 = vmatprep.subr.mxu0 0.0
        %1360 = vmatpush1.xpose.msra.mxu0 0.0
        %1361 = vmatprep.subr.mxu0 0.0
        %1362 = vmatpush1.xpose.msra.mxu0 0.0
        %1363 = vmatprep.subr.mxu0 0.0
        %1364 = vmatpush1.xpose.msra.mxu0 0.0
        %1365 = vmatprep.subr.mxu0 0.0
        %1366 = vmatpush1.xpose.msra.mxu0 0.0
        %1367 = vmatprep.subr.mxu0 0.0
        %1368 = vmatpush1.xpose.msra.mxu0 0.0
        %1369 = vmatprep.subr.mxu0 0.0
        %1370 = vmatpush1.xpose.msra.mxu0 0.0
        %1371 = vmatprep.subr.mxu0 0.0
        %1372 = vmatpush1.xpose.msra.mxu0 0.0
        %1373 = vmatprep.subr.mxu0 0.0
        %1374 = vmatpush1.xpose.msra.mxu0 0.0
        %1375 = vmatprep.mubr.f32.mxu0 0.0
        %1376 = vmatmul.mubr.f32.gmra.mrb[0].mxu0 %v1306
        %v1377 = vpop.f32.mrb[0].mxu0
        %v1378 = vadd.f32 %v1303, %v1377
        %v1379 = vpop.f32.mrb[0].mxu0
        %1380 = vdwg.mxu0
        %v1381 = vsel %vm1134, %v1378, -inf
        %1382 = vmax.xlane.f32.xlu0 %v1381
        %v1383 = vpop.xlane.xlu0 %1382
        %v1384 = vsub.f32 %v1378, %v1383
        %v1385 = vmul.f32 %v1384, 1.442695
        %v1386 = vpow.pop %v1385
        %v1387 = vsel %vm1134, %v1386, 0.0
        %1388 = vadd.xlane.f32.xlu0 %v1387
        %v1389 = vpop.xlane.xlu0 %1388
        %v1390 = vrcp.pop %v1389
        %v1391 = vmul.f32 %v1386, %v1390
        %v1393 = vsel %vm1134, %v1391, 0
        %1395 = vmatprep.subr.mxu0 0.0
        %1396 = vmatpush1.msra.mxu0 %v1122
        %1397 = vmatprep.subr.mxu0 0.0
        %1398 = vmatpush1.msra.mxu0 0.0
        %1399 = vmatprep.subr.mxu0 0.0
        %1400 = vmatpush1.msra.mxu0 0.0
        %1401 = vmatprep.subr.mxu0 0.0
        %1402 = vmatpush1.msra.mxu0 0.0
        %1403 = vmatprep.subr.mxu0 0.0
        %1404 = vmatpush1.msra.mxu0 0.0
        %1405 = vmatprep.subr.mxu0 0.0
        %1406 = vmatpush1.msra.mxu0 0.0
        %1407 = vmatprep.subr.mxu0 0.0
        %1408 = vmatpush1.msra.mxu0 0.0
        %1409 = vmatprep.subr.mxu0 0.0
        %1410 = vmatpush1.msra.mxu0 0.0
        %1411 = vmatprep.subr.mxu0 0.0
        %1412 = vmatpush1.msra.mxu0 0.0
        %1413 = vmatprep.subr.mxu0 0.0
        %1414 = vmatpush1.msra.mxu0 0.0
        %1415 = vmatprep.subr.mxu0 0.0
        %1416 = vmatpush1.msra.mxu0 0.0
        %1417 = vmatprep.subr.mxu0 0.0
        %1418 = vmatpush1.msra.mxu0 0.0
        %1419 = vmatprep.subr.mxu0 0.0
        %1420 = vmatpush1.msra.mxu0 0.0
        %1421 = vmatprep.subr.mxu0 0.0
        %1422 = vmatpush1.msra.mxu0 0.0
        %1423 = vmatprep.subr.mxu0 0.0
        %1424 = vmatpush1.msra.mxu0 0.0
        %1425 = vmatprep.subr.mxu0 0.0
        %1426 = vmatpush1.msra.mxu0 0.0
        %1427 = vmatprep.subr.mxu0 0.0
        %1428 = vmatpush1.msra.mxu0 0.0
        %1429 = vmatprep.subr.mxu0 0.0
        %1430 = vmatpush1.msra.mxu0 0.0
        %1431 = vmatprep.subr.mxu0 0.0
        %1432 = vmatpush1.msra.mxu0 0.0
        %1433 = vmatprep.subr.mxu0 0.0
        %1434 = vmatpush1.msra.mxu0 0.0
        %1435 = vmatprep.subr.mxu0 0.0
        %1436 = vmatpush1.msra.mxu0 0.0
        %1437 = vmatprep.subr.mxu0 0.0
        %1438 = vmatpush1.msra.mxu0 0.0
        %1439 = vmatprep.subr.mxu0 0.0
        %1440 = vmatpush1.msra.mxu0 0.0
        %1441 = vmatprep.subr.mxu0 0.0
        %1442 = vmatpush1.msra.mxu0 0.0
        %1443 = vmatprep.subr.mxu0 0.0
        %1444 = vmatpush1.msra.mxu0 0.0
        %1445 = vmatprep.subr.mxu0 0.0
        %1446 = vmatpush1.msra.mxu0 0.0
        %1447 = vmatprep.subr.mxu0 0.0
        %1448 = vmatpush1.msra.mxu0 0.0
        %1449 = vmatprep.subr.mxu0 0.0
        %1450 = vmatpush1.msra.mxu0 0.0
        %1451 = vmatprep.subr.mxu0 0.0
        %1452 = vmatpush1.msra.mxu0 0.0
        %1453 = vmatprep.subr.mxu0 0.0
        %1454 = vmatpush1.msra.mxu0 0.0
        %1455 = vmatprep.subr.mxu0 0.0
        %1456 = vmatpush1.msra.mxu0 0.0
        %1457 = vmatprep.subr.mxu0 0.0
        %1458 = vmatpush1.msra.mxu0 0.0
        %1459 = vmatprep.mubr.f32.mxu0 0.0
        %1460 = vmatmul.mubr.f32.gmra.mrb[0].mxu0 %v1393
        %v1461 = vpop.f32.mrb[0].mxu0
        %v1462 = vadd.f32 0.0, %v1461
        %v1463 = vpop.f32.mrb[0].mxu0
        %1464 = vdwg.mxu0
        %v1465 = vpack.c.bf16 %v1462, %v1462
        %s1466 = scalar_lea.vmem %s815, 16
        %v1467 = vld [vmem:[%s1466] sm:$0xf]
        %v1468 = vld [vmem:[%s1466 + $0x4] sm:$0xf]
        %v1469 = vld [vmem:[%s1466 + $0x8] sm:$0xf]
        %v1470 = vld [vmem:[%s1466 + $0xc] sm:$0xf]
        %s1471 = scalar_lea.vmem %s829, 1
        %v1472 = vld [vmem:[%s1471] sm:$0x1]
        %v1474 = vlaneseq
        %v1475 = vshrl.u32 %v1474, 7
        %v1476 = vsub.s32 0, %v1475
        %v1477 = vrot.slane %v1472, %v1476
        %v1483 = vunpack.c.l.b16 %v1467
        %v1484 = vunpack.c.l.b16 %v1468
        %v1485 = vunpack.c.l.b16 %v1469
        %v1486 = vunpack.c.l.b16 %v1470
        %v1487 = vpack.c.b16 %v1484, %v1483
        %v1488 = vpack.c.b16 %v1486, %v1485
        %1491 = vmatprep.subr.bf16.mxu0 0
        %1492 = vmatpush1.bf16.msra.mxu0 %v1487
        %1493 = vmatprep.subr.bf16.mxu0 0
        %1494 = vmatpush1.bf16.msra.mxu0 %v1488
        %1495 = vmatprep.subr.bf16.mxu0 0
        %1496 = vmatpush1.bf16.msra.mxu0 0
        %1497 = vmatprep.subr.bf16.mxu0 0
        %1498 = vmatpush1.bf16.msra.mxu0 0
        %1499 = vmatprep.subr.bf16.mxu0 0
        %1500 = vmatpush1.bf16.msra.mxu0 0
        %1501 = vmatprep.subr.bf16.mxu0 0
        %1502 = vmatpush1.bf16.msra.mxu0 0
        %1503 = vmatprep.subr.bf16.mxu0 0
        %1504 = vmatpush1.bf16.msra.mxu0 0
        %1505 = vmatprep.subr.bf16.mxu0 0
        %1506 = vmatpush1.bf16.msra.mxu0 0
        %1507 = vmatprep.subr.bf16.mxu0 0
        %1508 = vmatpush1.bf16.msra.mxu0 0
        %1509 = vmatprep.subr.bf16.mxu0 0
        %1510 = vmatpush1.bf16.msra.mxu0 0
        %1511 = vmatprep.subr.bf16.mxu0 0
        %1512 = vmatpush1.bf16.msra.mxu0 0
        %1513 = vmatprep.subr.bf16.mxu0 0
        %1514 = vmatpush1.bf16.msra.mxu0 0
        %1515 = vmatprep.subr.bf16.mxu0 0
        %1516 = vmatpush1.bf16.msra.mxu0 0
        %1517 = vmatprep.subr.bf16.mxu0 0
        %1518 = vmatpush1.bf16.msra.mxu0 0
        %1519 = vmatprep.subr.bf16.mxu0 0
        %1520 = vmatpush1.bf16.msra.mxu0 0
        %1521 = vmatprep.subr.bf16.mxu0 0
        %1522 = vmatpush1.bf16.msra.mxu0 0
        %1523 = vmatprep.mubr.bf16.mxu0 0
        %1524 = vmatmul.mubr.bf16.gmra.mrb[0].mxu0 %v954
        %v1525 = vpop.f32.mrb[0].mxu0
        %v1526 = vadd.f32 %v1477, %v1525
        %v1527 = vpop.f32.mrb[0].mxu0
        %v1528 = vpop.f32.mrb[0].mxu0
        %v1529 = vadd.f32 %v1477, %v1528
        %v1530 = vpop.f32.mrb[0].mxu0
        %1531 = vdwg.mxu0
        %s1532 = scalar_lea.vmem %s820, 16
        %v1533 = vld [vmem:[%s1532] sm:$0xf]
        %v1534 = vld [vmem:[%s1532 + $0x4] sm:$0xf]
        %v1535 = vld [vmem:[%s1532 + $0x8] sm:$0xf]
        %v1536 = vld [vmem:[%s1532 + $0xc] sm:$0xf]
        %s1537 = scalar_lea.vmem %s833, 1
        %v1538 = vld [vmem:[%s1537] sm:$0x1]
        %v1540 = vlaneseq
        %v1541 = vshrl.u32 %v1540, 7
        %v1542 = vsub.s32 0, %v1541
        %v1543 = vrot.slane %v1538, %v1542
        %v1549 = vunpack.c.l.b16 %v1533
        %v1550 = vunpack.c.l.b16 %v1534
        %v1551 = vunpack.c.l.b16 %v1535
        %v1552 = vunpack.c.l.b16 %v1536
        %v1553 = vpack.c.b16 %v1550, %v1549
        %v1554 = vpack.c.b16 %v1552, %v1551
        %1557 = vmatprep.subr.bf16.mxu0 0
        %1558 = vmatpush1.bf16.msra.mxu0 %v1553
        %1559 = vmatprep.subr.bf16.mxu0 0
        %1560 = vmatpush1.bf16.msra.mxu0 %v1554
        %1561 = vmatprep.subr.bf16.mxu0 0
        %1562 = vmatpush1.bf16.msra.mxu0 0
        %1563 = vmatprep.subr.bf16.mxu0 0
        %1564 = vmatpush1.bf16.msra.mxu0 0
        %1565 = vmatprep.subr.bf16.mxu0 0
        %1566 = vmatpush1.bf16.msra.mxu0 0
        %1567 = vmatprep.subr.bf16.mxu0 0
        %1568 = vmatpush1.bf16.msra.mxu0 0
        %1569 = vmatprep.subr.bf16.mxu0 0
        %1570 = vmatpush1.bf16.msra.mxu0 0
        %1571 = vmatprep.subr.bf16.mxu0 0
        %1572 = vmatpush1.bf16.msra.mxu0 0
        %1573 = vmatprep.subr.bf16.mxu0 0
        %1574 = vmatpush1.bf16.msra.mxu0 0
        %1575 = vmatprep.subr.bf16.mxu0 0
        %1576 = vmatpush1.bf16.msra.mxu0 0
        %1577 = vmatprep.subr.bf16.mxu0 0
        %1578 = vmatpush1.bf16.msra.mxu0 0
        %1579 = vmatprep.subr.bf16.mxu0 0
        %1580 = vmatpush1.bf16.msra.mxu0 0
        %1581 = vmatprep.subr.bf16.mxu0 0
        %1582 = vmatpush1.bf16.msra.mxu0 0
        %1583 = vmatprep.subr.bf16.mxu0 0
        %1584 = vmatpush1.bf16.msra.mxu0 0
        %1585 = vmatprep.subr.bf16.mxu0 0
        %1586 = vmatpush1.bf16.msra.mxu0 0
        %1587 = vmatprep.subr.bf16.mxu0 0
        %1588 = vmatpush1.bf16.msra.mxu0 0
        %1589 = vmatprep.mubr.bf16.mxu0 0
        %1590 = vmatmul.mubr.bf16.gmra.mrb[0].mxu0 %v954
        %v1591 = vpop.f32.mrb[0].mxu0
        %v1592 = vadd.f32 %v1543, %v1591
        %v1593 = vpop.f32.mrb[0].mxu0
        %v1594 = vpop.f32.mrb[0].mxu0
        %v1595 = vadd.f32 %v1543, %v1594
        %v1596 = vpop.f32.mrb[0].mxu0
        %1597 = vdwg.mxu0
        %s1598 = scalar_lea.vmem %s825, 16
        %v1599 = vld [vmem:[%s1598] sm:$0xf]
        %v1600 = vld [vmem:[%s1598 + $0x4] sm:$0xf]
        %v1601 = vld [vmem:[%s1598 + $0x8] sm:$0xf]
        %v1602 = vld [vmem:[%s1598 + $0xc] sm:$0xf]
        %s1603 = scalar_lea.vmem %s837, 1
        %v1604 = vld [vmem:[%s1603] sm:$0x1]
        %v1606 = vlaneseq
        %v1607 = vshrl.u32 %v1606, 7
        %v1608 = vsub.s32 0, %v1607
        %v1609 = vrot.slane %v1604, %v1608
        %v1615 = vunpack.c.l.b16 %v1599
        %v1616 = vunpack.c.l.b16 %v1600
        %v1617 = vunpack.c.l.b16 %v1601
        %v1618 = vunpack.c.l.b16 %v1602
        %v1619 = vpack.c.b16 %v1616, %v1615
        %v1620 = vpack.c.b16 %v1618, %v1617
        %1623 = vmatprep.subr.bf16.mxu0 0
        %1624 = vmatpush1.bf16.msra.mxu0 %v1619
        %1625 = vmatprep.subr.bf16.mxu0 0
        %1626 = vmatpush1.bf16.msra.mxu0 %v1620
        %1627 = vmatprep.subr.bf16.mxu0 0
        %1628 = vmatpush1.bf16.msra.mxu0 0
        %1629 = vmatprep.subr.bf16.mxu0 0
        %1630 = vmatpush1.bf16.msra.mxu0 0
        %1631 = vmatprep.subr.bf16.mxu0 0
        %1632 = vmatpush1.bf16.msra.mxu0 0
        %1633 = vmatprep.subr.bf16.mxu0 0
        %1634 = vmatpush1.bf16.msra.mxu0 0
        %1635 = vmatprep.subr.bf16.mxu0 0
        %1636 = vmatpush1.bf16.msra.mxu0 0
        %1637 = vmatprep.subr.bf16.mxu0 0
        %1638 = vmatpush1.bf16.msra.mxu0 0
        %1639 = vmatprep.subr.bf16.mxu0 0
        %1640 = vmatpush1.bf16.msra.mxu0 0
        %1641 = vmatprep.subr.bf16.mxu0 0
        %1642 = vmatpush1.bf16.msra.mxu0 0
        %1643 = vmatprep.subr.bf16.mxu0 0
        %1644 = vmatpush1.bf16.msra.mxu0 0
        %1645 = vmatprep.subr.bf16.mxu0 0
        %1646 = vmatpush1.bf16.msra.mxu0 0
        %1647 = vmatprep.subr.bf16.mxu0 0
        %1648 = vmatpush1.bf16.msra.mxu0 0
        %1649 = vmatprep.subr.bf16.mxu0 0
        %1650 = vmatpush1.bf16.msra.mxu0 0
        %1651 = vmatprep.subr.bf16.mxu0 0
        %1652 = vmatpush1.bf16.msra.mxu0 0
        %1653 = vmatprep.subr.bf16.mxu0 0
        %1654 = vmatpush1.bf16.msra.mxu0 0
        %1655 = vmatprep.mubr.bf16.mxu0 0
        %1656 = vmatmul.mubr.bf16.gmra.mrb[0].mxu0 %v954
        %v1657 = vpop.f32.mrb[0].mxu0
        %v1658 = vadd.f32 %v1609, %v1657
        %v1659 = vpop.f32.mrb[0].mxu0
        %v1660 = vpop.f32.mrb[0].mxu0
        %v1661 = vadd.f32 %v1609, %v1660
        %v1662 = vpop.f32.mrb[0].mxu0
        %1663 = vdwg.mxu0
        %s1664 = scalar_lea.vmem %s842, 4
        %v1665 = vld [vmem:[%s1664] sm:$0xf]
        %v1666 = vmul.f32 %v1526, 0.35355338
        %v1668 = vsel %vm1134, %v1666, 0
        %v1671 = vsel %vm1134, %v1592, 0
        %1673 = vmatprep.subr.mxu0 0.0
        %1674 = vmatpush1.xpose.msra.mxu0 %v1671
        %1675 = vmatprep.subr.mxu0 0.0
        %1676 = vmatpush1.xpose.msra.mxu0 0.0
        %1677 = vmatprep.subr.mxu0 0.0
        %1678 = vmatpush1.xpose.msra.mxu0 0.0
        %1679 = vmatprep.subr.mxu0 0.0
        %1680 = vmatpush1.xpose.msra.mxu0 0.0
        %1681 = vmatprep.subr.mxu0 0.0
        %1682 = vmatpush1.xpose.msra.mxu0 0.0
        %1683 = vmatprep.subr.mxu0 0.0
        %1684 = vmatpush1.xpose.msra.mxu0 0.0
        %1685 = vmatprep.subr.mxu0 0.0
        %1686 = vmatpush1.xpose.msra.mxu0 0.0
        %1687 = vmatprep.subr.mxu0 0.0
        %1688 = vmatpush1.xpose.msra.mxu0 0.0
        %1689 = vmatprep.subr.mxu0 0.0
        %1690 = vmatpush1.xpose.msra.mxu0 0.0
        %1691 = vmatprep.subr.mxu0 0.0
        %1692 = vmatpush1.xpose.msra.mxu0 0.0
        %1693 = vmatprep.subr.mxu0 0.0
        %1694 = vmatpush1.xpose.msra.mxu0 0.0
        %1695 = vmatprep.subr.mxu0 0.0
        %1696 = vmatpush1.xpose.msra.mxu0 0.0
        %1697 = vmatprep.subr.mxu0 0.0
        %1698 = vmatpush1.xpose.msra.mxu0 0.0
        %1699 = vmatprep.subr.mxu0 0.0
        %1700 = vmatpush1.xpose.msra.mxu0 0.0
        %1701 = vmatprep.subr.mxu0 0.0
        %1702 = vmatpush1.xpose.msra.mxu0 0.0
        %1703 = vmatprep.subr.mxu0 0.0
        %1704 = vmatpush1.xpose.msra.mxu0 0.0
        %1705 = vmatprep.subr.mxu0 0.0
        %1706 = vmatpush1.xpose.msra.mxu0 0.0
        %1707 = vmatprep.subr.mxu0 0.0
        %1708 = vmatpush1.xpose.msra.mxu0 0.0
        %1709 = vmatprep.subr.mxu0 0.0
        %1710 = vmatpush1.xpose.msra.mxu0 0.0
        %1711 = vmatprep.subr.mxu0 0.0
        %1712 = vmatpush1.xpose.msra.mxu0 0.0
        %1713 = vmatprep.subr.mxu0 0.0
        %1714 = vmatpush1.xpose.msra.mxu0 0.0
        %1715 = vmatprep.subr.mxu0 0.0
        %1716 = vmatpush1.xpose.msra.mxu0 0.0
        %1717 = vmatprep.subr.mxu0 0.0
        %1718 = vmatpush1.xpose.msra.mxu0 0.0
        %1719 = vmatprep.subr.mxu0 0.0
        %1720 = vmatpush1.xpose.msra.mxu0 0.0
        %1721 = vmatprep.subr.mxu0 0.0
        %1722 = vmatpush1.xpose.msra.mxu0 0.0
        %1723 = vmatprep.subr.mxu0 0.0
        %1724 = vmatpush1.xpose.msra.mxu0 0.0
        %1725 = vmatprep.subr.mxu0 0.0
        %1726 = vmatpush1.xpose.msra.mxu0 0.0
        %1727 = vmatprep.subr.mxu0 0.0
        %1728 = vmatpush1.xpose.msra.mxu0 0.0
        %1729 = vmatprep.subr.mxu0 0.0
        %1730 = vmatpush1.xpose.msra.mxu0 0.0
        %1731 = vmatprep.subr.mxu0 0.0
        %1732 = vmatpush1.xpose.msra.mxu0 0.0
        %1733 = vmatprep.subr.mxu0 0.0
        %1734 = vmatpush1.xpose.msra.mxu0 0.0
        %1735 = vmatprep.subr.mxu0 0.0
        %1736 = vmatpush1.xpose.msra.mxu0 0.0
        %1737 = vmatprep.mubr.f32.mxu0 0.0
        %1738 = vmatmul.mubr.f32.gmra.mrb[0].mxu0 %v1668
        %v1739 = vpop.f32.mrb[0].mxu0
        %v1740 = vadd.f32 %v1132, %v1739
        %v1741 = vpop.f32.mrb[0].mxu0
        %1742 = vdwg.mxu0
        %v1743 = vsel %vm1134, %v1740, -inf
        %1744 = vmax.xlane.f32.xlu0 %v1743
        %v1745 = vpop.xlane.xlu0 %1744
        %v1746 = vsub.f32 %v1740, %v1745
        %v1747 = vmul.f32 %v1746, 1.442695
        %v1748 = vpow.pop %v1747
        %v1749 = vsel %vm1134, %v1748, 0.0
        %1750 = vadd.xlane.f32.xlu0 %v1749
        %v1751 = vpop.xlane.xlu0 %1750
        %v1752 = vrcp.pop %v1751
        %v1753 = vmul.f32 %v1748, %v1752
        %v1755 = vsel %vm1134, %v1753, 0
        %1757 = vmatprep.subr.mxu0 0.0
        %1758 = vmatpush1.msra.mxu0 %v1658
        %1759 = vmatprep.subr.mxu0 0.0
        %1760 = vmatpush1.msra.mxu0 0.0
        %1761 = vmatprep.subr.mxu0 0.0
        %1762 = vmatpush1.msra.mxu0 0.0
        %1763 = vmatprep.subr.mxu0 0.0
        %1764 = vmatpush1.msra.mxu0 0.0
        %1765 = vmatprep.subr.mxu0 0.0
        %1766 = vmatpush1.msra.mxu0 0.0
        %1767 = vmatprep.subr.mxu0 0.0
        %1768 = vmatpush1.msra.mxu0 0.0
        %1769 = vmatprep.subr.mxu0 0.0
        %1770 = vmatpush1.msra.mxu0 0.0
        %1771 = vmatprep.subr.mxu0 0.0
        %1772 = vmatpush1.msra.mxu0 0.0
        %1773 = vmatprep.subr.mxu0 0.0
        %1774 = vmatpush1.msra.mxu0 0.0
        %1775 = vmatprep.subr.mxu0 0.0
        %1776 = vmatpush1.msra.mxu0 0.0
        %1777 = vmatprep.subr.mxu0 0.0
        %1778 = vmatpush1.msra.mxu0 0.0
        %1779 = vmatprep.subr.mxu0 0.0
        %1780 = vmatpush1.msra.mxu0 0.0
        %1781 = vmatprep.subr.mxu0 0.0
        %1782 = vmatpush1.msra.mxu0 0.0
        %1783 = vmatprep.subr.mxu0 0.0
        %1784 = vmatpush1.msra.mxu0 0.0
        %1785 = vmatprep.subr.mxu0 0.0
        %1786 = vmatpush1.msra.mxu0 0.0
        %1787 = vmatprep.subr.mxu0 0.0
        %1788 = vmatpush1.msra.mxu0 0.0
        %1789 = vmatprep.subr.mxu0 0.0
        %1790 = vmatpush1.msra.mxu0 0.0
        %1791 = vmatprep.subr.mxu0 0.0
        %1792 = vmatpush1.msra.mxu0 0.0
        %1793 = vmatprep.subr.mxu0 0.0
        %1794 = vmatpush1.msra.mxu0 0.0
        %1795 = vmatprep.subr.mxu0 0.0
        %1796 = vmatpush1.msra.mxu0 0.0
        %1797 = vmatprep.subr.mxu0 0.0
        %1798 = vmatpush1.msra.mxu0 0.0
        %1799 = vmatprep.subr.mxu0 0.0
        %1800 = vmatpush1.msra.mxu0 0.0
        %1801 = vmatprep.subr.mxu0 0.0
        %1802 = vmatpush1.msra.mxu0 0.0
        %1803 = vmatprep.subr.mxu0 0.0
        %1804 = vmatpush1.msra.mxu0 0.0
        %1805 = vmatprep.subr.mxu0 0.0
        %1806 = vmatpush1.msra.mxu0 0.0
        %1807 = vmatprep.subr.mxu0 0.0
        %1808 = vmatpush1.msra.mxu0 0.0
        %1809 = vmatprep.subr.mxu0 0.0
        %1810 = vmatpush1.msra.mxu0 0.0
        %1811 = vmatprep.subr.mxu0 0.0
        %1812 = vmatpush1.msra.mxu0 0.0
        %1813 = vmatprep.subr.mxu0 0.0
        %1814 = vmatpush1.msra.mxu0 0.0
        %1815 = vmatprep.subr.mxu0 0.0
        %1816 = vmatpush1.msra.mxu0 0.0
        %1817 = vmatprep.subr.mxu0 0.0
        %1818 = vmatpush1.msra.mxu0 0.0
        %1819 = vmatprep.subr.mxu0 0.0
        %1820 = vmatpush1.msra.mxu0 0.0
        %1821 = vmatprep.mubr.f32.mxu0 0.0
        %1822 = vmatmul.mubr.f32.gmra.mrb[0].mxu0 %v1755
        %v1823 = vpop.f32.mrb[0].mxu0
        %v1824 = vadd.f32 0.0, %v1823
        %v1825 = vpop.f32.mrb[0].mxu0
        %1826 = vdwg.mxu0
        %v1827 = vpack.c.bf16 %v1824, %v1824
        %v1829 = vsel %vm1134, %v1827, 0
        %vm1831 = vcmask 1043456
        %v1833 = vsel %vm1831, %v1665, 0
        %1835 = vmatprep.subr.bf16.mxu0 0
        %1836 = vmatpush1.bf16.msra.mxu0 %v1833
        %1837 = vmatprep.subr.bf16.mxu0 0
        %1838 = vmatpush1.bf16.msra.mxu0 0
        %1839 = vmatprep.subr.bf16.mxu0 0
        %1840 = vmatpush1.bf16.msra.mxu0 0
        %1841 = vmatprep.subr.bf16.mxu0 0
        %1842 = vmatpush1.bf16.msra.mxu0 0
        %1843 = vmatprep.subr.bf16.mxu0 0
        %1844 = vmatpush1.bf16.msra.mxu0 0
        %1845 = vmatprep.subr.bf16.mxu0 0
        %1846 = vmatpush1.bf16.msra.mxu0 0
        %1847 = vmatprep.subr.bf16.mxu0 0
        %1848 = vmatpush1.bf16.msra.mxu0 0
        %1849 = vmatprep.subr.bf16.mxu0 0
        %1850 = vmatpush1.bf16.msra.mxu0 0
        %1851 = vmatprep.subr.bf16.mxu0 0
        %1852 = vmatpush1.bf16.msra.mxu0 0
        %1853 = vmatprep.subr.bf16.mxu0 0
        %1854 = vmatpush1.bf16.msra.mxu0 0
        %1855 = vmatprep.subr.bf16.mxu0 0
        %1856 = vmatpush1.bf16.msra.mxu0 0
        %1857 = vmatprep.subr.bf16.mxu0 0
        %1858 = vmatpush1.bf16.msra.mxu0 0
        %1859 = vmatprep.subr.bf16.mxu0 0
        %1860 = vmatpush1.bf16.msra.mxu0 0
        %1861 = vmatprep.subr.bf16.mxu0 0
        %1862 = vmatpush1.bf16.msra.mxu0 0
        %1863 = vmatprep.subr.bf16.mxu0 0
        %1864 = vmatpush1.bf16.msra.mxu0 0
        %1865 = vmatprep.subr.bf16.mxu0 0
        %1866 = vmatpush1.bf16.msra.mxu0 0
        %1867 = vmatprep.mubr.bf16.mxu0 0
        %1868 = vmatmul.mubr.bf16.gmra.mrb[0].mxu0 %v1829
        %v1869 = vpop.f32.mrb[0].mxu0
        %v1870 = vadd.f32 0.0, %v1869
        %v1871 = vpop.f32.mrb[0].mxu0
        %v1872 = vpop.f32.mrb[0].mxu0
        %v1873 = vpop.f32.mrb[0].mxu0
        %1874 = vdwg.mxu0
        %v1876 = vsel %vm1134, %v1295, 0
        %v1879 = vsel %vm1831, %v1125, 0
        %1881 = vmatprep.subr.bf16.mxu0 0
        %1882 = vmatpush1.bf16.msra.mxu0 %v1879
        %1883 = vmatprep.subr.bf16.mxu0 0
        %1884 = vmatpush1.bf16.msra.mxu0 0
        %1885 = vmatprep.subr.bf16.mxu0 0
        %1886 = vmatpush1.bf16.msra.mxu0 0
        %1887 = vmatprep.subr.bf16.mxu0 0
        %1888 = vmatpush1.bf16.msra.mxu0 0
        %1889 = vmatprep.subr.bf16.mxu0 0
        %1890 = vmatpush1.bf16.msra.mxu0 0
        %1891 = vmatprep.subr.bf16.mxu0 0
        %1892 = vmatpush1.bf16.msra.mxu0 0
        %1893 = vmatprep.subr.bf16.mxu0 0
        %1894 = vmatpush1.bf16.msra.mxu0 0
        %1895 = vmatprep.subr.bf16.mxu0 0
        %1896 = vmatpush1.bf16.msra.mxu0 0
        %1897 = vmatprep.subr.bf16.mxu0 0
        %1898 = vmatpush1.bf16.msra.mxu0 0
        %1899 = vmatprep.subr.bf16.mxu0 0
        %1900 = vmatpush1.bf16.msra.mxu0 0
        %1901 = vmatprep.subr.bf16.mxu0 0
        %1902 = vmatpush1.bf16.msra.mxu0 0
        %1903 = vmatprep.subr.bf16.mxu0 0
        %1904 = vmatpush1.bf16.msra.mxu0 0
        %1905 = vmatprep.subr.bf16.mxu0 0
        %1906 = vmatpush1.bf16.msra.mxu0 0
        %1907 = vmatprep.subr.bf16.mxu0 0
        %1908 = vmatpush1.bf16.msra.mxu0 0
        %1909 = vmatprep.subr.bf16.mxu0 0
        %1910 = vmatpush1.bf16.msra.mxu0 0
        %1911 = vmatprep.subr.bf16.mxu0 0
        %1912 = vmatpush1.bf16.msra.mxu0 0
        %1913 = vmatprep.mubr.bf16.mxu0 0
        %1914 = vmatmul.mubr.bf16.gmra.mrb[0].mxu0 %v1876
        %v1915 = vpop.f32.mrb[0].mxu0
        %v1916 = vadd.f32 %v1870, %v1915
        %v1917 = vpop.f32.mrb[0].mxu0
        %v1918 = vpop.f32.mrb[0].mxu0
        %v1919 = vpop.f32.mrb[0].mxu0
        %1920 = vdwg.mxu0
        %v1921 = vmul.f32 %v1529, 0.35355338
        %v1923 = vsel %vm1134, %v1921, 0
        %v1926 = vsel %vm1134, %v1595, 0
        %1928 = vmatprep.subr.mxu0 0.0
        %1929 = vmatpush1.xpose.msra.mxu0 %v1926
        %1930 = vmatprep.subr.mxu0 0.0
        %1931 = vmatpush1.xpose.msra.mxu0 0.0
        %1932 = vmatprep.subr.mxu0 0.0
        %1933 = vmatpush1.xpose.msra.mxu0 0.0
        %1934 = vmatprep.subr.mxu0 0.0
        %1935 = vmatpush1.xpose.msra.mxu0 0.0
        %1936 = vmatprep.subr.mxu0 0.0
        %1937 = vmatpush1.xpose.msra.mxu0 0.0
        %1938 = vmatprep.subr.mxu0 0.0
        %1939 = vmatpush1.xpose.msra.mxu0 0.0
        %1940 = vmatprep.subr.mxu0 0.0
        %1941 = vmatpush1.xpose.msra.mxu0 0.0
        %1942 = vmatprep.subr.mxu0 0.0
        %1943 = vmatpush1.xpose.msra.mxu0 0.0
        %1944 = vmatprep.subr.mxu0 0.0
        %1945 = vmatpush1.xpose.msra.mxu0 0.0
        %1946 = vmatprep.subr.mxu0 0.0
        %1947 = vmatpush1.xpose.msra.mxu0 0.0
        %1948 = vmatprep.subr.mxu0 0.0
        %1949 = vmatpush1.xpose.msra.mxu0 0.0
        %1950 = vmatprep.subr.mxu0 0.0
        %1951 = vmatpush1.xpose.msra.mxu0 0.0
        %1952 = vmatprep.subr.mxu0 0.0
        %1953 = vmatpush1.xpose.msra.mxu0 0.0
        %1954 = vmatprep.subr.mxu0 0.0
        %1955 = vmatpush1.xpose.msra.mxu0 0.0
        %1956 = vmatprep.subr.mxu0 0.0
        %1957 = vmatpush1.xpose.msra.mxu0 0.0
        %1958 = vmatprep.subr.mxu0 0.0
        %1959 = vmatpush1.xpose.msra.mxu0 0.0
        %1960 = vmatprep.subr.mxu0 0.0
        %1961 = vmatpush1.xpose.msra.mxu0 0.0
        %1962 = vmatprep.subr.mxu0 0.0
        %1963 = vmatpush1.xpose.msra.mxu0 0.0
        %1964 = vmatprep.subr.mxu0 0.0
        %1965 = vmatpush1.xpose.msra.mxu0 0.0
        %1966 = vmatprep.subr.mxu0 0.0
        %1967 = vmatpush1.xpose.msra.mxu0 0.0
        %1968 = vmatprep.subr.mxu0 0.0
        %1969 = vmatpush1.xpose.msra.mxu0 0.0
        %1970 = vmatprep.subr.mxu0 0.0
        %1971 = vmatpush1.xpose.msra.mxu0 0.0
        %1972 = vmatprep.subr.mxu0 0.0
        %1973 = vmatpush1.xpose.msra.mxu0 0.0
        %1974 = vmatprep.subr.mxu0 0.0
        %1975 = vmatpush1.xpose.msra.mxu0 0.0
        %1976 = vmatprep.subr.mxu0 0.0
        %1977 = vmatpush1.xpose.msra.mxu0 0.0
        %1978 = vmatprep.subr.mxu0 0.0
        %1979 = vmatpush1.xpose.msra.mxu0 0.0
        %1980 = vmatprep.subr.mxu0 0.0
        %1981 = vmatpush1.xpose.msra.mxu0 0.0
        %1982 = vmatprep.subr.mxu0 0.0
        %1983 = vmatpush1.xpose.msra.mxu0 0.0
        %1984 = vmatprep.subr.mxu0 0.0
        %1985 = vmatpush1.xpose.msra.mxu0 0.0
        %1986 = vmatprep.subr.mxu0 0.0
        %1987 = vmatpush1.xpose.msra.mxu0 0.0
        %1988 = vmatprep.subr.mxu0 0.0
        %1989 = vmatpush1.xpose.msra.mxu0 0.0
        %1990 = vmatprep.subr.mxu0 0.0
        %1991 = vmatpush1.xpose.msra.mxu0 0.0
        %1992 = vmatprep.mubr.f32.mxu0 0.0
        %1993 = vmatmul.mubr.f32.gmra.mrb[0].mxu0 %v1923
        %v1994 = vpop.f32.mrb[0].mxu0
        %v1995 = vadd.f32 %v1303, %v1994
        %v1996 = vpop.f32.mrb[0].mxu0
        %1997 = vdwg.mxu0
        %v1998 = vsel %vm1134, %v1995, -inf
        %1999 = vmax.xlane.f32.xlu0 %v1998
        %v2000 = vpop.xlane.xlu0 %1999
        %v2001 = vsub.f32 %v1995, %v2000
        %v2002 = vmul.f32 %v2001, 1.442695
        %v2003 = vpow.pop %v2002
        %v2004 = vsel %vm1134, %v2003, 0.0
        %2005 = vadd.xlane.f32.xlu0 %v2004
        %v2006 = vpop.xlane.xlu0 %2005
        %v2007 = vrcp.pop %v2006
        %v2008 = vmul.f32 %v2003, %v2007
        %v2010 = vsel %vm1134, %v2008, 0
        %2012 = vmatprep.subr.mxu0 0.0
        %2013 = vmatpush1.msra.mxu0 %v1661
        %2014 = vmatprep.subr.mxu0 0.0
        %2015 = vmatpush1.msra.mxu0 0.0
        %2016 = vmatprep.subr.mxu0 0.0
        %2017 = vmatpush1.msra.mxu0 0.0
        %2018 = vmatprep.subr.mxu0 0.0
        %2019 = vmatpush1.msra.mxu0 0.0
        %2020 = vmatprep.subr.mxu0 0.0
        %2021 = vmatpush1.msra.mxu0 0.0
        %2022 = vmatprep.subr.mxu0 0.0
        %2023 = vmatpush1.msra.mxu0 0.0
        %2024 = vmatprep.subr.mxu0 0.0
        %2025 = vmatpush1.msra.mxu0 0.0
        %2026 = vmatprep.subr.mxu0 0.0
        %2027 = vmatpush1.msra.mxu0 0.0
        %2028 = vmatprep.subr.mxu0 0.0
        %2029 = vmatpush1.msra.mxu0 0.0
        %2030 = vmatprep.subr.mxu0 0.0
        %2031 = vmatpush1.msra.mxu0 0.0
        %2032 = vmatprep.subr.mxu0 0.0
        %2033 = vmatpush1.msra.mxu0 0.0
        %2034 = vmatprep.subr.mxu0 0.0
        %2035 = vmatpush1.msra.mxu0 0.0
        %2036 = vmatprep.subr.mxu0 0.0
        %2037 = vmatpush1.msra.mxu0 0.0
        %2038 = vmatprep.subr.mxu0 0.0
        %2039 = vmatpush1.msra.mxu0 0.0
        %2040 = vmatprep.subr.mxu0 0.0
        %2041 = vmatpush1.msra.mxu0 0.0
        %2042 = vmatprep.subr.mxu0 0.0
        %2043 = vmatpush1.msra.mxu0 0.0
        %2044 = vmatprep.subr.mxu0 0.0
        %2045 = vmatpush1.msra.mxu0 0.0
        %2046 = vmatprep.subr.mxu0 0.0
        %2047 = vmatpush1.msra.mxu0 0.0
        %2048 = vmatprep.subr.mxu0 0.0
        %2049 = vmatpush1.msra.mxu0 0.0
        %2050 = vmatprep.subr.mxu0 0.0
        %2051 = vmatpush1.msra.mxu0 0.0
        %2052 = vmatprep.subr.mxu0 0.0
        %2053 = vmatpush1.msra.mxu0 0.0
        %2054 = vmatprep.subr.mxu0 0.0
        %2055 = vmatpush1.msra.mxu0 0.0
        %2056 = vmatprep.subr.mxu0 0.0
        %2057 = vmatpush1.msra.mxu0 0.0
        %2058 = vmatprep.subr.mxu0 0.0
        %2059 = vmatpush1.msra.mxu0 0.0
        %2060 = vmatprep.subr.mxu0 0.0
        %2061 = vmatpush1.msra.mxu0 0.0
        %2062 = vmatprep.subr.mxu0 0.0
        %2063 = vmatpush1.msra.mxu0 0.0
        %2064 = vmatprep.subr.mxu0 0.0
        %2065 = vmatpush1.msra.mxu0 0.0
        %2066 = vmatprep.subr.mxu0 0.0
        %2067 = vmatpush1.msra.mxu0 0.0
        %2068 = vmatprep.subr.mxu0 0.0
        %2069 = vmatpush1.msra.mxu0 0.0
        %2070 = vmatprep.subr.mxu0 0.0
        %2071 = vmatpush1.msra.mxu0 0.0
        %2072 = vmatprep.subr.mxu0 0.0
        %2073 = vmatpush1.msra.mxu0 0.0
        %2074 = vmatprep.subr.mxu0 0.0
        %2075 = vmatpush1.msra.mxu0 0.0
        %2076 = vmatprep.mubr.f32.mxu0 0.0
        %2077 = vmatmul.mubr.f32.gmra.mrb[0].mxu0 %v2010
        %v2078 = vpop.f32.mrb[0].mxu0
        %v2079 = vadd.f32 0.0, %v2078
        %v2080 = vpop.f32.mrb[0].mxu0
        %2081 = vdwg.mxu0
        %v2082 = vpack.c.bf16 %v2079, %v2079
        %v2084 = vsel %vm1134, %v2082, 0
        %2086 = vmatprep.subr.bf16.mxu0 0
        %2087 = vmatpush1.bf16.msra.mxu0 %v1833
        %2088 = vmatprep.subr.bf16.mxu0 0
        %2089 = vmatpush1.bf16.msra.mxu0 0
        %2090 = vmatprep.subr.bf16.mxu0 0
        %2091 = vmatpush1.bf16.msra.mxu0 0
        %2092 = vmatprep.subr.bf16.mxu0 0
        %2093 = vmatpush1.bf16.msra.mxu0 0
        %2094 = vmatprep.subr.bf16.mxu0 0
        %2095 = vmatpush1.bf16.msra.mxu0 0
        %2096 = vmatprep.subr.bf16.mxu0 0
        %2097 = vmatpush1.bf16.msra.mxu0 0
        %2098 = vmatprep.subr.bf16.mxu0 0
        %2099 = vmatpush1.bf16.msra.mxu0 0
        %2100 = vmatprep.subr.bf16.mxu0 0
        %2101 = vmatpush1.bf16.msra.mxu0 0
        %2102 = vmatprep.subr.bf16.mxu0 0
        %2103 = vmatpush1.bf16.msra.mxu0 0
        %2104 = vmatprep.subr.bf16.mxu0 0
        %2105 = vmatpush1.bf16.msra.mxu0 0
        %2106 = vmatprep.subr.bf16.mxu0 0
        %2107 = vmatpush1.bf16.msra.mxu0 0
        %2108 = vmatprep.subr.bf16.mxu0 0
        %2109 = vmatpush1.bf16.msra.mxu0 0
        %2110 = vmatprep.subr.bf16.mxu0 0
        %2111 = vmatpush1.bf16.msra.mxu0 0
        %2112 = vmatprep.subr.bf16.mxu0 0
        %2113 = vmatpush1.bf16.msra.mxu0 0
        %2114 = vmatprep.subr.bf16.mxu0 0
        %2115 = vmatpush1.bf16.msra.mxu0 0
        %2116 = vmatprep.subr.bf16.mxu0 0
        %2117 = vmatpush1.bf16.msra.mxu0 0
        %2118 = vmatprep.mubr.bf16.mxu0 0
        %2119 = vmatmul.mubr.bf16.gmra.mrb[0].mxu0 %v2084
        %v2120 = vpop.f32.mrb[0].mxu0
        %v2121 = vadd.f32 0.0, %v2120
        %v2122 = vpop.f32.mrb[0].mxu0
        %v2123 = vpop.f32.mrb[0].mxu0
        %v2124 = vpop.f32.mrb[0].mxu0
        %2125 = vdwg.mxu0
        %v2127 = vsel %vm1134, %v1465, 0
        %2129 = vmatprep.subr.bf16.mxu0 0
        %2130 = vmatpush1.bf16.msra.mxu0 %v1879
        %2131 = vmatprep.subr.bf16.mxu0 0
        %2132 = vmatpush1.bf16.msra.mxu0 0
        %2133 = vmatprep.subr.bf16.mxu0 0
        %2134 = vmatpush1.bf16.msra.mxu0 0
        %2135 = vmatprep.subr.bf16.mxu0 0
        %2136 = vmatpush1.bf16.msra.mxu0 0
        %2137 = vmatprep.subr.bf16.mxu0 0
        %2138 = vmatpush1.bf16.msra.mxu0 0
        %2139 = vmatprep.subr.bf16.mxu0 0
        %2140 = vmatpush1.bf16.msra.mxu0 0
        %2141 = vmatprep.subr.bf16.mxu0 0
        %2142 = vmatpush1.bf16.msra.mxu0 0
        %2143 = vmatprep.subr.bf16.mxu0 0
        %2144 = vmatpush1.bf16.msra.mxu0 0
        %2145 = vmatprep.subr.bf16.mxu0 0
        %2146 = vmatpush1.bf16.msra.mxu0 0
        %2147 = vmatprep.subr.bf16.mxu0 0
        %2148 = vmatpush1.bf16.msra.mxu0 0
        %2149 = vmatprep.subr.bf16.mxu0 0
        %2150 = vmatpush1.bf16.msra.mxu0 0
        %2151 = vmatprep.subr.bf16.mxu0 0
        %2152 = vmatpush1.bf16.msra.mxu0 0
        %2153 = vmatprep.subr.bf16.mxu0 0
        %2154 = vmatpush1.bf16.msra.mxu0 0
        %2155 = vmatprep.subr.bf16.mxu0 0
        %2156 = vmatpush1.bf16.msra.mxu0 0
        %2157 = vmatprep.subr.bf16.mxu0 0
        %2158 = vmatpush1.bf16.msra.mxu0 0
        %2159 = vmatprep.subr.bf16.mxu0 0
        %2160 = vmatpush1.bf16.msra.mxu0 0
        %2161 = vmatprep.mubr.bf16.mxu0 0
        %2162 = vmatmul.mubr.bf16.gmra.mrb[0].mxu0 %v2127
        %v2163 = vpop.f32.mrb[0].mxu0
        %v2164 = vadd.f32 %v2121, %v2163
        %v2165 = vpop.f32.mrb[0].mxu0
        %v2166 = vpop.f32.mrb[0].mxu0
        %v2167 = vpop.f32.mrb[0].mxu0
        %2168 = vdwg.mxu0
        %s2169 = scalar_lea.vmem %s815, 32
        %v2170 = vld [vmem:[%s2169] sm:$0xf]
        %v2171 = vld [vmem:[%s2169 + $0x4] sm:$0xf]
        %v2172 = vld [vmem:[%s2169 + $0x8] sm:$0xf]
        %v2173 = vld [vmem:[%s2169 + $0xc] sm:$0xf]
        %s2174 = scalar_lea.vmem %s829, 2
        %v2175 = vld [vmem:[%s2174] sm:$0x1]
        %v2177 = vlaneseq
        %v2178 = vshrl.u32 %v2177, 7
        %v2179 = vsub.s32 0, %v2178
        %v2180 = vrot.slane %v2175, %v2179
        %v2186 = vunpack.c.l.b16 %v2170
        %v2187 = vunpack.c.l.b16 %v2171
        %v2188 = vunpack.c.l.b16 %v2172
        %v2189 = vunpack.c.l.b16 %v2173
        %v2190 = vpack.c.b16 %v2187, %v2186
        %v2191 = vpack.c.b16 %v2189, %v2188
        %2194 = vmatprep.subr.bf16.mxu0 0
        %2195 = vmatpush1.bf16.msra.mxu0 %v2190
        %2196 = vmatprep.subr.bf16.mxu0 0
        %2197 = vmatpush1.bf16.msra.mxu0 %v2191
        %2198 = vmatprep.subr.bf16.mxu0 0
        %2199 = vmatpush1.bf16.msra.mxu0 0
        %2200 = vmatprep.subr.bf16.mxu0 0
        %2201 = vmatpush1.bf16.msra.mxu0 0
        %2202 = vmatprep.subr.bf16.mxu0 0
        %2203 = vmatpush1.bf16.msra.mxu0 0
        %2204 = vmatprep.subr.bf16.mxu0 0
        %2205 = vmatpush1.bf16.msra.mxu0 0
        %2206 = vmatprep.subr.bf16.mxu0 0
        %2207 = vmatpush1.bf16.msra.mxu0 0
        %2208 = vmatprep.subr.bf16.mxu0 0
        %2209 = vmatpush1.bf16.msra.mxu0 0
        %2210 = vmatprep.subr.bf16.mxu0 0
        %2211 = vmatpush1.bf16.msra.mxu0 0
        %2212 = vmatprep.subr.bf16.mxu0 0
        %2213 = vmatpush1.bf16.msra.mxu0 0
        %2214 = vmatprep.subr.bf16.mxu0 0
        %2215 = vmatpush1.bf16.msra.mxu0 0
        %2216 = vmatprep.subr.bf16.mxu0 0
        %2217 = vmatpush1.bf16.msra.mxu0 0
        %2218 = vmatprep.subr.bf16.mxu0 0
        %2219 = vmatpush1.bf16.msra.mxu0 0
        %2220 = vmatprep.subr.bf16.mxu0 0
        %2221 = vmatpush1.bf16.msra.mxu0 0
        %2222 = vmatprep.subr.bf16.mxu0 0
        %2223 = vmatpush1.bf16.msra.mxu0 0
        %2224 = vmatprep.subr.bf16.mxu0 0
        %2225 = vmatpush1.bf16.msra.mxu0 0
        %2226 = vmatprep.mubr.bf16.mxu0 0
        %2227 = vmatmul.mubr.bf16.gmra.mrb[0].mxu0 %v954
        %v2228 = vpop.f32.mrb[0].mxu0
        %v2229 = vadd.f32 %v2180, %v2228
        %v2230 = vpop.f32.mrb[0].mxu0
        %v2231 = vpop.f32.mrb[0].mxu0
        %v2232 = vadd.f32 %v2180, %v2231
        %v2233 = vpop.f32.mrb[0].mxu0
        %2234 = vdwg.mxu0
        %s2235 = scalar_lea.vmem %s820, 32
        %v2236 = vld [vmem:[%s2235] sm:$0xf]
        %v2237 = vld [vmem:[%s2235 + $0x4] sm:$0xf]
        %v2238 = vld [vmem:[%s2235 + $0x8] sm:$0xf]
        %v2239 = vld [vmem:[%s2235 + $0xc] sm:$0xf]
        %s2240 = scalar_lea.vmem %s833, 2
        %v2241 = vld [vmem:[%s2240] sm:$0x1]
        %v2243 = vlaneseq
        %v2244 = vshrl.u32 %v2243, 7
        %v2245 = vsub.s32 0, %v2244
        %v2246 = vrot.slane %v2241, %v2245
        %v2252 = vunpack.c.l.b16 %v2236
        %v2253 = vunpack.c.l.b16 %v2237
        %v2254 = vunpack.c.l.b16 %v2238
        %v2255 = vunpack.c.l.b16 %v2239
        %v2256 = vpack.c.b16 %v2253, %v2252
        %v2257 = vpack.c.b16 %v2255, %v2254
        %2260 = vmatprep.subr.bf16.mxu0 0
        %2261 = vmatpush1.bf16.msra.mxu0 %v2256
        %2262 = vmatprep.subr.bf16.mxu0 0
        %2263 = vmatpush1.bf16.msra.mxu0 %v2257
        %2264 = vmatprep.subr.bf16.mxu0 0
        %2265 = vmatpush1.bf16.msra.mxu0 0
        %2266 = vmatprep.subr.bf16.mxu0 0
        %2267 = vmatpush1.bf16.msra.mxu0 0
        %2268 = vmatprep.subr.bf16.mxu0 0
        %2269 = vmatpush1.bf16.msra.mxu0 0
        %2270 = vmatprep.subr.bf16.mxu0 0
        %2271 = vmatpush1.bf16.msra.mxu0 0
        %2272 = vmatprep.subr.bf16.mxu0 0
        %2273 = vmatpush1.bf16.msra.mxu0 0
        %2274 = vmatprep.subr.bf16.mxu0 0
        %2275 = vmatpush1.bf16.msra.mxu0 0
        %2276 = vmatprep.subr.bf16.mxu0 0
        %2277 = vmatpush1.bf16.msra.mxu0 0
        %2278 = vmatprep.subr.bf16.mxu0 0
        %2279 = vmatpush1.bf16.msra.mxu0 0
        %2280 = vmatprep.subr.bf16.mxu0 0
        %2281 = vmatpush1.bf16.msra.mxu0 0
        %2282 = vmatprep.subr.bf16.mxu0 0
        %2283 = vmatpush1.bf16.msra.mxu0 0
        %2284 = vmatprep.subr.bf16.mxu0 0
        %2285 = vmatpush1.bf16.msra.mxu0 0
        %2286 = vmatprep.subr.bf16.mxu0 0
        %2287 = vmatpush1.bf16.msra.mxu0 0
        %2288 = vmatprep.subr.bf16.mxu0 0
        %2289 = vmatpush1.bf16.msra.mxu0 0
        %2290 = vmatprep.subr.bf16.mxu0 0
        %2291 = vmatpush1.bf16.msra.mxu0 0
        %2292 = vmatprep.mubr.bf16.mxu0 0
        %2293 = vmatmul.mubr.bf16.gmra.mrb[0].mxu0 %v954
        %v2294 = vpop.f32.mrb[0].mxu0
        %v2295 = vadd.f32 %v2246, %v2294
        %v2296 = vpop.f32.mrb[0].mxu0
        %v2297 = vpop.f32.mrb[0].mxu0
        %v2298 = vadd.f32 %v2246, %v2297
        %v2299 = vpop.f32.mrb[0].mxu0
        %2300 = vdwg.mxu0
        %s2301 = scalar_lea.vmem %s825, 32
        %v2302 = vld [vmem:[%s2301] sm:$0xf]
        %v2303 = vld [vmem:[%s2301 + $0x4] sm:$0xf]
        %v2304 = vld [vmem:[%s2301 + $0x8] sm:$0xf]
        %v2305 = vld [vmem:[%s2301 + $0xc] sm:$0xf]
        %s2306 = scalar_lea.vmem %s837, 2
        %v2307 = vld [vmem:[%s2306] sm:$0x1]
        %v2309 = vlaneseq
        %v2310 = vshrl.u32 %v2309, 7
        %v2311 = vsub.s32 0, %v2310
        %v2312 = vrot.slane %v2307, %v2311
        %v2318 = vunpack.c.l.b16 %v2302
        %v2319 = vunpack.c.l.b16 %v2303
        %v2320 = vunpack.c.l.b16 %v2304
        %v2321 = vunpack.c.l.b16 %v2305
        %v2322 = vpack.c.b16 %v2319, %v2318
        %v2323 = vpack.c.b16 %v2321, %v2320
        %2326 = vmatprep.subr.bf16.mxu0 0
        %2327 = vmatpush1.bf16.msra.mxu0 %v2322
        %2328 = vmatprep.subr.bf16.mxu0 0
        %2329 = vmatpush1.bf16.msra.mxu0 %v2323
        %2330 = vmatprep.subr.bf16.mxu0 0
        %2331 = vmatpush1.bf16.msra.mxu0 0
        %2332 = vmatprep.subr.bf16.mxu0 0
        %2333 = vmatpush1.bf16.msra.mxu0 0
        %2334 = vmatprep.subr.bf16.mxu0 0
        %2335 = vmatpush1.bf16.msra.mxu0 0
        %2336 = vmatprep.subr.bf16.mxu0 0
        %2337 = vmatpush1.bf16.msra.mxu0 0
        %2338 = vmatprep.subr.bf16.mxu0 0
        %2339 = vmatpush1.bf16.msra.mxu0 0
        %2340 = vmatprep.subr.bf16.mxu0 0
        %2341 = vmatpush1.bf16.msra.mxu0 0
        %2342 = vmatprep.subr.bf16.mxu0 0
        %2343 = vmatpush1.bf16.msra.mxu0 0
        %2344 = vmatprep.subr.bf16.mxu0 0
        %2345 = vmatpush1.bf16.msra.mxu0 0
        %2346 = vmatprep.subr.bf16.mxu0 0
        %2347 = vmatpush1.bf16.msra.mxu0 0
        %2348 = vmatprep.subr.bf16.mxu0 0
        %2349 = vmatpush1.bf16.msra.mxu0 0
        %2350 = vmatprep.subr.bf16.mxu0 0
        %2351 = vmatpush1.bf16.msra.mxu0 0
        %2352 = vmatprep.subr.bf16.mxu0 0
        %2353 = vmatpush1.bf16.msra.mxu0 0
        %2354 = vmatprep.subr.bf16.mxu0 0
        %2355 = vmatpush1.bf16.msra.mxu0 0
        %2356 = vmatprep.subr.bf16.mxu0 0
        %2357 = vmatpush1.bf16.msra.mxu0 0
        %2358 = vmatprep.mubr.bf16.mxu0 0
        %2359 = vmatmul.mubr.bf16.gmra.mrb[0].mxu0 %v954
        %v2360 = vpop.f32.mrb[0].mxu0
        %v2361 = vadd.f32 %v2312, %v2360
        %v2362 = vpop.f32.mrb[0].mxu0
        %v2363 = vpop.f32.mrb[0].mxu0
        %v2364 = vadd.f32 %v2312, %v2363
        %v2365 = vpop.f32.mrb[0].mxu0
        %2366 = vdwg.mxu0
        %s2367 = scalar_lea.vmem %s842, 8
        %v2368 = vld [vmem:[%s2367] sm:$0xf]
        %v2369 = vmul.f32 %v2229, 0.35355338
        %v2371 = vsel %vm1134, %v2369, 0
        %v2374 = vsel %vm1134, %v2295, 0
        %2376 = vmatprep.subr.mxu0 0.0
        %2377 = vmatpush1.xpose.msra.mxu0 %v2374
        %2378 = vmatprep.subr.mxu0 0.0
        %2379 = vmatpush1.xpose.msra.mxu0 0.0
        %2380 = vmatprep.subr.mxu0 0.0
        %2381 = vmatpush1.xpose.msra.mxu0 0.0
        %2382 = vmatprep.subr.mxu0 0.0
        %2383 = vmatpush1.xpose.msra.mxu0 0.0
        %2384 = vmatprep.subr.mxu0 0.0
        %2385 = vmatpush1.xpose.msra.mxu0 0.0
        %2386 = vmatprep.subr.mxu0 0.0
        %2387 = vmatpush1.xpose.msra.mxu0 0.0
        %2388 = vmatprep.subr.mxu0 0.0
        %2389 = vmatpush1.xpose.msra.mxu0 0.0
        %2390 = vmatprep.subr.mxu0 0.0
        %2391 = vmatpush1.xpose.msra.mxu0 0.0
        %2392 = vmatprep.subr.mxu0 0.0
        %2393 = vmatpush1.xpose.msra.mxu0 0.0
        %2394 = vmatprep.subr.mxu0 0.0
        %2395 = vmatpush1.xpose.msra.mxu0 0.0
        %2396 = vmatprep.subr.mxu0 0.0
        %2397 = vmatpush1.xpose.msra.mxu0 0.0
        %2398 = vmatprep.subr.mxu0 0.0
        %2399 = vmatpush1.xpose.msra.mxu0 0.0
        %2400 = vmatprep.subr.mxu0 0.0
        %2401 = vmatpush1.xpose.msra.mxu0 0.0
        %2402 = vmatprep.subr.mxu0 0.0
        %2403 = vmatpush1.xpose.msra.mxu0 0.0
        %2404 = vmatprep.subr.mxu0 0.0
        %2405 = vmatpush1.xpose.msra.mxu0 0.0
        %2406 = vmatprep.subr.mxu0 0.0
        %2407 = vmatpush1.xpose.msra.mxu0 0.0
        %2408 = vmatprep.subr.mxu0 0.0
        %2409 = vmatpush1.xpose.msra.mxu0 0.0
        %2410 = vmatprep.subr.mxu0 0.0
        %2411 = vmatpush1.xpose.msra.mxu0 0.0
        %2412 = vmatprep.subr.mxu0 0.0
        %2413 = vmatpush1.xpose.msra.mxu0 0.0
        %2414 = vmatprep.subr.mxu0 0.0
        %2415 = vmatpush1.xpose.msra.mxu0 0.0
        %2416 = vmatprep.subr.mxu0 0.0
        %2417 = vmatpush1.xpose.msra.mxu0 0.0
        %2418 = vmatprep.subr.mxu0 0.0
        %2419 = vmatpush1.xpose.msra.mxu0 0.0
        %2420 = vmatprep.subr.mxu0 0.0
        %2421 = vmatpush1.xpose.msra.mxu0 0.0
        %2422 = vmatprep.subr.mxu0 0.0
        %2423 = vmatpush1.xpose.msra.mxu0 0.0
        %2424 = vmatprep.subr.mxu0 0.0
        %2425 = vmatpush1.xpose.msra.mxu0 0.0
        %2426 = vmatprep.subr.mxu0 0.0
        %2427 = vmatpush1.xpose.msra.mxu0 0.0
        %2428 = vmatprep.subr.mxu0 0.0
        %2429 = vmatpush1.xpose.msra.mxu0 0.0
        %2430 = vmatprep.subr.mxu0 0.0
        %2431 = vmatpush1.xpose.msra.mxu0 0.0
        %2432 = vmatprep.subr.mxu0 0.0
        %2433 = vmatpush1.xpose.msra.mxu0 0.0
        %2434 = vmatprep.subr.mxu0 0.0
        %2435 = vmatpush1.xpose.msra.mxu0 0.0
        %2436 = vmatprep.subr.mxu0 0.0
        %2437 = vmatpush1.xpose.msra.mxu0 0.0
        %2438 = vmatprep.subr.mxu0 0.0
        %2439 = vmatpush1.xpose.msra.mxu0 0.0
        %2440 = vmatprep.mubr.f32.mxu0 0.0
        %2441 = vmatmul.mubr.f32.gmra.mrb[0].mxu0 %v2371
        %v2442 = vpop.f32.mrb[0].mxu0
        %v2443 = vadd.f32 %v1132, %v2442
        %v2444 = vpop.f32.mrb[0].mxu0
        %2445 = vdwg.mxu0
        %v2446 = vsel %vm1134, %v2443, -inf
        %2447 = vmax.xlane.f32.xlu0 %v2446
        %v2448 = vpop.xlane.xlu0 %2447
        %v2449 = vsub.f32 %v2443, %v2448
        %v2450 = vmul.f32 %v2449, 1.442695
        %v2451 = vpow.pop %v2450
        %v2452 = vsel %vm1134, %v2451, 0.0
        %2453 = vadd.xlane.f32.xlu0 %v2452
        %v2454 = vpop.xlane.xlu0 %2453
        %v2455 = vrcp.pop %v2454
        %v2456 = vmul.f32 %v2451, %v2455
        %v2458 = vsel %vm1134, %v2456, 0
        %2460 = vmatprep.subr.mxu0 0.0
        %2461 = vmatpush1.msra.mxu0 %v2361
        %2462 = vmatprep.subr.mxu0 0.0
        %2463 = vmatpush1.msra.mxu0 0.0
        %2464 = vmatprep.subr.mxu0 0.0
        %2465 = vmatpush1.msra.mxu0 0.0
        %2466 = vmatprep.subr.mxu0 0.0
        %2467 = vmatpush1.msra.mxu0 0.0
        %2468 = vmatprep.subr.mxu0 0.0
        %2469 = vmatpush1.msra.mxu0 0.0
        %2470 = vmatprep.subr.mxu0 0.0
        %2471 = vmatpush1.msra.mxu0 0.0
        %2472 = vmatprep.subr.mxu0 0.0
        %2473 = vmatpush1.msra.mxu0 0.0
        %2474 = vmatprep.subr.mxu0 0.0
        %2475 = vmatpush1.msra.mxu0 0.0
        %2476 = vmatprep.subr.mxu0 0.0
        %2477 = vmatpush1.msra.mxu0 0.0
        %2478 = vmatprep.subr.mxu0 0.0
        %2479 = vmatpush1.msra.mxu0 0.0
        %2480 = vmatprep.subr.mxu0 0.0
        %2481 = vmatpush1.msra.mxu0 0.0
        %2482 = vmatprep.subr.mxu0 0.0
        %2483 = vmatpush1.msra.mxu0 0.0
        %2484 = vmatprep.subr.mxu0 0.0
        %2485 = vmatpush1.msra.mxu0 0.0
        %2486 = vmatprep.subr.mxu0 0.0
        %2487 = vmatpush1.msra.mxu0 0.0
        %2488 = vmatprep.subr.mxu0 0.0
        %2489 = vmatpush1.msra.mxu0 0.0
        %2490 = vmatprep.subr.mxu0 0.0
        %2491 = vmatpush1.msra.mxu0 0.0
        %2492 = vmatprep.subr.mxu0 0.0
        %2493 = vmatpush1.msra.mxu0 0.0
        %2494 = vmatprep.subr.mxu0 0.0
        %2495 = vmatpush1.msra.mxu0 0.0
        %2496 = vmatprep.subr.mxu0 0.0
        %2497 = vmatpush1.msra.mxu0 0.0
        %2498 = vmatprep.subr.mxu0 0.0
        %2499 = vmatpush1.msra.mxu0 0.0
        %2500 = vmatprep.subr.mxu0 0.0
        %2501 = vmatpush1.msra.mxu0 0.0
        %2502 = vmatprep.subr.mxu0 0.0
        %2503 = vmatpush1.msra.mxu0 0.0
        %2504 = vmatprep.subr.mxu0 0.0
        %2505 = vmatpush1.msra.mxu0 0.0
        %2506 = vmatprep.subr.mxu0 0.0
        %2507 = vmatpush1.msra.mxu0 0.0
        %2508 = vmatprep.subr.mxu0 0.0
        %2509 = vmatpush1.msra.mxu0 0.0
        %2510 = vmatprep.subr.mxu0 0.0
        %2511 = vmatpush1.msra.mxu0 0.0
        %2512 = vmatprep.subr.mxu0 0.0
        %2513 = vmatpush1.msra.mxu0 0.0
        %2514 = vmatprep.subr.mxu0 0.0
        %2515 = vmatpush1.msra.mxu0 0.0
        %2516 = vmatprep.subr.mxu0 0.0
        %2517 = vmatpush1.msra.mxu0 0.0
        %2518 = vmatprep.subr.mxu0 0.0
        %2519 = vmatpush1.msra.mxu0 0.0
        %2520 = vmatprep.subr.mxu0 0.0
        %2521 = vmatpush1.msra.mxu0 0.0
        %2522 = vmatprep.subr.mxu0 0.0
        %2523 = vmatpush1.msra.mxu0 0.0
        %2524 = vmatprep.mubr.f32.mxu0 0.0
        %2525 = vmatmul.mubr.f32.gmra.mrb[0].mxu0 %v2458
        %v2526 = vpop.f32.mrb[0].mxu0
        %v2527 = vadd.f32 0.0, %v2526
        %v2528 = vpop.f32.mrb[0].mxu0
        %2529 = vdwg.mxu0
        %v2530 = vpack.c.bf16 %v2527, %v2527
        %v2532 = vsel %vm1134, %v2530, 0
        %v2535 = vsel %vm1831, %v2368, 0
        %2537 = vmatprep.subr.bf16.mxu0 0
        %2538 = vmatpush1.bf16.msra.mxu0 %v2535
        %2539 = vmatprep.subr.bf16.mxu0 0
        %2540 = vmatpush1.bf16.msra.mxu0 0
        %2541 = vmatprep.subr.bf16.mxu0 0
        %2542 = vmatpush1.bf16.msra.mxu0 0
        %2543 = vmatprep.subr.bf16.mxu0 0
        %2544 = vmatpush1.bf16.msra.mxu0 0
        %2545 = vmatprep.subr.bf16.mxu0 0
        %2546 = vmatpush1.bf16.msra.mxu0 0
        %2547 = vmatprep.subr.bf16.mxu0 0
        %2548 = vmatpush1.bf16.msra.mxu0 0
        %2549 = vmatprep.subr.bf16.mxu0 0
        %2550 = vmatpush1.bf16.msra.mxu0 0
        %2551 = vmatprep.subr.bf16.mxu0 0
        %2552 = vmatpush1.bf16.msra.mxu0 0
        %2553 = vmatprep.subr.bf16.mxu0 0
        %2554 = vmatpush1.bf16.msra.mxu0 0
        %2555 = vmatprep.subr.bf16.mxu0 0
        %2556 = vmatpush1.bf16.msra.mxu0 0
        %2557 = vmatprep.subr.bf16.mxu0 0
        %2558 = vmatpush1.bf16.msra.mxu0 0
        %2559 = vmatprep.subr.bf16.mxu0 0
        %2560 = vmatpush1.bf16.msra.mxu0 0
        %2561 = vmatprep.subr.bf16.mxu0 0
        %2562 = vmatpush1.bf16.msra.mxu0 0
        %2563 = vmatprep.subr.bf16.mxu0 0
        %2564 = vmatpush1.bf16.msra.mxu0 0
        %2565 = vmatprep.subr.bf16.mxu0 0
        %2566 = vmatpush1.bf16.msra.mxu0 0
        %2567 = vmatprep.subr.bf16.mxu0 0
        %2568 = vmatpush1.bf16.msra.mxu0 0
        %2569 = vmatprep.mubr.bf16.mxu0 0
        %2570 = vmatmul.mubr.bf16.gmra.mrb[0].mxu0 %v2532
        %v2571 = vpop.f32.mrb[0].mxu0
        %v2572 = vadd.f32 0.0, %v2571
        %v2573 = vpop.f32.mrb[0].mxu0
        %v2574 = vpop.f32.mrb[0].mxu0
        %v2575 = vpop.f32.mrb[0].mxu0
        %2576 = vdwg.mxu0
        %v2577 = vadd.f32 %v1916, %v2572
        %v2578 = vmul.f32 %v2232, 0.35355338
        %v2580 = vsel %vm1134, %v2578, 0
        %v2583 = vsel %vm1134, %v2298, 0
        %2585 = vmatprep.subr.mxu0 0.0
        %2586 = vmatpush1.xpose.msra.mxu0 %v2583
        %2587 = vmatprep.subr.mxu0 0.0
        %2588 = vmatpush1.xpose.msra.mxu0 0.0
        %2589 = vmatprep.subr.mxu0 0.0
        %2590 = vmatpush1.xpose.msra.mxu0 0.0
        %2591 = vmatprep.subr.mxu0 0.0
        %2592 = vmatpush1.xpose.msra.mxu0 0.0
        %2593 = vmatprep.subr.mxu0 0.0
        %2594 = vmatpush1.xpose.msra.mxu0 0.0
        %2595 = vmatprep.subr.mxu0 0.0
        %2596 = vmatpush1.xpose.msra.mxu0 0.0
        %2597 = vmatprep.subr.mxu0 0.0
        %2598 = vmatpush1.xpose.msra.mxu0 0.0
        %2599 = vmatprep.subr.mxu0 0.0
        %2600 = vmatpush1.xpose.msra.mxu0 0.0
        %2601 = vmatprep.subr.mxu0 0.0
        %2602 = vmatpush1.xpose.msra.mxu0 0.0
        %2603 = vmatprep.subr.mxu0 0.0
        %2604 = vmatpush1.xpose.msra.mxu0 0.0
        %2605 = vmatprep.subr.mxu0 0.0
        %2606 = vmatpush1.xpose.msra.mxu0 0.0
        %2607 = vmatprep.subr.mxu0 0.0
        %2608 = vmatpush1.xpose.msra.mxu0 0.0
        %2609 = vmatprep.subr.mxu0 0.0
        %2610 = vmatpush1.xpose.msra.mxu0 0.0
        %2611 = vmatprep.subr.mxu0 0.0
        %2612 = vmatpush1.xpose.msra.mxu0 0.0
        %2613 = vmatprep.subr.mxu0 0.0
        %2614 = vmatpush1.xpose.msra.mxu0 0.0
        %2615 = vmatprep.subr.mxu0 0.0
        %2616 = vmatpush1.xpose.msra.mxu0 0.0
        %2617 = vmatprep.subr.mxu0 0.0
        %2618 = vmatpush1.xpose.msra.mxu0 0.0
        %2619 = vmatprep.subr.mxu0 0.0
        %2620 = vmatpush1.xpose.msra.mxu0 0.0
        %2621 = vmatprep.subr.mxu0 0.0
        %2622 = vmatpush1.xpose.msra.mxu0 0.0
        %2623 = vmatprep.subr.mxu0 0.0
        %2624 = vmatpush1.xpose.msra.mxu0 0.0
        %2625 = vmatprep.subr.mxu0 0.0
        %2626 = vmatpush1.xpose.msra.mxu0 0.0
        %2627 = vmatprep.subr.mxu0 0.0
        %2628 = vmatpush1.xpose.msra.mxu0 0.0
        %2629 = vmatprep.subr.mxu0 0.0
        %2630 = vmatpush1.xpose.msra.mxu0 0.0
        %2631 = vmatprep.subr.mxu0 0.0
        %2632 = vmatpush1.xpose.msra.mxu0 0.0
        %2633 = vmatprep.subr.mxu0 0.0
        %2634 = vmatpush1.xpose.msra.mxu0 0.0
        %2635 = vmatprep.subr.mxu0 0.0
        %2636 = vmatpush1.xpose.msra.mxu0 0.0
        %2637 = vmatprep.subr.mxu0 0.0
        %2638 = vmatpush1.xpose.msra.mxu0 0.0
        %2639 = vmatprep.subr.mxu0 0.0
        %2640 = vmatpush1.xpose.msra.mxu0 0.0
        %2641 = vmatprep.subr.mxu0 0.0
        %2642 = vmatpush1.xpose.msra.mxu0 0.0
        %2643 = vmatprep.subr.mxu0 0.0
        %2644 = vmatpush1.xpose.msra.mxu0 0.0
        %2645 = vmatprep.subr.mxu0 0.0
        %2646 = vmatpush1.xpose.msra.mxu0 0.0
        %2647 = vmatprep.subr.mxu0 0.0
        %2648 = vmatpush1.xpose.msra.mxu0 0.0
        %2649 = vmatprep.mubr.f32.mxu0 0.0
        %2650 = vmatmul.mubr.f32.gmra.mrb[0].mxu0 %v2580
        %v2651 = vpop.f32.mrb[0].mxu0
        %v2652 = vadd.f32 %v1303, %v2651
        %v2653 = vpop.f32.mrb[0].mxu0
        %2654 = vdwg.mxu0
        %v2655 = vsel %vm1134, %v2652, -inf
        %2656 = vmax.xlane.f32.xlu0 %v2655
        %v2657 = vpop.xlane.xlu0 %2656
        %v2658 = vsub.f32 %v2652, %v2657
        %v2659 = vmul.f32 %v2658, 1.442695
        %v2660 = vpow.pop %v2659
        %v2661 = vsel %vm1134, %v2660, 0.0
        %2662 = vadd.xlane.f32.xlu0 %v2661
        %v2663 = vpop.xlane.xlu0 %2662
        %v2664 = vrcp.pop %v2663
        %v2665 = vmul.f32 %v2660, %v2664
        %v2667 = vsel %vm1134, %v2665, 0
        %2669 = vmatprep.subr.mxu0 0.0
        %2670 = vmatpush1.msra.mxu0 %v2364
        %2671 = vmatprep.subr.mxu0 0.0
        %2672 = vmatpush1.msra.mxu0 0.0
        %2673 = vmatprep.subr.mxu0 0.0
        %2674 = vmatpush1.msra.mxu0 0.0
        %2675 = vmatprep.subr.mxu0 0.0
        %2676 = vmatpush1.msra.mxu0 0.0
        %2677 = vmatprep.subr.mxu0 0.0
        %2678 = vmatpush1.msra.mxu0 0.0
        %2679 = vmatprep.subr.mxu0 0.0
        %2680 = vmatpush1.msra.mxu0 0.0
        %2681 = vmatprep.subr.mxu0 0.0
        %2682 = vmatpush1.msra.mxu0 0.0
        %2683 = vmatprep.subr.mxu0 0.0
        %2684 = vmatpush1.msra.mxu0 0.0
        %2685 = vmatprep.subr.mxu0 0.0
        %2686 = vmatpush1.msra.mxu0 0.0
        %2687 = vmatprep.subr.mxu0 0.0
        %2688 = vmatpush1.msra.mxu0 0.0
        %2689 = vmatprep.subr.mxu0 0.0
        %2690 = vmatpush1.msra.mxu0 0.0
        %2691 = vmatprep.subr.mxu0 0.0
        %2692 = vmatpush1.msra.mxu0 0.0
        %2693 = vmatprep.subr.mxu0 0.0
        %2694 = vmatpush1.msra.mxu0 0.0
        %2695 = vmatprep.subr.mxu0 0.0
        %2696 = vmatpush1.msra.mxu0 0.0
        %2697 = vmatprep.subr.mxu0 0.0
        %2698 = vmatpush1.msra.mxu0 0.0
        %2699 = vmatprep.subr.mxu0 0.0
        %2700 = vmatpush1.msra.mxu0 0.0
        %2701 = vmatprep.subr.mxu0 0.0
        %2702 = vmatpush1.msra.mxu0 0.0
        %2703 = vmatprep.subr.mxu0 0.0
        %2704 = vmatpush1.msra.mxu0 0.0
        %2705 = vmatprep.subr.mxu0 0.0
        %2706 = vmatpush1.msra.mxu0 0.0
        %2707 = vmatprep.subr.mxu0 0.0
        %2708 = vmatpush1.msra.mxu0 0.0
        %2709 = vmatprep.subr.mxu0 0.0
        %2710 = vmatpush1.msra.mxu0 0.0
        %2711 = vmatprep.subr.mxu0 0.0
        %2712 = vmatpush1.msra.mxu0 0.0
        %2713 = vmatprep.subr.mxu0 0.0
        %2714 = vmatpush1.msra.mxu0 0.0
        %2715 = vmatprep.subr.mxu0 0.0
        %2716 = vmatpush1.msra.mxu0 0.0
        %2717 = vmatprep.subr.mxu0 0.0
        %2718 = vmatpush1.msra.mxu0 0.0
        %2719 = vmatprep.subr.mxu0 0.0
        %2720 = vmatpush1.msra.mxu0 0.0
        %2721 = vmatprep.subr.mxu0 0.0
        %2722 = vmatpush1.msra.mxu0 0.0
        %2723 = vmatprep.subr.mxu0 0.0
        %2724 = vmatpush1.msra.mxu0 0.0
        %2725 = vmatprep.subr.mxu0 0.0
        %2726 = vmatpush1.msra.mxu0 0.0
        %2727 = vmatprep.subr.mxu0 0.0
        %2728 = vmatpush1.msra.mxu0 0.0
        %2729 = vmatprep.subr.mxu0 0.0
        %2730 = vmatpush1.msra.mxu0 0.0
        %2731 = vmatprep.subr.mxu0 0.0
        %2732 = vmatpush1.msra.mxu0 0.0
        %2733 = vmatprep.mubr.f32.mxu0 0.0
        %2734 = vmatmul.mubr.f32.gmra.mrb[0].mxu0 %v2667
        %v2735 = vpop.f32.mrb[0].mxu0
        %v2736 = vadd.f32 0.0, %v2735
        %v2737 = vpop.f32.mrb[0].mxu0
        %2738 = vdwg.mxu0
        %v2739 = vpack.c.bf16 %v2736, %v2736
        %v2741 = vsel %vm1134, %v2739, 0
        %2743 = vmatprep.subr.bf16.mxu0 0
        %2744 = vmatpush1.bf16.msra.mxu0 %v2535
        %2745 = vmatprep.subr.bf16.mxu0 0
        %2746 = vmatpush1.bf16.msra.mxu0 0
        %2747 = vmatprep.subr.bf16.mxu0 0
        %2748 = vmatpush1.bf16.msra.mxu0 0
        %2749 = vmatprep.subr.bf16.mxu0 0
        %2750 = vmatpush1.bf16.msra.mxu0 0
        %2751 = vmatprep.subr.bf16.mxu0 0
        %2752 = vmatpush1.bf16.msra.mxu0 0
        %2753 = vmatprep.subr.bf16.mxu0 0
        %2754 = vmatpush1.bf16.msra.mxu0 0
        %2755 = vmatprep.subr.bf16.mxu0 0
        %2756 = vmatpush1.bf16.msra.mxu0 0
        %2757 = vmatprep.subr.bf16.mxu0 0
        %2758 = vmatpush1.bf16.msra.mxu0 0
        %2759 = vmatprep.subr.bf16.mxu0 0
        %2760 = vmatpush1.bf16.msra.mxu0 0
        %2761 = vmatprep.subr.bf16.mxu0 0
        %2762 = vmatpush1.bf16.msra.mxu0 0
        %2763 = vmatprep.subr.bf16.mxu0 0
        %2764 = vmatpush1.bf16.msra.mxu0 0
        %2765 = vmatprep.subr.bf16.mxu0 0
        %2766 = vmatpush1.bf16.msra.mxu0 0
        %2767 = vmatprep.subr.bf16.mxu0 0
        %2768 = vmatpush1.bf16.msra.mxu0 0
        %2769 = vmatprep.subr.bf16.mxu0 0
        %2770 = vmatpush1.bf16.msra.mxu0 0
        %2771 = vmatprep.subr.bf16.mxu0 0
        %2772 = vmatpush1.bf16.msra.mxu0 0
        %2773 = vmatprep.subr.bf16.mxu0 0
        %2774 = vmatpush1.bf16.msra.mxu0 0
        %2775 = vmatprep.mubr.bf16.mxu0 0
        %2776 = vmatmul.mubr.bf16.gmra.mrb[0].mxu0 %v2741
        %v2777 = vpop.f32.mrb[0].mxu0
        %v2778 = vadd.f32 0.0, %v2777
        %v2779 = vpop.f32.mrb[0].mxu0
        %v2780 = vpop.f32.mrb[0].mxu0
        %v2781 = vpop.f32.mrb[0].mxu0
        %2782 = vdwg.mxu0
        %v2783 = vadd.f32 %v2164, %v2778
        %s2784 = scalar_lea.vmem %s815, 48
        %v2785 = vld [vmem:[%s2784] sm:$0xf]
        %v2786 = vld [vmem:[%s2784 + $0x4] sm:$0xf]
        %v2787 = vld [vmem:[%s2784 + $0x8] sm:$0xf]
        %v2788 = vld [vmem:[%s2784 + $0xc] sm:$0xf]
        %s2789 = scalar_lea.vmem %s829, 3
        %v2790 = vld [vmem:[%s2789] sm:$0x1]
        %v2792 = vlaneseq
        %v2793 = vshrl.u32 %v2792, 7
        %v2794 = vsub.s32 0, %v2793
        %v2795 = vrot.slane %v2790, %v2794
        %v2801 = vunpack.c.l.b16 %v2785
        %v2802 = vunpack.c.l.b16 %v2786
        %v2803 = vunpack.c.l.b16 %v2787
        %v2804 = vunpack.c.l.b16 %v2788
        %v2805 = vpack.c.b16 %v2802, %v2801
        %v2806 = vpack.c.b16 %v2804, %v2803
        %2809 = vmatprep.subr.bf16.mxu0 0
        %2810 = vmatpush1.bf16.msra.mxu0 %v2805
        %2811 = vmatprep.subr.bf16.mxu0 0
        %2812 = vmatpush1.bf16.msra.mxu0 %v2806
        %2813 = vmatprep.subr.bf16.mxu0 0
        %2814 = vmatpush1.bf16.msra.mxu0 0
        %2815 = vmatprep.subr.bf16.mxu0 0
        %2816 = vmatpush1.bf16.msra.mxu0 0
        %2817 = vmatprep.subr.bf16.mxu0 0
        %2818 = vmatpush1.bf16.msra.mxu0 0
        %2819 = vmatprep.subr.bf16.mxu0 0
        %2820 = vmatpush1.bf16.msra.mxu0 0
        %2821 = vmatprep.subr.bf16.mxu0 0
        %2822 = vmatpush1.bf16.msra.mxu0 0
        %2823 = vmatprep.subr.bf16.mxu0 0
        %2824 = vmatpush1.bf16.msra.mxu0 0
        %2825 = vmatprep.subr.bf16.mxu0 0
        %2826 = vmatpush1.bf16.msra.mxu0 0
        %2827 = vmatprep.subr.bf16.mxu0 0
        %2828 = vmatpush1.bf16.msra.mxu0 0
        %2829 = vmatprep.subr.bf16.mxu0 0
        %2830 = vmatpush1.bf16.msra.mxu0 0
        %2831 = vmatprep.subr.bf16.mxu0 0
        %2832 = vmatpush1.bf16.msra.mxu0 0
        %2833 = vmatprep.subr.bf16.mxu0 0
        %2834 = vmatpush1.bf16.msra.mxu0 0
        %2835 = vmatprep.subr.bf16.mxu0 0
        %2836 = vmatpush1.bf16.msra.mxu0 0
        %2837 = vmatprep.subr.bf16.mxu0 0
        %2838 = vmatpush1.bf16.msra.mxu0 0
        %2839 = vmatprep.subr.bf16.mxu0 0
        %2840 = vmatpush1.bf16.msra.mxu0 0
        %2841 = vmatprep.mubr.bf16.mxu0 0
        %2842 = vmatmul.mubr.bf16.gmra.mrb[0].mxu0 %v954
        %v2843 = vpop.f32.mrb[0].mxu0
        %v2844 = vadd.f32 %v2795, %v2843
        %v2845 = vpop.f32.mrb[0].mxu0
        %v2846 = vpop.f32.mrb[0].mxu0
        %v2847 = vadd.f32 %v2795, %v2846
        %v2848 = vpop.f32.mrb[0].mxu0
        %2849 = vdwg.mxu0
        %s2850 = scalar_lea.vmem %s820, 48
        %v2851 = vld [vmem:[%s2850] sm:$0xf]
        %v2852 = vld [vmem:[%s2850 + $0x4] sm:$0xf]
        %v2853 = vld [vmem:[%s2850 + $0x8] sm:$0xf]
        %v2854 = vld [vmem:[%s2850 + $0xc] sm:$0xf]
        %s2855 = scalar_lea.vmem %s833, 3
        %v2856 = vld [vmem:[%s2855] sm:$0x1]
        %v2858 = vlaneseq
        %v2859 = vshrl.u32 %v2858, 7
        %v2860 = vsub.s32 0, %v2859
        %v2861 = vrot.slane %v2856, %v2860
        %v2867 = vunpack.c.l.b16 %v2851
        %v2868 = vunpack.c.l.b16 %v2852
        %v2869 = vunpack.c.l.b16 %v2853
        %v2870 = vunpack.c.l.b16 %v2854
        %v2871 = vpack.c.b16 %v2868, %v2867
        %v2872 = vpack.c.b16 %v2870, %v2869
        %2875 = vmatprep.subr.bf16.mxu0 0
        %2876 = vmatpush1.bf16.msra.mxu0 %v2871
        %2877 = vmatprep.subr.bf16.mxu0 0
        %2878 = vmatpush1.bf16.msra.mxu0 %v2872
        %2879 = vmatprep.subr.bf16.mxu0 0
        %2880 = vmatpush1.bf16.msra.mxu0 0
        %2881 = vmatprep.subr.bf16.mxu0 0
        %2882 = vmatpush1.bf16.msra.mxu0 0
        %2883 = vmatprep.subr.bf16.mxu0 0
        %2884 = vmatpush1.bf16.msra.mxu0 0
        %2885 = vmatprep.subr.bf16.mxu0 0
        %2886 = vmatpush1.bf16.msra.mxu0 0
        %2887 = vmatprep.subr.bf16.mxu0 0
        %2888 = vmatpush1.bf16.msra.mxu0 0
        %2889 = vmatprep.subr.bf16.mxu0 0
        %2890 = vmatpush1.bf16.msra.mxu0 0
        %2891 = vmatprep.subr.bf16.mxu0 0
        %2892 = vmatpush1.bf16.msra.mxu0 0
        %2893 = vmatprep.subr.bf16.mxu0 0
        %2894 = vmatpush1.bf16.msra.mxu0 0
        %2895 = vmatprep.subr.bf16.mxu0 0
        %2896 = vmatpush1.bf16.msra.mxu0 0
        %2897 = vmatprep.subr.bf16.mxu0 0
        %2898 = vmatpush1.bf16.msra.mxu0 0
        %2899 = vmatprep.subr.bf16.mxu0 0
        %2900 = vmatpush1.bf16.msra.mxu0 0
        %2901 = vmatprep.subr.bf16.mxu0 0
        %2902 = vmatpush1.bf16.msra.mxu0 0
        %2903 = vmatprep.subr.bf16.mxu0 0
        %2904 = vmatpush1.bf16.msra.mxu0 0
        %2905 = vmatprep.subr.bf16.mxu0 0
        %2906 = vmatpush1.bf16.msra.mxu0 0
        %2907 = vmatprep.mubr.bf16.mxu0 0
        %2908 = vmatmul.mubr.bf16.gmra.mrb[0].mxu0 %v954
        %v2909 = vpop.f32.mrb[0].mxu0
        %v2910 = vadd.f32 %v2861, %v2909
        %v2911 = vpop.f32.mrb[0].mxu0
        %v2912 = vpop.f32.mrb[0].mxu0
        %v2913 = vadd.f32 %v2861, %v2912
        %v2914 = vpop.f32.mrb[0].mxu0
        %2915 = vdwg.mxu0
        %s2916 = scalar_lea.vmem %s825, 48
        %v2917 = vld [vmem:[%s2916] sm:$0xf]
        %v2918 = vld [vmem:[%s2916 + $0x4] sm:$0xf]
        %v2919 = vld [vmem:[%s2916 + $0x8] sm:$0xf]
        %v2920 = vld [vmem:[%s2916 + $0xc] sm:$0xf]
        %s2921 = scalar_lea.vmem %s837, 3
        %v2922 = vld [vmem:[%s2921] sm:$0x1]
        %v2924 = vlaneseq
        %v2925 = vshrl.u32 %v2924, 7
        %v2926 = vsub.s32 0, %v2925
        %v2927 = vrot.slane %v2922, %v2926
        %v2933 = vunpack.c.l.b16 %v2917
        %v2934 = vunpack.c.l.b16 %v2918
        %v2935 = vunpack.c.l.b16 %v2919
        %v2936 = vunpack.c.l.b16 %v2920
        %v2937 = vpack.c.b16 %v2934, %v2933
        %v2938 = vpack.c.b16 %v2936, %v2935
        %2941 = vmatprep.subr.bf16.mxu0 0
        %2942 = vmatpush1.bf16.msra.mxu0 %v2937
        %2943 = vmatprep.subr.bf16.mxu0 0
        %2944 = vmatpush1.bf16.msra.mxu0 %v2938
        %2945 = vmatprep.subr.bf16.mxu0 0
        %2946 = vmatpush1.bf16.msra.mxu0 0
        %2947 = vmatprep.subr.bf16.mxu0 0
        %2948 = vmatpush1.bf16.msra.mxu0 0
        %2949 = vmatprep.subr.bf16.mxu0 0
        %2950 = vmatpush1.bf16.msra.mxu0 0
        %2951 = vmatprep.subr.bf16.mxu0 0
        %2952 = vmatpush1.bf16.msra.mxu0 0
        %2953 = vmatprep.subr.bf16.mxu0 0
        %2954 = vmatpush1.bf16.msra.mxu0 0
        %2955 = vmatprep.subr.bf16.mxu0 0
        %2956 = vmatpush1.bf16.msra.mxu0 0
        %2957 = vmatprep.subr.bf16.mxu0 0
        %2958 = vmatpush1.bf16.msra.mxu0 0
        %2959 = vmatprep.subr.bf16.mxu0 0
        %2960 = vmatpush1.bf16.msra.mxu0 0
        %2961 = vmatprep.subr.bf16.mxu0 0
        %2962 = vmatpush1.bf16.msra.mxu0 0
        %2963 = vmatprep.subr.bf16.mxu0 0
        %2964 = vmatpush1.bf16.msra.mxu0 0
        %2965 = vmatprep.subr.bf16.mxu0 0
        %2966 = vmatpush1.bf16.msra.mxu0 0
        %2967 = vmatprep.subr.bf16.mxu0 0
        %2968 = vmatpush1.bf16.msra.mxu0 0
        %2969 = vmatprep.subr.bf16.mxu0 0
        %2970 = vmatpush1.bf16.msra.mxu0 0
        %2971 = vmatprep.subr.bf16.mxu0 0
        %2972 = vmatpush1.bf16.msra.mxu0 0
        %2973 = vmatprep.mubr.bf16.mxu0 0
        %2974 = vmatmul.mubr.bf16.gmra.mrb[0].mxu0 %v954
        %v2975 = vpop.f32.mrb[0].mxu0
        %v2976 = vadd.f32 %v2927, %v2975
        %v2977 = vpop.f32.mrb[0].mxu0
        %v2978 = vpop.f32.mrb[0].mxu0
        %v2979 = vadd.f32 %v2927, %v2978
        %v2980 = vpop.f32.mrb[0].mxu0
        %2981 = vdwg.mxu0
        %s2982 = scalar_lea.vmem %s842, 12
        %v2983 = vld [vmem:[%s2982] sm:$0xf]
        %v2984 = vmul.f32 %v2844, 0.35355338
        %v2986 = vsel %vm1134, %v2984, 0
        %v2989 = vsel %vm1134, %v2910, 0
        %2991 = vmatprep.subr.mxu0 0.0
        %2992 = vmatpush1.xpose.msra.mxu0 %v2989
        %2993 = vmatprep.subr.mxu0 0.0
        %2994 = vmatpush1.xpose.msra.mxu0 0.0
        %2995 = vmatprep.subr.mxu0 0.0
        %2996 = vmatpush1.xpose.msra.mxu0 0.0
        %2997 = vmatprep.subr.mxu0 0.0
        %2998 = vmatpush1.xpose.msra.mxu0 0.0
        %2999 = vmatprep.subr.mxu0 0.0
        %3000 = vmatpush1.xpose.msra.mxu0 0.0
        %3001 = vmatprep.subr.mxu0 0.0
        %3002 = vmatpush1.xpose.msra.mxu0 0.0
        %3003 = vmatprep.subr.mxu0 0.0
        %3004 = vmatpush1.xpose.msra.mxu0 0.0
        %3005 = vmatprep.subr.mxu0 0.0
        %3006 = vmatpush1.xpose.msra.mxu0 0.0
        %3007 = vmatprep.subr.mxu0 0.0
        %3008 = vmatpush1.xpose.msra.mxu0 0.0
        %3009 = vmatprep.subr.mxu0 0.0
        %3010 = vmatpush1.xpose.msra.mxu0 0.0
        %3011 = vmatprep.subr.mxu0 0.0
        %3012 = vmatpush1.xpose.msra.mxu0 0.0
        %3013 = vmatprep.subr.mxu0 0.0
        %3014 = vmatpush1.xpose.msra.mxu0 0.0
        %3015 = vmatprep.subr.mxu0 0.0
        %3016 = vmatpush1.xpose.msra.mxu0 0.0
        %3017 = vmatprep.subr.mxu0 0.0
        %3018 = vmatpush1.xpose.msra.mxu0 0.0
        %3019 = vmatprep.subr.mxu0 0.0
        %3020 = vmatpush1.xpose.msra.mxu0 0.0
        %3021 = vmatprep.subr.mxu0 0.0
        %3022 = vmatpush1.xpose.msra.mxu0 0.0
        %3023 = vmatprep.subr.mxu0 0.0
        %3024 = vmatpush1.xpose.msra.mxu0 0.0
        %3025 = vmatprep.subr.mxu0 0.0
        %3026 = vmatpush1.xpose.msra.mxu0 0.0
        %3027 = vmatprep.subr.mxu0 0.0
        %3028 = vmatpush1.xpose.msra.mxu0 0.0
        %3029 = vmatprep.subr.mxu0 0.0
        %3030 = vmatpush1.xpose.msra.mxu0 0.0
        %3031 = vmatprep.subr.mxu0 0.0
        %3032 = vmatpush1.xpose.msra.mxu0 0.0
        %3033 = vmatprep.subr.mxu0 0.0
        %3034 = vmatpush1.xpose.msra.mxu0 0.0
        %3035 = vmatprep.subr.mxu0 0.0
        %3036 = vmatpush1.xpose.msra.mxu0 0.0
        %3037 = vmatprep.subr.mxu0 0.0
        %3038 = vmatpush1.xpose.msra.mxu0 0.0
        %3039 = vmatprep.subr.mxu0 0.0
        %3040 = vmatpush1.xpose.msra.mxu0 0.0
        %3041 = vmatprep.subr.mxu0 0.0
        %3042 = vmatpush1.xpose.msra.mxu0 0.0
        %3043 = vmatprep.subr.mxu0 0.0
        %3044 = vmatpush1.xpose.msra.mxu0 0.0
        %3045 = vmatprep.subr.mxu0 0.0
        %3046 = vmatpush1.xpose.msra.mxu0 0.0
        %3047 = vmatprep.subr.mxu0 0.0
        %3048 = vmatpush1.xpose.msra.mxu0 0.0
        %3049 = vmatprep.subr.mxu0 0.0
        %3050 = vmatpush1.xpose.msra.mxu0 0.0
        %3051 = vmatprep.subr.mxu0 0.0
        %3052 = vmatpush1.xpose.msra.mxu0 0.0
        %3053 = vmatprep.subr.mxu0 0.0
        %3054 = vmatpush1.xpose.msra.mxu0 0.0
        %3055 = vmatprep.mubr.f32.mxu0 0.0
        %3056 = vmatmul.mubr.f32.gmra.mrb[0].mxu0 %v2986
        %v3057 = vpop.f32.mrb[0].mxu0
        %v3058 = vadd.f32 %v1132, %v3057
        %v3059 = vpop.f32.mrb[0].mxu0
        %3060 = vdwg.mxu0
        %v3061 = vsel %vm1134, %v3058, -inf
        %3062 = vmax.xlane.f32.xlu0 %v3061
        %v3063 = vpop.xlane.xlu0 %3062
        %v3064 = vsub.f32 %v3058, %v3063
        %v3065 = vmul.f32 %v3064, 1.442695
        %v3066 = vpow.pop %v3065
        %v3067 = vsel %vm1134, %v3066, 0.0
        %3068 = vadd.xlane.f32.xlu0 %v3067
        %v3069 = vpop.xlane.xlu0 %3068
        %v3070 = vrcp.pop %v3069
        %v3071 = vmul.f32 %v3066, %v3070
        %v3073 = vsel %vm1134, %v3071, 0
        %3075 = vmatprep.subr.mxu0 0.0
        %3076 = vmatpush1.msra.mxu0 %v2976
        %3077 = vmatprep.subr.mxu0 0.0
        %3078 = vmatpush1.msra.mxu0 0.0
        %3079 = vmatprep.subr.mxu0 0.0
        %3080 = vmatpush1.msra.mxu0 0.0
        %3081 = vmatprep.subr.mxu0 0.0
        %3082 = vmatpush1.msra.mxu0 0.0
        %3083 = vmatprep.subr.mxu0 0.0
        %3084 = vmatpush1.msra.mxu0 0.0
        %3085 = vmatprep.subr.mxu0 0.0
        %3086 = vmatpush1.msra.mxu0 0.0
        %3087 = vmatprep.subr.mxu0 0.0
        %3088 = vmatpush1.msra.mxu0 0.0
        %3089 = vmatprep.subr.mxu0 0.0
        %3090 = vmatpush1.msra.mxu0 0.0
        %3091 = vmatprep.subr.mxu0 0.0
        %3092 = vmatpush1.msra.mxu0 0.0
        %3093 = vmatprep.subr.mxu0 0.0
        %3094 = vmatpush1.msra.mxu0 0.0
        %3095 = vmatprep.subr.mxu0 0.0
        %3096 = vmatpush1.msra.mxu0 0.0
        %3097 = vmatprep.subr.mxu0 0.0
        %3098 = vmatpush1.msra.mxu0 0.0
        %3099 = vmatprep.subr.mxu0 0.0
        %3100 = vmatpush1.msra.mxu0 0.0
        %3101 = vmatprep.subr.mxu0 0.0
        %3102 = vmatpush1.msra.mxu0 0.0
        %3103 = vmatprep.subr.mxu0 0.0
        %3104 = vmatpush1.msra.mxu0 0.0
        %3105 = vmatprep.subr.mxu0 0.0
        %3106 = vmatpush1.msra.mxu0 0.0
        %3107 = vmatprep.subr.mxu0 0.0
        %3108 = vmatpush1.msra.mxu0 0.0
        %3109 = vmatprep.subr.mxu0 0.0
        %3110 = vmatpush1.msra.mxu0 0.0
        %3111 = vmatprep.subr.mxu0 0.0
        %3112 = vmatpush1.msra.mxu0 0.0
        %3113 = vmatprep.subr.mxu0 0.0
        %3114 = vmatpush1.msra.mxu0 0.0
        %3115 = vmatprep.subr.mxu0 0.0
        %3116 = vmatpush1.msra.mxu0 0.0
        %3117 = vmatprep.subr.mxu0 0.0
        %3118 = vmatpush1.msra.mxu0 0.0
        %3119 = vmatprep.subr.mxu0 0.0
        %3120 = vmatpush1.msra.mxu0 0.0
        %3121 = vmatprep.subr.mxu0 0.0
        %3122 = vmatpush1.msra.mxu0 0.0
        %3123 = vmatprep.subr.mxu0 0.0
        %3124 = vmatpush1.msra.mxu0 0.0
        %3125 = vmatprep.subr.mxu0 0.0
        %3126 = vmatpush1.msra.mxu0 0.0
        %3127 = vmatprep.subr.mxu0 0.0
        %3128 = vmatpush1.msra.mxu0 0.0
        %3129 = vmatprep.subr.mxu0 0.0
        %3130 = vmatpush1.msra.mxu0 0.0
        %3131 = vmatprep.subr.mxu0 0.0
        %3132 = vmatpush1.msra.mxu0 0.0
        %3133 = vmatprep.subr.mxu0 0.0
        %3134 = vmatpush1.msra.mxu0 0.0
        %3135 = vmatprep.subr.mxu0 0.0
        %3136 = vmatpush1.msra.mxu0 0.0
        %3137 = vmatprep.subr.mxu0 0.0
        %3138 = vmatpush1.msra.mxu0 0.0
        %3139 = vmatprep.mubr.f32.mxu0 0.0
        %3140 = vmatmul.mubr.f32.gmra.mrb[0].mxu0 %v3073
        %v3141 = vpop.f32.mrb[0].mxu0
        %v3142 = vadd.f32 0.0, %v3141
        %v3143 = vpop.f32.mrb[0].mxu0
        %3144 = vdwg.mxu0
        %v3145 = vpack.c.bf16 %v3142, %v3142
        %v3147 = vsel %vm1134, %v3145, 0
        %v3150 = vsel %vm1831, %v2983, 0
        %3152 = vmatprep.subr.bf16.mxu0 0
        %3153 = vmatpush1.bf16.msra.mxu0 %v3150
        %3154 = vmatprep.subr.bf16.mxu0 0
        %3155 = vmatpush1.bf16.msra.mxu0 0
        %3156 = vmatprep.subr.bf16.mxu0 0
        %3157 = vmatpush1.bf16.msra.mxu0 0
        %3158 = vmatprep.subr.bf16.mxu0 0
        %3159 = vmatpush1.bf16.msra.mxu0 0
        %3160 = vmatprep.subr.bf16.mxu0 0
        %3161 = vmatpush1.bf16.msra.mxu0 0
        %3162 = vmatprep.subr.bf16.mxu0 0
        %3163 = vmatpush1.bf16.msra.mxu0 0
        %3164 = vmatprep.subr.bf16.mxu0 0
        %3165 = vmatpush1.bf16.msra.mxu0 0
        %3166 = vmatprep.subr.bf16.mxu0 0
        %3167 = vmatpush1.bf16.msra.mxu0 0
        %3168 = vmatprep.subr.bf16.mxu0 0
        %3169 = vmatpush1.bf16.msra.mxu0 0
        %3170 = vmatprep.subr.bf16.mxu0 0
        %3171 = vmatpush1.bf16.msra.mxu0 0
        %3172 = vmatprep.subr.bf16.mxu0 0
        %3173 = vmatpush1.bf16.msra.mxu0 0
        %3174 = vmatprep.subr.bf16.mxu0 0
        %3175 = vmatpush1.bf16.msra.mxu0 0
        %3176 = vmatprep.subr.bf16.mxu0 0
        %3177 = vmatpush1.bf16.msra.mxu0 0
        %3178 = vmatprep.subr.bf16.mxu0 0
        %3179 = vmatpush1.bf16.msra.mxu0 0
        %3180 = vmatprep.subr.bf16.mxu0 0
        %3181 = vmatpush1.bf16.msra.mxu0 0
        %3182 = vmatprep.subr.bf16.mxu0 0
        %3183 = vmatpush1.bf16.msra.mxu0 0
        %3184 = vmatprep.mubr.bf16.mxu0 0
        %3185 = vmatmul.mubr.bf16.gmra.mrb[0].mxu0 %v3147
        %v3186 = vpop.f32.mrb[0].mxu0
        %v3187 = vadd.f32 0.0, %v3186
        %v3188 = vpop.f32.mrb[0].mxu0
        %v3189 = vpop.f32.mrb[0].mxu0
        %v3190 = vpop.f32.mrb[0].mxu0
        %3191 = vdwg.mxu0
        %v3192 = vadd.f32 %v2577, %v3187
        %v3193 = vmul.f32 %v2847, 0.35355338
        %v3195 = vsel %vm1134, %v3193, 0
        %v3198 = vsel %vm1134, %v2913, 0
        %3200 = vmatprep.subr.mxu0 0.0
        %3201 = vmatpush1.xpose.msra.mxu0 %v3198
        %3202 = vmatprep.subr.mxu0 0.0
        %3203 = vmatpush1.xpose.msra.mxu0 0.0
        %3204 = vmatprep.subr.mxu0 0.0
        %3205 = vmatpush1.xpose.msra.mxu0 0.0
        %3206 = vmatprep.subr.mxu0 0.0
        %3207 = vmatpush1.xpose.msra.mxu0 0.0
        %3208 = vmatprep.subr.mxu0 0.0
        %3209 = vmatpush1.xpose.msra.mxu0 0.0
        %3210 = vmatprep.subr.mxu0 0.0
        %3211 = vmatpush1.xpose.msra.mxu0 0.0
        %3212 = vmatprep.subr.mxu0 0.0
        %3213 = vmatpush1.xpose.msra.mxu0 0.0
        %3214 = vmatprep.subr.mxu0 0.0
        %3215 = vmatpush1.xpose.msra.mxu0 0.0
        %3216 = vmatprep.subr.mxu0 0.0
        %3217 = vmatpush1.xpose.msra.mxu0 0.0
        %3218 = vmatprep.subr.mxu0 0.0
        %3219 = vmatpush1.xpose.msra.mxu0 0.0
        %3220 = vmatprep.subr.mxu0 0.0
        %3221 = vmatpush1.xpose.msra.mxu0 0.0
        %3222 = vmatprep.subr.mxu0 0.0
        %3223 = vmatpush1.xpose.msra.mxu0 0.0
        %3224 = vmatprep.subr.mxu0 0.0
        %3225 = vmatpush1.xpose.msra.mxu0 0.0
        %3226 = vmatprep.subr.mxu0 0.0
        %3227 = vmatpush1.xpose.msra.mxu0 0.0
        %3228 = vmatprep.subr.mxu0 0.0
        %3229 = vmatpush1.xpose.msra.mxu0 0.0
        %3230 = vmatprep.subr.mxu0 0.0
        %3231 = vmatpush1.xpose.msra.mxu0 0.0
        %3232 = vmatprep.subr.mxu0 0.0
        %3233 = vmatpush1.xpose.msra.mxu0 0.0
        %3234 = vmatprep.subr.mxu0 0.0
        %3235 = vmatpush1.xpose.msra.mxu0 0.0
        %3236 = vmatprep.subr.mxu0 0.0
        %3237 = vmatpush1.xpose.msra.mxu0 0.0
        %3238 = vmatprep.subr.mxu0 0.0
        %3239 = vmatpush1.xpose.msra.mxu0 0.0
        %3240 = vmatprep.subr.mxu0 0.0
        %3241 = vmatpush1.xpose.msra.mxu0 0.0
        %3242 = vmatprep.subr.mxu0 0.0
        %3243 = vmatpush1.xpose.msra.mxu0 0.0
        %3244 = vmatprep.subr.mxu0 0.0
        %3245 = vmatpush1.xpose.msra.mxu0 0.0
        %3246 = vmatprep.subr.mxu0 0.0
        %3247 = vmatpush1.xpose.msra.mxu0 0.0
        %3248 = vmatprep.subr.mxu0 0.0
        %3249 = vmatpush1.xpose.msra.mxu0 0.0
        %3250 = vmatprep.subr.mxu0 0.0
        %3251 = vmatpush1.xpose.msra.mxu0 0.0
        %3252 = vmatprep.subr.mxu0 0.0
        %3253 = vmatpush1.xpose.msra.mxu0 0.0
        %3254 = vmatprep.subr.mxu0 0.0
        %3255 = vmatpush1.xpose.msra.mxu0 0.0
        %3256 = vmatprep.subr.mxu0 0.0
        %3257 = vmatpush1.xpose.msra.mxu0 0.0
        %3258 = vmatprep.subr.mxu0 0.0
        %3259 = vmatpush1.xpose.msra.mxu0 0.0
        %3260 = vmatprep.subr.mxu0 0.0
        %3261 = vmatpush1.xpose.msra.mxu0 0.0
        %3262 = vmatprep.subr.mxu0 0.0
        %3263 = vmatpush1.xpose.msra.mxu0 0.0
        %3264 = vmatprep.mubr.f32.mxu0 0.0
        %3265 = vmatmul.mubr.f32.gmra.mrb[0].mxu0 %v3195
        %v3266 = vpop.f32.mrb[0].mxu0
        %v3267 = vadd.f32 %v1303, %v3266
        %v3268 = vpop.f32.mrb[0].mxu0
        %3269 = vdwg.mxu0
        %v3270 = vsel %vm1134, %v3267, -inf
        %3271 = vmax.xlane.f32.xlu0 %v3270
        %v3272 = vpop.xlane.xlu0 %3271
        %v3273 = vsub.f32 %v3267, %v3272
        %v3274 = vmul.f32 %v3273, 1.442695
        %v3275 = vpow.pop %v3274
        %v3276 = vsel %vm1134, %v3275, 0.0
        %3277 = vadd.xlane.f32.xlu0 %v3276
        %v3278 = vpop.xlane.xlu0 %3277
        %v3279 = vrcp.pop %v3278
        %v3280 = vmul.f32 %v3275, %v3279
        %v3282 = vsel %vm1134, %v3280, 0
        %3284 = vmatprep.subr.mxu0 0.0
        %3285 = vmatpush1.msra.mxu0 %v2979
        %3286 = vmatprep.subr.mxu0 0.0
        %3287 = vmatpush1.msra.mxu0 0.0
        %3288 = vmatprep.subr.mxu0 0.0
        %3289 = vmatpush1.msra.mxu0 0.0
        %3290 = vmatprep.subr.mxu0 0.0
        %3291 = vmatpush1.msra.mxu0 0.0
        %3292 = vmatprep.subr.mxu0 0.0
        %3293 = vmatpush1.msra.mxu0 0.0
        %3294 = vmatprep.subr.mxu0 0.0
        %3295 = vmatpush1.msra.mxu0 0.0
        %3296 = vmatprep.subr.mxu0 0.0
        %3297 = vmatpush1.msra.mxu0 0.0
        %3298 = vmatprep.subr.mxu0 0.0
        %3299 = vmatpush1.msra.mxu0 0.0
        %3300 = vmatprep.subr.mxu0 0.0
        %3301 = vmatpush1.msra.mxu0 0.0
        %3302 = vmatprep.subr.mxu0 0.0
        %3303 = vmatpush1.msra.mxu0 0.0
        %3304 = vmatprep.subr.mxu0 0.0
        %3305 = vmatpush1.msra.mxu0 0.0
        %3306 = vmatprep.subr.mxu0 0.0
        %3307 = vmatpush1.msra.mxu0 0.0
        %3308 = vmatprep.subr.mxu0 0.0
        %3309 = vmatpush1.msra.mxu0 0.0
        %3310 = vmatprep.subr.mxu0 0.0
        %3311 = vmatpush1.msra.mxu0 0.0
        %3312 = vmatprep.subr.mxu0 0.0
        %3313 = vmatpush1.msra.mxu0 0.0
        %3314 = vmatprep.subr.mxu0 0.0
        %3315 = vmatpush1.msra.mxu0 0.0
        %3316 = vmatprep.subr.mxu0 0.0
        %3317 = vmatpush1.msra.mxu0 0.0
        %3318 = vmatprep.subr.mxu0 0.0
        %3319 = vmatpush1.msra.mxu0 0.0
        %3320 = vmatprep.subr.mxu0 0.0
        %3321 = vmatpush1.msra.mxu0 0.0
        %3322 = vmatprep.subr.mxu0 0.0
        %3323 = vmatpush1.msra.mxu0 0.0
        %3324 = vmatprep.subr.mxu0 0.0
        %3325 = vmatpush1.msra.mxu0 0.0
        %3326 = vmatprep.subr.mxu0 0.0
        %3327 = vmatpush1.msra.mxu0 0.0
        %3328 = vmatprep.subr.mxu0 0.0
        %3329 = vmatpush1.msra.mxu0 0.0
        %3330 = vmatprep.subr.mxu0 0.0
        %3331 = vmatpush1.msra.mxu0 0.0
        %3332 = vmatprep.subr.mxu0 0.0
        %3333 = vmatpush1.msra.mxu0 0.0
        %3334 = vmatprep.subr.mxu0 0.0
        %3335 = vmatpush1.msra.mxu0 0.0
        %3336 = vmatprep.subr.mxu0 0.0
        %3337 = vmatpush1.msra.mxu0 0.0
        %3338 = vmatprep.subr.mxu0 0.0
        %3339 = vmatpush1.msra.mxu0 0.0
        %3340 = vmatprep.subr.mxu0 0.0
        %3341 = vmatpush1.msra.mxu0 0.0
        %3342 = vmatprep.subr.mxu0 0.0
        %3343 = vmatpush1.msra.mxu0 0.0
        %3344 = vmatprep.subr.mxu0 0.0
        %3345 = vmatpush1.msra.mxu0 0.0
        %3346 = vmatprep.subr.mxu0 0.0
        %3347 = vmatpush1.msra.mxu0 0.0
        %3348 = vmatprep.mubr.f32.mxu0 0.0
        %3349 = vmatmul.mubr.f32.gmra.mrb[0].mxu0 %v3282
        %v3350 = vpop.f32.mrb[0].mxu0
        %v3351 = vadd.f32 0.0, %v3350
        %v3352 = vpop.f32.mrb[0].mxu0
        %3353 = vdwg.mxu0
        %v3354 = vpack.c.bf16 %v3351, %v3351
        %v3356 = vsel %vm1134, %v3354, 0
        %3358 = vmatprep.subr.bf16.mxu0 0
        %3359 = vmatpush1.bf16.msra.mxu0 %v3150
        %3360 = vmatprep.subr.bf16.mxu0 0
        %3361 = vmatpush1.bf16.msra.mxu0 0
        %3362 = vmatprep.subr.bf16.mxu0 0
        %3363 = vmatpush1.bf16.msra.mxu0 0
        %3364 = vmatprep.subr.bf16.mxu0 0
        %3365 = vmatpush1.bf16.msra.mxu0 0
        %3366 = vmatprep.subr.bf16.mxu0 0
        %3367 = vmatpush1.bf16.msra.mxu0 0
        %3368 = vmatprep.subr.bf16.mxu0 0
        %3369 = vmatpush1.bf16.msra.mxu0 0
        %3370 = vmatprep.subr.bf16.mxu0 0
        %3371 = vmatpush1.bf16.msra.mxu0 0
        %3372 = vmatprep.subr.bf16.mxu0 0
        %3373 = vmatpush1.bf16.msra.mxu0 0
        %3374 = vmatprep.subr.bf16.mxu0 0
        %3375 = vmatpush1.bf16.msra.mxu0 0
        %3376 = vmatprep.subr.bf16.mxu0 0
        %3377 = vmatpush1.bf16.msra.mxu0 0
        %3378 = vmatprep.subr.bf16.mxu0 0
        %3379 = vmatpush1.bf16.msra.mxu0 0
        %3380 = vmatprep.subr.bf16.mxu0 0
        %3381 = vmatpush1.bf16.msra.mxu0 0
        %3382 = vmatprep.subr.bf16.mxu0 0
        %3383 = vmatpush1.bf16.msra.mxu0 0
        %3384 = vmatprep.subr.bf16.mxu0 0
        %3385 = vmatpush1.bf16.msra.mxu0 0
        %3386 = vmatprep.subr.bf16.mxu0 0
        %3387 = vmatpush1.bf16.msra.mxu0 0
        %3388 = vmatprep.subr.bf16.mxu0 0
        %3389 = vmatpush1.bf16.msra.mxu0 0
        %3390 = vmatprep.mubr.bf16.mxu0 0
        %3391 = vmatmul.mubr.bf16.gmra.mrb[0].mxu0 %v3356
        %v3392 = vpop.f32.mrb[0].mxu0
        %v3393 = vadd.f32 0.0, %v3392
        %v3394 = vpop.f32.mrb[0].mxu0
        %v3395 = vpop.f32.mrb[0].mxu0
        %v3396 = vpop.f32.mrb[0].mxu0
        %3397 = vdwg.mxu0
        %v3398 = vadd.f32 %v2783, %v3393
        %v3399 = vld [vmem:[%s845] sm:$0x1]
        %v3401 = vlaneseq
        %v3402 = vshrl.u32 %v3401, 7
        %v3403 = vsub.s32 0, %v3402
        %v3404 = vrot.slane %v3399, %v3403
        %v3406 = vadd.f32 %v3192, %v3404
        %v3407 = vadd.f32 %v3398, %v3404
        %v3408 = vadd.f32 %v926, %v3406
        %v3409 = vadd.f32 %v927, %v3407
        %v3410 = vld [vmem:[%s849] sm:$0x1]
        %s3411 = scalar_lea.vmem %s849, 1
        %v3412 = vld [vmem:[%s3411] sm:$0x1]
        %v3413 = vsel %vm952, %v3408, 0.0
        %3414 = vadd.xlane.f32.xlu0 %v3413
        %v3415 = vpop.xlane.xlu0 %3414
        %v3416 = vsel %vm952, %v3409, 0.0
        %3417 = vadd.xlane.f32.xlu0 %v3416
        %v3418 = vpop.xlane.xlu0 %3417
        %v3419 = vrcp.pop 32.0
        %v3420 = vmul.f32 %v3415, %v3419
        %v3421 = vmul.f32 %v3418, %v3419
        %v3422 = vsub.f32 %v3408, %v3420
        %v3423 = vsub.f32 %v3409, %v3421
        %v3424 = vmul.f32 %v3422, %v3422
        %v3425 = vmul.f32 %v3423, %v3423
        %v3426 = vsel %vm952, %v3424, 0.0
        %3427 = vadd.xlane.f32.xlu0 %v3426
        %v3428 = vpop.xlane.xlu0 %3427
        %v3429 = vsel %vm952, %v3425, 0.0
        %3430 = vadd.xlane.f32.xlu0 %v3429
        %v3431 = vpop.xlane.xlu0 %3430
        %v3432 = vmul.f32 %v3428, %v3419
        %v3433 = vmul.f32 %v3431, %v3419
        %v3434 = vadd.f32 %v3432, 1e-12
        %v3435 = vadd.f32 %v3433, 1e-12
        %v3436 = vrsqrt.pop %v3434
        %v3437 = vrsqrt.pop %v3435
        %v3438 = vmul.f32 %v3422, %v3436
        %v3439 = vmul.f32 %v3423, %v3437
        %v3441 = vlaneseq
        %v3442 = vshrl.u32 %v3441, 7
        %v3443 = vsub.s32 0, %v3442
        %v3444 = vrot.slane %v3410, %v3443
        %v3446 = vmul.f32 %v3438, %v3444
        %v3447 = vmul.f32 %v3439, %v3444
        %v3449 = vlaneseq
        %v3450 = vshrl.u32 %v3449, 7
        %v3451 = vsub.s32 0, %v3450
        %v3452 = vrot.slane %v3412, %v3451
        %v3454 = vadd.f32 %v3446, %v3452
        %v3455 = vadd.f32 %v3447, %v3452
        %v3456 = vpack.c.bf16 %v3455, %v3454
        %v3457 = vld [vmem:[%s854] sm:$0xf]
        %v3458 = vld [vmem:[%s854 + $0x4] sm:$0xf]
        %v3459 = vld [vmem:[%s854 + $0x8] sm:$0xf]
        %v3460 = vld [vmem:[%s854 + $0xc] sm:$0xf]
        %v3461 = vld [vmem:[%s857] sm:$0x1]
        %v3463 = vlaneseq
        %v3464 = vshrl.u32 %v3463, 7
        %v3465 = vsub.s32 0, %v3464
        %v3466 = vrot.slane %v3461, %v3465
        %v3472 = vunpack.c.l.b16 %v3457
        %v3473 = vunpack.c.l.b16 %v3458
        %v3474 = vunpack.c.l.b16 %v3459
        %v3475 = vunpack.c.l.b16 %v3460
        %v3476 = vpack.c.b16 %v3473, %v3472
        %v3477 = vpack.c.b16 %v3475, %v3474
        %v3481 = vsel %vm952, %v3456, 0
        %3483 = vmatprep.subr.bf16.mxu0 0
        %3484 = vmatpush1.bf16.msra.mxu0 %v3476
        %3485 = vmatprep.subr.bf16.mxu0 0
        %3486 = vmatpush1.bf16.msra.mxu0 %v3477
        %3487 = vmatprep.subr.bf16.mxu0 0
        %3488 = vmatpush1.bf16.msra.mxu0 0
        %3489 = vmatprep.subr.bf16.mxu0 0
        %3490 = vmatpush1.bf16.msra.mxu0 0
        %3491 = vmatprep.subr.bf16.mxu0 0
        %3492 = vmatpush1.bf16.msra.mxu0 0
        %3493 = vmatprep.subr.bf16.mxu0 0
        %3494 = vmatpush1.bf16.msra.mxu0 0
        %3495 = vmatprep.subr.bf16.mxu0 0
        %3496 = vmatpush1.bf16.msra.mxu0 0
        %3497 = vmatprep.subr.bf16.mxu0 0
        %3498 = vmatpush1.bf16.msra.mxu0 0
        %3499 = vmatprep.subr.bf16.mxu0 0
        %3500 = vmatpush1.bf16.msra.mxu0 0
        %3501 = vmatprep.subr.bf16.mxu0 0
        %3502 = vmatpush1.bf16.msra.mxu0 0
        %3503 = vmatprep.subr.bf16.mxu0 0
        %3504 = vmatpush1.bf16.msra.mxu0 0
        %3505 = vmatprep.subr.bf16.mxu0 0
        %3506 = vmatpush1.bf16.msra.mxu0 0
        %3507 = vmatprep.subr.bf16.mxu0 0
        %3508 = vmatpush1.bf16.msra.mxu0 0
        %3509 = vmatprep.subr.bf16.mxu0 0
        %3510 = vmatpush1.bf16.msra.mxu0 0
        %3511 = vmatprep.subr.bf16.mxu0 0
        %3512 = vmatpush1.bf16.msra.mxu0 0
        %3513 = vmatprep.subr.bf16.mxu0 0
        %3514 = vmatpush1.bf16.msra.mxu0 0
        %3515 = vmatprep.mubr.bf16.mxu0 0
        %3516 = vmatmul.mubr.bf16.gmra.mrb[0].mxu0 %v3481
        %v3517 = vpop.f32.mrb[0].mxu0
        %v3518 = vadd.f32 %v3466, %v3517
        %v3519 = vpop.f32.mrb[0].mxu0
        %v3520 = vpop.f32.mrb[0].mxu0
        %v3521 = vadd.f32 %v3466, %v3520
        %v3522 = vpop.f32.mrb[0].mxu0
        %3523 = vdwg.mxu0
        %v3524 = vmul.f32 %v3518, %v3518
        %v3525 = vmul.f32 %v3521, %v3521
        %v3526 = vmul.f32 %v3518, %v3524
        %v3527 = vmul.f32 %v3521, %v3525
        %v3528 = vmul.f32 %v3526, 0.044715
        %v3529 = vmul.f32 %v3527, 0.044715
        %v3530 = vadd.f32 %v3518, %v3528
        %v3531 = vadd.f32 %v3521, %v3529
        %v3532 = vmul.f32 %v3530, 0.7978846
        %v3533 = vmul.f32 %v3531, 0.7978846
        %v3534 = vtanh.pop %v3532
        %v3535 = vtanh.pop %v3533
        %v3536 = vadd.f32 %v3534, 1.0
        %v3537 = vadd.f32 %v3535, 1.0
        %v3538 = vmul.f32 %v3536, 0.5
        %v3539 = vmul.f32 %v3537, 0.5
        %v3540 = vmul.f32 %v3518, %v3538
        %v3541 = vmul.f32 %v3521, %v3539
        %v3542 = vpack.c.bf16 %v3541, %v3540
        %v3543 = vld [vmem:[%s862] sm:$0xf]
        %v3544 = vld [vmem:[%s862 + $0x4] sm:$0xf]
        %v3545 = vld [vmem:[%s862 + $0x8] sm:$0xf]
        %v3546 = vld [vmem:[%s862 + $0xc] sm:$0xf]
        %v3547 = vld [vmem:[%s862 + $0x10] sm:$0xf]
        %v3548 = vld [vmem:[%s862 + $0x14] sm:$0xf]
        %v3549 = vld [vmem:[%s862 + $0x18] sm:$0xf]
        %v3550 = vld [vmem:[%s862 + $0x1c] sm:$0xf]
        %v3551 = vld [vmem:[%s865] sm:$0x1]
        %v3553 = vlaneseq
        %v3554 = vshrl.u32 %v3553, 7
        %v3555 = vsub.s32 0, %v3554
        %v3556 = vrot.slane %v3551, %v3555
        %v3566 = vunpack.c.l.b16 %v3543
        %v3567 = vunpack.c.l.b16 %v3544
        %v3568 = vunpack.c.l.b16 %v3545
        %v3569 = vunpack.c.l.b16 %v3546
        %v3570 = vunpack.c.l.b16 %v3547
        %v3571 = vunpack.c.l.b16 %v3548
        %v3572 = vunpack.c.l.b16 %v3549
        %v3573 = vunpack.c.l.b16 %v3550
        %v3574 = vpack.c.b16 %v3567, %v3566
        %v3575 = vpack.c.b16 %v3569, %v3568
        %v3576 = vpack.c.b16 %v3571, %v3570
        %v3577 = vpack.c.b16 %v3573, %v3572
        %vm3582 = vcmask 523264
        %v3584 = vsel %vm3582, %v3542, 0
        %3586 = vmatprep.subr.bf16.mxu0 0
        %3587 = vmatpush1.bf16.msra.mxu0 %v3574
        %3588 = vmatprep.subr.bf16.mxu0 0
        %3589 = vmatpush1.bf16.msra.mxu0 %v3575
        %3590 = vmatprep.subr.bf16.mxu0 0
        %3591 = vmatpush1.bf16.msra.mxu0 %v3576
        %3592 = vmatprep.subr.bf16.mxu0 0
        %3593 = vmatpush1.bf16.msra.mxu0 %v3577
        %3594 = vmatprep.subr.bf16.mxu0 0
        %3595 = vmatpush1.bf16.msra.mxu0 0
        %3596 = vmatprep.subr.bf16.mxu0 0
        %3597 = vmatpush1.bf16.msra.mxu0 0
        %3598 = vmatprep.subr.bf16.mxu0 0
        %3599 = vmatpush1.bf16.msra.mxu0 0
        %3600 = vmatprep.subr.bf16.mxu0 0
        %3601 = vmatpush1.bf16.msra.mxu0 0
        %3602 = vmatprep.subr.bf16.mxu0 0
        %3603 = vmatpush1.bf16.msra.mxu0 0
        %3604 = vmatprep.subr.bf16.mxu0 0
        %3605 = vmatpush1.bf16.msra.mxu0 0
        %3606 = vmatprep.subr.bf16.mxu0 0
        %3607 = vmatpush1.bf16.msra.mxu0 0
        %3608 = vmatprep.subr.bf16.mxu0 0
        %3609 = vmatpush1.bf16.msra.mxu0 0
        %3610 = vmatprep.subr.bf16.mxu0 0
        %3611 = vmatpush1.bf16.msra.mxu0 0
        %3612 = vmatprep.subr.bf16.mxu0 0
        %3613 = vmatpush1.bf16.msra.mxu0 0
        %3614 = vmatprep.subr.bf16.mxu0 0
        %3615 = vmatpush1.bf16.msra.mxu0 0
        %3616 = vmatprep.subr.bf16.mxu0 0
        %3617 = vmatpush1.bf16.msra.mxu0 0
        %3618 = vmatprep.mubr.bf16.mxu0 0
        %3619 = vmatmul.mubr.bf16.gmra.mrb[0].mxu0 %v3584
        %v3620 = vpop.f32.mrb[0].mxu0
        %v3621 = vadd.f32 %v3556, %v3620
        %v3622 = vpop.f32.mrb[0].mxu0
        %v3623 = vpop.f32.mrb[0].mxu0
        %v3624 = vadd.f32 %v3556, %v3623
        %v3625 = vpop.f32.mrb[0].mxu0
        %3626 = vdwg.mxu0
        %v3627 = vadd.f32 %v3454, %v3621
        %v3628 = vadd.f32 %v3455, %v3624
        %v3629 = vld [vmem:[%s869] sm:$0x1]
        %s3630 = scalar_lea.vmem %s869, 1
        %v3631 = vld [vmem:[%s3630] sm:$0x1]
        %v3632 = vsel %vm952, %v3627, 0.0
        %3633 = vadd.xlane.f32.xlu0 %v3632
        %v3634 = vpop.xlane.xlu0 %3633
        %v3635 = vsel %vm952, %v3628, 0.0
        %3636 = vadd.xlane.f32.xlu0 %v3635
        %v3637 = vpop.xlane.xlu0 %3636
        %v3638 = vmul.f32 %v3634, %v3419
        %v3639 = vmul.f32 %v3637, %v3419
        %v3640 = vsub.f32 %v3627, %v3638
        %v3641 = vsub.f32 %v3628, %v3639
        %v3642 = vmul.f32 %v3640, %v3640
        %v3643 = vmul.f32 %v3641, %v3641
        %v3644 = vsel %vm952, %v3642, 0.0
        %3645 = vadd.xlane.f32.xlu0 %v3644
        %v3646 = vpop.xlane.xlu0 %3645
        %v3647 = vsel %vm952, %v3643, 0.0
        %3648 = vadd.xlane.f32.xlu0 %v3647
        %v3649 = vpop.xlane.xlu0 %3648
        %v3650 = vmul.f32 %v3646, %v3419
        %v3651 = vmul.f32 %v3649, %v3419
        %v3652 = vadd.f32 %v3650, 1e-12
        %v3653 = vadd.f32 %v3651, 1e-12
        %v3654 = vrsqrt.pop %v3652
        %v3655 = vrsqrt.pop %v3653
        %v3656 = vmul.f32 %v3640, %v3654
        %v3657 = vmul.f32 %v3641, %v3655
        %v3659 = vlaneseq
        %v3660 = vshrl.u32 %v3659, 7
        %v3661 = vsub.s32 0, %v3660
        %v3662 = vrot.slane %v3629, %v3661
        %v3664 = vmul.f32 %v3656, %v3662
        %v3665 = vmul.f32 %v3657, %v3662
        %v3667 = vlaneseq
        %v3668 = vshrl.u32 %v3667, 7
        %v3669 = vsub.s32 0, %v3668
        %v3670 = vrot.slane %v3631, %v3669
        %v3672 = vadd.f32 %v3664, %v3670
        %v3673 = vadd.f32 %v3665, %v3670
        %3674 = vst.msk [vmem:[#allocation2] sm:$0xff] %vm952, %v3672
        %3675 = vst.msk [vmem:[#allocation2 + $0x8] sm:$0xff] %vm952, %v3673
        %p3676 = scmp.eq.s32.totalorder %s33, 1
        // Predicated region
        $region109: #{tpu_custom_call.1} parent=103 // pred_check
          %p3677 = pneg %p3676
        $region110: #{tpu_custom_call.1} parent=103 // pred_check_branch
          %3679 = sbr.rel (%p3677) target = $region112
        $region111: #{tpu_custom_call.1} parent=103 // pred_region
          %v3680 = vpack.c.bf16 %v3673, %v3672
          %v3681 = vld [vmem:[%s17] sm:$0xf]
          %v3682 = vld [vmem:[%s17 + $0x4] sm:$0xf]
          %v3683 = vld [vmem:[%s17 + $0x8] sm:$0xf]
          %v3684 = vld [vmem:[%s17 + $0xc] sm:$0xf]
          %v3685 = vld [vmem:[%s18] sm:$0x1]
          %v3687 = vlaneseq
          %v3688 = vshrl.u32 %v3687, 7
          %v3689 = vsub.s32 0, %v3688
          %v3690 = vrot.slane %v3685, %v3689
          %v3696 = vunpack.c.l.b16 %v3681
          %v3697 = vunpack.c.l.b16 %v3682
          %v3698 = vunpack.c.l.b16 %v3683
          %v3699 = vunpack.c.l.b16 %v3684
          %v3700 = vpack.c.b16 %v3697, %v3696
          %v3701 = vpack.c.b16 %v3699, %v3698
          %v3705 = vsel %vm952, %v3680, 0
          %3707 = vmatprep.subr.bf16.mxu0 0
          %3708 = vmatpush1.bf16.msra.mxu0 %v3700
          %3709 = vmatprep.subr.bf16.mxu0 0
          %3710 = vmatpush1.bf16.msra.mxu0 %v3701
          %3711 = vmatprep.subr.bf16.mxu0 0
          %3712 = vmatpush1.bf16.msra.mxu0 0
          %3713 = vmatprep.subr.bf16.mxu0 0
          %3714 = vmatpush1.bf16.msra.mxu0 0
          %3715 = vmatprep.subr.bf16.mxu0 0
          %3716 = vmatpush1.bf16.msra.mxu0 0
          %3717 = vmatprep.subr.bf16.mxu0 0
          %3718 = vmatpush1.bf16.msra.mxu0 0
          %3719 = vmatprep.subr.bf16.mxu0 0
          %3720 = vmatpush1.bf16.msra.mxu0 0
          %3721 = vmatprep.subr.bf16.mxu0 0
          %3722 = vmatpush1.bf16.msra.mxu0 0
          %3723 = vmatprep.subr.bf16.mxu0 0
          %3724 = vmatpush1.bf16.msra.mxu0 0
          %3725 = vmatprep.subr.bf16.mxu0 0
          %3726 = vmatpush1.bf16.msra.mxu0 0
          %3727 = vmatprep.subr.bf16.mxu0 0
          %3728 = vmatpush1.bf16.msra.mxu0 0
          %3729 = vmatprep.subr.bf16.mxu0 0
          %3730 = vmatpush1.bf16.msra.mxu0 0
          %3731 = vmatprep.subr.bf16.mxu0 0
          %3732 = vmatpush1.bf16.msra.mxu0 0
          %3733 = vmatprep.subr.bf16.mxu0 0
          %3734 = vmatpush1.bf16.msra.mxu0 0
          %3735 = vmatprep.subr.bf16.mxu0 0
          %3736 = vmatpush1.bf16.msra.mxu0 0
          %3737 = vmatprep.subr.bf16.mxu0 0
          %3738 = vmatpush1.bf16.msra.mxu0 0
          %3739 = vmatprep.mubr.bf16.mxu0 0
          %3740 = vmatmul.mubr.bf16.gmra.mrb[0].mxu0 %v3705
          %v3741 = vpop.f32.mrb[0].mxu0
          %v3742 = vadd.f32 %v3690, %v3741
          %v3743 = vpop.f32.mrb[0].mxu0
          %v3744 = vpop.f32.mrb[0].mxu0
          %v3745 = vadd.f32 %v3690, %v3744
          %v3746 = vpop.f32.mrb[0].mxu0
          %3747 = vdwg.mxu0
          %v3748 = vtanh.pop %v3742
          %v3749 = vtanh.pop %v3745
          %v3750 = vpack.c.bf16 %v3749, %v3748
          %v3751 = vld [vmem:[%s19] sm:$0xf]
          %v3752 = vld [vmem:[%s19 + $0x4] sm:$0xf]
          %v3753 = vld [vmem:[%s19 + $0x8] sm:$0xf]
          %v3754 = vld [vmem:[%s19 + $0xc] sm:$0xf]
          %v3755 = vld [vmem:[%s20] sm:$0x1]
          %v3757 = vlaneseq
          %v3758 = vshrl.u32 %v3757, 7
          %v3759 = vsub.s32 0, %v3758
          %v3760 = vrot.slane %v3755, %v3759
          %v3766 = vunpack.c.l.b16 %v3751
          %v3767 = vunpack.c.l.b16 %v3752
          %v3768 = vunpack.c.l.b16 %v3753
          %v3769 = vunpack.c.l.b16 %v3754
          %v3770 = vpack.c.b16 %v3767, %v3766
          %v3771 = vpack.c.b16 %v3769, %v3768
          %v3775 = vsel %vm952, %v3750, 0
          %3777 = vmatprep.subr.bf16.mxu0 0
          %3778 = vmatpush1.bf16.msra.mxu0 %v3770
          %3779 = vmatprep.subr.bf16.mxu0 0
          %3780 = vmatpush1.bf16.msra.mxu0 %v3771
          %3781 = vmatprep.subr.bf16.mxu0 0
          %3782 = vmatpush1.bf16.msra.mxu0 0
          %3783 = vmatprep.subr.bf16.mxu0 0
          %3784 = vmatpush1.bf16.msra.mxu0 0
          %3785 = vmatprep.subr.bf16.mxu0 0
          %3786 = vmatpush1.bf16.msra.mxu0 0
          %3787 = vmatprep.subr.bf16.mxu0 0
          %3788 = vmatpush1.bf16.msra.mxu0 0
          %3789 = vmatprep.subr.bf16.mxu0 0
          %3790 = vmatpush1.bf16.msra.mxu0 0
          %3791 = vmatprep.subr.bf16.mxu0 0
          %3792 = vmatpush1.bf16.msra.mxu0 0
          %3793 = vmatprep.subr.bf16.mxu0 0
          %3794 = vmatpush1.bf16.msra.mxu0 0
          %3795 = vmatprep.subr.bf16.mxu0 0
          %3796 = vmatpush1.bf16.msra.mxu0 0
          %3797 = vmatprep.subr.bf16.mxu0 0
          %3798 = vmatpush1.bf16.msra.mxu0 0
          %3799 = vmatprep.subr.bf16.mxu0 0
          %3800 = vmatpush1.bf16.msra.mxu0 0
          %3801 = vmatprep.subr.bf16.mxu0 0
          %3802 = vmatpush1.bf16.msra.mxu0 0
          %3803 = vmatprep.subr.bf16.mxu0 0
          %3804 = vmatpush1.bf16.msra.mxu0 0
          %3805 = vmatprep.subr.bf16.mxu0 0
          %3806 = vmatpush1.bf16.msra.mxu0 0
          %3807 = vmatprep.subr.bf16.mxu0 0
          %3808 = vmatpush1.bf16.msra.mxu0 0
          %3809 = vmatprep.mubr.bf16.mxu0 0
          %3810 = vmatmul.mubr.bf16.gmra.mrb[0].mxu0 %v3775
          %v3811 = vpop.f32.mrb[0].mxu0
          %v3812 = vadd.f32 %v3760, %v3811
          %v3813 = vpop.f32.mrb[0].mxu0
          %v3814 = vpop.f32.mrb[0].mxu0
          %v3815 = vadd.f32 %v3760, %v3814
          %v3816 = vpop.f32.mrb[0].mxu0
          %3817 = vdwg.mxu0
          %v3818 = vxor.u32 %v3812, 2147483648
          %v3819 = vxor.u32 %v3815, 2147483648
          %v3820 = vmul.f32 %v3818, 1.442695
          %v3821 = vpow.pop %v3820
          %v3822 = vmul.f32 %v3819, 1.442695
          %v3823 = vpow.pop %v3822
          %v3824 = vadd.f32 %v3821, 1.0
          %v3825 = vadd.f32 %v3823, 1.0
          %v3826 = vrcp.pop %v3824
          %v3827 = vmul.f32 1.0, %v3826
          %v3828 = vrcp.pop %v3825
          %v3829 = vmul.f32 1.0, %v3828
          %3830 = vst [vmem:[#allocation3] sm:$0xff] %v3827
          %3831 = vst [vmem:[#allocation3 + $0x8] sm:$0xff] %v3829
        $region112: #{tpu_custom_call.1} parent=103 // pred_fallthru
          _
        // Predicated region
        $region113: #{tpu_custom_call.1} parent=103 // pred_check
          %p3832 = pneg %p557
        $region114: #{tpu_custom_call.1} parent=103 // pred_check_branch
          %3834 = sbr.rel (%p3832) target = $region116
        $region115: #{tpu_custom_call.1} parent=103 // pred_region
          %s3836 = ssub.s32 256, 256
          %3837 = vsyncadd [#allocation4], %s3836
          %s3838 = sshll.u32 [#allocation3], 4
          %s3839 = int_to_ptr.vmem [resolvable:$true] %s3838
          %3844 = dma.vmem_to_hbm [thread:$0]  %s3839, 256, %s21, [#allocation4], 128, 128, 8
        $region116: #{tpu_custom_call.1} parent=103 // pred_fallthru
          _
        // Predicated region
        $region117: #{tpu_custom_call.1} parent=103 // pred_check
          %p3845 = pneg %p557
        $region118: #{tpu_custom_call.1} parent=103 // pred_check_branch
          %3847 = sbr.rel (%p3845) target = $region120
        $region119: #{tpu_custom_call.1} parent=103 // pred_region
          %3848 = dma.done [#allocation4], 256
        $region120: #{tpu_custom_call.1} parent=103 // pred_fallthru
          _
      $region104: #{tpu_custom_call.1} parent=5 // pred_fallthru
        _
      %p3849 = scmp.le.s32.totalorder 2, %s28
      // Predicated region
      $region121: #{tpu_custom_call.1} parent=5 // pred_check
        %p3850 = pneg %p3849
      $region122: #{tpu_custom_call.1} parent=5 // pred_check_branch
        %3852 = sbr.rel (%p3850) target = $region124
      $region123: #{tpu_custom_call.1} parent=5 // pred_region
        %s3853 = ssub.s32 %s28, 2
      $region124: #{tpu_custom_call.1} parent=5 // pred_fallthru
        _
    $region6: #{tpu_custom_call.1} parent=1 // loop_footer
      %s32 = sadd.s32 1, %s28
    $region7: #{tpu_custom_call.1} parent=1 // loop_footer_branch
      %27 = sbr.rel target = $region3
    $region8: #{tpu_custom_call.1} parent=1 // loop_exit
      _
    %3854 = vsyncpa [#allocation4], 1
    %s3855 = scalar_lea.sflag [#allocation4], 1
    %3856 = vsyncpa %s3855, 1

</llo_original>
